<compile_context>
chip_gen: v7x
topology: tpu7x:2x2x1
jax: 0.10.0
libtpu: 0.0.40
codegen_flags: <defaults>
</compile_context>

<pallas_src>
import functools

import jax
import jax.numpy as jnp
from jax.experimental import pallas as pl
from jax.experimental.pallas import tpu as pltpu

GRID_G = 3    # number of spline intervals (pykan default grid=3)
SPLINE_K = 3  # spline degree (pykan default k=3)
LANE = 128    # TPU lane width


def _round_up(n, m):
    return ((n + m - 1) // m) * m


def _uniform_knots(grid_g=GRID_G, k=SPLINE_K, grid_range=(-1.0, 1.0)):
    """Extended uniform knot vector on grid_range as plain Python floats."""
    h = (grid_range[1] - grid_range[0]) / grid_g
    return tuple(float(grid_range[0] + (j - k) * h) for j in range(grid_g + 2 * k + 1))


# ----------------------------------------------------------------------------
# Fused Pallas kernel: whole decoder (all KAN layers)
# ----------------------------------------------------------------------------
def _kan_features(x, knots, k):
    """Concat [B_0(x) .. B_{G+k-1}(x), silu(x)] along lanes.

    `knots` are compile-time Python floats (uniform grid, identical for every
    feature), so all Cox-de Boor denominators are constant reciprocals.
    """
    nk = len(knots)
    # degree-0 indicator bases (half-open intervals, matches the reference)
    bases = [
        jnp.logical_and(x >= knots[j], x < knots[j + 1]).astype(jnp.float32)
        for j in range(nk - 1)
    ]
    for kk in range(1, k + 1):
        new_bases = []
        for j in range(len(bases) - 1):
            inv_l = 1.0 / (knots[j + kk] - knots[j])
            inv_r = 1.0 / (knots[j + kk + 1] - knots[j + 1])
            left = (x - knots[j]) * inv_l * bases[j]
            right = (knots[j + kk + 1] - x) * inv_r * bases[j + 1]
            new_bases.append(left + right)
        bases = new_bases
    silu = x * jax.nn.sigmoid(x)
    return jnp.concatenate(bases + [silu], axis=-1)   # (TB, (G+k+1)*Ipad)


def _decoder_kernel(*refs, num_layers, knots, k):
    # refs = [x, w_0, b_0, w_1, b_1, ..., out]
    x_ref = refs[0]
    out_ref = refs[-1]
    h = x_ref[...]                                     # (TB, Ipad0) f32
    for l in range(num_layers):
        w_ref = refs[1 + 2 * l]                        # (7*Ipad_l, Opad_l)
        b_ref = refs[2 + 2 * l]                        # (1, Opad_l)
        feats = _kan_features(h, knots, k)             # (TB, 7*Ipad_l)
        h = jnp.dot(feats, w_ref[...],
                    preferred_element_type=jnp.float32) + b_ref[...]
    out_ref[...] = h


# ----------------------------------------------------------------------------
# Wrapper
# ----------------------------------------------------------------------------
def decoder_forward(x, weights, biases, sigma, *, knots, k=SPLINE_K,
                    data_dim=None, block_batch=512):
    """Equivalent of Decoder.forward: returns (feature, sigma)."""
    num_layers = len(weights)
    num_blocks = len(knots) - k                 # (G + k) bases + 1 silu block
    in_pad = weights[0].shape[0] // num_blocks  # padded input width of layer 0
    out_pad = weights[-1].shape[1]              # padded output width

    batch = x.shape[0]
    tb = min(block_batch, _round_up(batch, 8))  # batch tile (multiple of 8)
    batch_pad = _round_up(batch, tb)

    xp = jnp.zeros((batch_pad, in_pad), jnp.float32)
    xp = xp.at[:batch, :x.shape[1]].set(x.astype(jnp.float32))

    in_specs = [pl.BlockSpec((tb, in_pad), lambda b: (b, 0))]
    args = [xp]
    for w, bias in zip(weights, biases):
        in_specs.append(pl.BlockSpec(w.shape, lambda b: (0, 0)))
        in_specs.append(pl.BlockSpec(bias.shape, lambda b: (0, 0)))
        args.append(w)
        args.append(bias)

    out = pl.pallas_call(
        functools.partial(_decoder_kernel, num_layers=num_layers,
                          knots=knots, k=k),
        out_shape=jax.ShapeDtypeStruct((batch_pad, out_pad), jnp.float32),
        grid=(batch_pad // tb,),
        in_specs=in_specs,
        out_specs=pl.BlockSpec((tb, out_pad), lambda b: (b, 0)),
        compiler_params=pltpu.CompilerParams(
            dimension_semantics=("parallel",)),
    )(*args)

    return out[:batch, :data_dim], sigma


# ----------------------------------------------------------------------------
# Parameter init: raw (for reference) + folded lane-padded kernel weights
# ----------------------------------------------------------------------------
def init_decoder_params(key, embedding_dim, compress_dims, data_dim,
                        grid_g=GRID_G, k=SPLINE_K):
    width = [embedding_dim] + list(reversed(list(compress_dims))) + [data_dim]
    knots = _uniform_knots(grid_g, k)
    num_bases = grid_g + k

    raw_layers = []
    weights = []
    biases = []
    for l in range(len(width) - 1):
        in_dim, out_dim = width[l], width[l + 1]
        key, k_coef, k_base = jax.random.split(key, 3)

        coef = 0.1 * jax.random.normal(k_coef, (in_dim, out_dim, num_bases), jnp.float32)
        scale_base = jax.random.normal(k_base, (in_dim, out_dim), jnp.float32) / jnp.sqrt(in_dim)
        scale_sp = jnp.full((in_dim, out_dim), 1.0 / jnp.sqrt(in_dim), jnp.float32)
        mask = jnp.ones((in_dim, out_dim), jnp.float32)
        sub_scale = jnp.ones((out_dim,), jnp.float32)
        sub_bias = jnp.zeros((out_dim,), jnp.float32)
        node_scale = jnp.ones((out_dim,), jnp.float32)
        node_bias = jnp.zeros((out_dim,), jnp.float32)

        raw_layers.append(dict(coef=coef, scale_base=scale_base, scale_sp=scale_sp,
                               mask=mask, sub_scale=sub_scale, sub_bias=sub_bias,
                               node_scale=node_scale, node_bias=node_bias))

        # ---- Fold everything into one lane-dense weight + one bias ----------
        in_pad = _round_up(in_dim, LANE)
        out_pad = _round_up(out_dim, LANE)
        w_sp = jnp.transpose(coef * (scale_sp * mask)[:, :, None], (2, 0, 1))  # (S, I, O)
        w_base = scale_base * mask                                             # (I, O)
        col_scale = (node_scale * sub_scale)[None, :]                          # (1, O)

        blocks = []
        for s in range(num_bases):
            blk = w_sp[s] * col_scale
            blocks.append(jnp.zeros((in_pad, out_pad), jnp.float32)
                          .at[:in_dim, :out_dim].set(blk))
        blk = w_base * col_scale
        blocks.append(jnp.zeros((in_pad, out_pad), jnp.float32)
                      .at[:in_dim, :out_dim].set(blk))
        w_all = jnp.concatenate(blocks, axis=0)                # ((S+1)*Ipad, Opad)

        bias = node_scale * sub_bias + node_bias
        bias_pad = jnp.zeros((1, out_pad), jnp.float32).at[0, :out_dim].set(bias)

        weights.append(w_all)
        biases.append(bias_pad)

    sigma = 0.1 * jnp.ones((data_dim,), jnp.float32)   # nn.Parameter(ones(data_dim)*0.1)
    return raw_layers, tuple(weights), tuple(biases), sigma, knots


# ----------------------------------------------------------------------------
# Pure-JAX reference (independent of the kernel's weight folding / padding)
# ----------------------------------------------------------------------------
def _bspline_ref(x, knots, k):
    xg = x[:, :, None]
    g = knots[None, None, :]
    B = ((xg >= g[..., :-1]) & (xg < g[..., 1:])).astype(x.dtype)
    for kk in range(1, k + 1):
        B = ((xg - g[..., :-(kk + 1)]) / (g[..., kk:-1] - g[..., :-(kk + 1)]) * B[..., :-1]
             + (g[..., kk + 1:] - xg) / (g[..., kk + 1:] - g[..., 1:-kk]) * B[..., 1:])
    return B  # (B, I, S)


def decoder_ref(x, raw_layers, sigma, knots, k=SPLINE_K):
    h = x
    hi = jax.lax.Precision.HIGHEST
    g = jnp.asarray(knots, jnp.float32)
    for p in raw_layers:
        B = _bspline_ref(h, g, k)
        w_sp = p["coef"] * (p["scale_sp"] * p["mask"])[:, :, None]   # (I, O, S)
        spline = jnp.einsum("bis,ios->bo", B, w_sp, precision=hi)
        base = jnp.dot(h * jax.nn.sigmoid(h), p["scale_base"] * p["mask"], precision=hi)
        y = spline + base
        y = p["sub_scale"] * y + p["sub_bias"]
        y = p["node_scale"] * y + p["node_bias"]
        h = y
    return h, sigma


# ----------------------------------------------------------------------------
if __name__ == "__main__":
    batch = 8
    embedding_dim = 16
    compress_dims = (32, 64)
    data_dim = 24

    key = jax.random.PRNGKey(0)
    key, k_params, k_x = jax.random.split(key, 3)
    raw_layers, weights, biases, sigma, knots = init_decoder_params(
        k_params, embedding_dim, compress_dims, data_dim)

    # latent input (mostly inside the spline grid range [-1, 1])
    x = 0.5 * jax.random.normal(k_x, (batch, embedding_dim), jnp.float32)

    fwd = jax.jit(functools.partial(
        decoder_forward, knots=knots, k=SPLINE_K,
        data_dim=data_dim, block_batch=512))
    feature, sigma_out = fwd(x, weights, biases, sigma)
    feature = jax.block_until_ready(feature)
    sigma_out = jax.block_until_ready(sigma_out)

    # reference check
    feature_ref, sigma_ref = decoder_ref(x, raw_layers, sigma, knots)
    assert feature.shape == (batch, data_dim)
    assert sigma_out.shape == (data_dim,)
    assert jnp.allclose(feature, feature_ref, rtol=1e-3, atol=1e-4), (
        float(jnp.max(jnp.abs(feature - feature_ref))))
    assert jnp.allclose(sigma_out, sigma_ref)

    print("KERNEL_OK")
</pallas_src>

<mosaic_0001>
module attributes {stable_mosaic.version = 11 : i64} {
  func.func @_decoder_kernel(%arg0: i32, %arg1: memref<8x128xf32, #tpu.memory_space<vmem>>, %arg2: memref<896x128xf32, #tpu.memory_space<vmem>>, %arg3: memref<1x128xf32, #tpu.memory_space<vmem>>, %arg4: memref<896x128xf32, #tpu.memory_space<vmem>>, %arg5: memref<1x128xf32, #tpu.memory_space<vmem>>, %arg6: memref<896x128xf32, #tpu.memory_space<vmem>>, %arg7: memref<1x128xf32, #tpu.memory_space<vmem>>, %arg8: memref<8x128xf32, #tpu.memory_space<vmem>>) attributes {dimension_semantics = [#tpu.dimension_semantics<parallel>], iteration_bounds = array<i64: 1>, scalar_prefetch = 0 : i64, scratch_operands = 0 : i64, tpu.core_type = #tpu.core_type<tc>, window_params = [{transform_indices = @transform_0, window_bounds = array<i64: 8, 128>}, {pipeline_mode = #tpu.pipeline_mode<synchronous>, transform_indices = @transform_1, window_bounds = array<i64: 896, 128>}, {pipeline_mode = #tpu.pipeline_mode<synchronous>, transform_indices = @transform_2, window_bounds = array<i64: 1, 128>}, {pipeline_mode = #tpu.pipeline_mode<synchronous>, transform_indices = @transform_3, window_bounds = array<i64: 896, 128>}, {pipeline_mode = #tpu.pipeline_mode<synchronous>, transform_indices = @transform_4, window_bounds = array<i64: 1, 128>}, {pipeline_mode = #tpu.pipeline_mode<synchronous>, transform_indices = @transform_5, window_bounds = array<i64: 896, 128>}, {pipeline_mode = #tpu.pipeline_mode<synchronous>, transform_indices = @transform_6, window_bounds = array<i64: 1, 128>}, {transform_indices = @transform_7, window_bounds = array<i64: 8, 128>}]} {
    %c0 = arith.constant 0 : index
    %c0_0 = arith.constant 0 : index
    %0 = vector.load %arg1[%c0, %c0_0] : memref<8x128xf32, #tpu.memory_space<vmem>>, vector<8x128xf32>
    %cst = arith.constant -3.000000e+00 : f32
    %1 = vector.broadcast %cst : f32 to vector<8x128xf32>
    %2 = arith.cmpf oge, %0, %1 : vector<8x128xf32>
    %cst_1 = arith.constant -2.33333325 : f32
    %3 = vector.broadcast %cst_1 : f32 to vector<8x128xf32>
    %4 = arith.cmpf olt, %0, %3 : vector<8x128xf32>
    %5 = arith.andi %2, %4 : vector<8x128xi1>
    %6 = arith.extui %5 : vector<8x128xi1> to vector<8x128xi32>
    %7 = arith.sitofp %6 : vector<8x128xi32> to vector<8x128xf32>
    %cst_2 = arith.constant -2.33333325 : f32
    %8 = vector.broadcast %cst_2 : f32 to vector<8x128xf32>
    %9 = arith.cmpf oge, %0, %8 : vector<8x128xf32>
    %cst_3 = arith.constant -1.66666663 : f32
    %10 = vector.broadcast %cst_3 : f32 to vector<8x128xf32>
    %11 = arith.cmpf olt, %0, %10 : vector<8x128xf32>
    %12 = arith.andi %9, %11 : vector<8x128xi1>
    %13 = arith.extui %12 : vector<8x128xi1> to vector<8x128xi32>
    %14 = arith.sitofp %13 : vector<8x128xi32> to vector<8x128xf32>
    %cst_4 = arith.constant -1.66666663 : f32
    %15 = vector.broadcast %cst_4 : f32 to vector<8x128xf32>
    %16 = arith.cmpf oge, %0, %15 : vector<8x128xf32>
    %cst_5 = arith.constant -1.000000e+00 : f32
    %17 = vector.broadcast %cst_5 : f32 to vector<8x128xf32>
    %18 = arith.cmpf olt, %0, %17 : vector<8x128xf32>
    %19 = arith.andi %16, %18 : vector<8x128xi1>
    %20 = arith.extui %19 : vector<8x128xi1> to vector<8x128xi32>
    %21 = arith.sitofp %20 : vector<8x128xi32> to vector<8x128xf32>
    %cst_6 = arith.constant -1.000000e+00 : f32
    %22 = vector.broadcast %cst_6 : f32 to vector<8x128xf32>
    %23 = arith.cmpf oge, %0, %22 : vector<8x128xf32>
    %cst_7 = arith.constant -0.333333343 : f32
    %24 = vector.broadcast %cst_7 : f32 to vector<8x128xf32>
    %25 = arith.cmpf olt, %0, %24 : vector<8x128xf32>
    %26 = arith.andi %23, %25 : vector<8x128xi1>
    %27 = arith.extui %26 : vector<8x128xi1> to vector<8x128xi32>
    %28 = arith.sitofp %27 : vector<8x128xi32> to vector<8x128xf32>
    %cst_8 = arith.constant -0.333333343 : f32
    %29 = vector.broadcast %cst_8 : f32 to vector<8x128xf32>
    %30 = arith.cmpf oge, %0, %29 : vector<8x128xf32>
    %cst_9 = arith.constant 0.333333343 : f32
    %31 = vector.broadcast %cst_9 : f32 to vector<8x128xf32>
    %32 = arith.cmpf olt, %0, %31 : vector<8x128xf32>
    %33 = arith.andi %30, %32 : vector<8x128xi1>
    %34 = arith.extui %33 : vector<8x128xi1> to vector<8x128xi32>
    %35 = arith.sitofp %34 : vector<8x128xi32> to vector<8x128xf32>
    %cst_10 = arith.constant 0.333333343 : f32
    %36 = vector.broadcast %cst_10 : f32 to vector<8x128xf32>
    %37 = arith.cmpf oge, %0, %36 : vector<8x128xf32>
    %cst_11 = arith.constant 1.000000e+00 : f32
    %38 = vector.broadcast %cst_11 : f32 to vector<8x128xf32>
    %39 = arith.cmpf olt, %0, %38 : vector<8x128xf32>
    %40 = arith.andi %37, %39 : vector<8x128xi1>
    %41 = arith.extui %40 : vector<8x128xi1> to vector<8x128xi32>
    %42 = arith.sitofp %41 : vector<8x128xi32> to vector<8x128xf32>
    %cst_12 = arith.constant 1.000000e+00 : f32
    %43 = vector.broadcast %cst_12 : f32 to vector<8x128xf32>
    %44 = arith.cmpf oge, %0, %43 : vector<8x128xf32>
    %cst_13 = arith.constant 1.66666663 : f32
    %45 = vector.broadcast %cst_13 : f32 to vector<8x128xf32>
    %46 = arith.cmpf olt, %0, %45 : vector<8x128xf32>
    %47 = arith.andi %44, %46 : vector<8x128xi1>
    %48 = arith.extui %47 : vector<8x128xi1> to vector<8x128xi32>
    %49 = arith.sitofp %48 : vector<8x128xi32> to vector<8x128xf32>
    %cst_14 = arith.constant 1.66666663 : f32
    %50 = vector.broadcast %cst_14 : f32 to vector<8x128xf32>
    %51 = arith.cmpf oge, %0, %50 : vector<8x128xf32>
    %cst_15 = arith.constant 2.33333325 : f32
    %52 = vector.broadcast %cst_15 : f32 to vector<8x128xf32>
    %53 = arith.cmpf olt, %0, %52 : vector<8x128xf32>
    %54 = arith.andi %51, %53 : vector<8x128xi1>
    %55 = arith.extui %54 : vector<8x128xi1> to vector<8x128xi32>
    %56 = arith.sitofp %55 : vector<8x128xi32> to vector<8x128xf32>
    %cst_16 = arith.constant 2.33333325 : f32
    %57 = vector.broadcast %cst_16 : f32 to vector<8x128xf32>
    %58 = arith.cmpf oge, %0, %57 : vector<8x128xf32>
    %cst_17 = arith.constant 3.000000e+00 : f32
    %59 = vector.broadcast %cst_17 : f32 to vector<8x128xf32>
    %60 = arith.cmpf olt, %0, %59 : vector<8x128xf32>
    %61 = arith.andi %58, %60 : vector<8x128xi1>
    %62 = arith.extui %61 : vector<8x128xi1> to vector<8x128xi32>
    %63 = arith.sitofp %62 : vector<8x128xi32> to vector<8x128xf32>
    %cst_18 = arith.constant -3.000000e+00 : f32
    %64 = vector.broadcast %cst_18 : f32 to vector<8x128xf32>
    %65 = arith.subf %0, %64 : vector<8x128xf32>
    %cst_19 = arith.constant 1.500000e+00 : f32
    %66 = vector.broadcast %cst_19 : f32 to vector<8x128xf32>
    %67 = arith.mulf %65, %66 : vector<8x128xf32>
    %68 = arith.mulf %67, %7 : vector<8x128xf32>
    %cst_20 = arith.constant -1.66666663 : f32
    %69 = vector.broadcast %cst_20 : f32 to vector<8x128xf32>
    %70 = arith.subf %69, %0 : vector<8x128xf32>
    %cst_21 = arith.constant 1.500000e+00 : f32
    %71 = vector.broadcast %cst_21 : f32 to vector<8x128xf32>
    %72 = arith.mulf %70, %71 : vector<8x128xf32>
    %73 = arith.mulf %72, %14 : vector<8x128xf32>
    %74 = arith.addf %68, %73 : vector<8x128xf32>
    %cst_22 = arith.constant -2.33333325 : f32
    %75 = vector.broadcast %cst_22 : f32 to vector<8x128xf32>
    %76 = arith.subf %0, %75 : vector<8x128xf32>
    %cst_23 = arith.constant 1.500000e+00 : f32
    %77 = vector.broadcast %cst_23 : f32 to vector<8x128xf32>
    %78 = arith.mulf %76, %77 : vector<8x128xf32>
    %79 = arith.mulf %78, %14 : vector<8x128xf32>
    %cst_24 = arith.constant -1.000000e+00 : f32
    %80 = vector.broadcast %cst_24 : f32 to vector<8x128xf32>
    %81 = arith.subf %80, %0 : vector<8x128xf32>
    %cst_25 = arith.constant 1.500000e+00 : f32
    %82 = vector.broadcast %cst_25 : f32 to vector<8x128xf32>
    %83 = arith.mulf %81, %82 : vector<8x128xf32>
    %84 = arith.mulf %83, %21 : vector<8x128xf32>
    %85 = arith.addf %79, %84 : vector<8x128xf32>
    %cst_26 = arith.constant -1.66666663 : f32
    %86 = vector.broadcast %cst_26 : f32 to vector<8x128xf32>
    %87 = arith.subf %0, %86 : vector<8x128xf32>
    %cst_27 = arith.constant 1.500000e+00 : f32
    %88 = vector.broadcast %cst_27 : f32 to vector<8x128xf32>
    %89 = arith.mulf %87, %88 : vector<8x128xf32>
    %90 = arith.mulf %89, %21 : vector<8x128xf32>
    %cst_28 = arith.constant -0.333333343 : f32
    %91 = vector.broadcast %cst_28 : f32 to vector<8x128xf32>
    %92 = arith.subf %91, %0 : vector<8x128xf32>
    %cst_29 = arith.constant 1.500000e+00 : f32
    %93 = vector.broadcast %cst_29 : f32 to vector<8x128xf32>
    %94 = arith.mulf %92, %93 : vector<8x128xf32>
    %95 = arith.mulf %94, %28 : vector<8x128xf32>
    %96 = arith.addf %90, %95 : vector<8x128xf32>
    %cst_30 = arith.constant -1.000000e+00 : f32
    %97 = vector.broadcast %cst_30 : f32 to vector<8x128xf32>
    %98 = arith.subf %0, %97 : vector<8x128xf32>
    %cst_31 = arith.constant 1.500000e+00 : f32
    %99 = vector.broadcast %cst_31 : f32 to vector<8x128xf32>
    %100 = arith.mulf %98, %99 : vector<8x128xf32>
    %101 = arith.mulf %100, %28 : vector<8x128xf32>
    %cst_32 = arith.constant 0.333333343 : f32
    %102 = vector.broadcast %cst_32 : f32 to vector<8x128xf32>
    %103 = arith.subf %102, %0 : vector<8x128xf32>
    %cst_33 = arith.constant 1.500000e+00 : f32
    %104 = vector.broadcast %cst_33 : f32 to vector<8x128xf32>
    %105 = arith.mulf %103, %104 : vector<8x128xf32>
    %106 = arith.mulf %105, %35 : vector<8x128xf32>
    %107 = arith.addf %101, %106 : vector<8x128xf32>
    %cst_34 = arith.constant -0.333333343 : f32
    %108 = vector.broadcast %cst_34 : f32 to vector<8x128xf32>
    %109 = arith.subf %0, %108 : vector<8x128xf32>
    %cst_35 = arith.constant 1.500000e+00 : f32
    %110 = vector.broadcast %cst_35 : f32 to vector<8x128xf32>
    %111 = arith.mulf %109, %110 : vector<8x128xf32>
    %112 = arith.mulf %111, %35 : vector<8x128xf32>
    %cst_36 = arith.constant 1.000000e+00 : f32
    %113 = vector.broadcast %cst_36 : f32 to vector<8x128xf32>
    %114 = arith.subf %113, %0 : vector<8x128xf32>
    %cst_37 = arith.constant 1.500000e+00 : f32
    %115 = vector.broadcast %cst_37 : f32 to vector<8x128xf32>
    %116 = arith.mulf %114, %115 : vector<8x128xf32>
    %117 = arith.mulf %116, %42 : vector<8x128xf32>
    %118 = arith.addf %112, %117 : vector<8x128xf32>
    %cst_38 = arith.constant 0.333333343 : f32
    %119 = vector.broadcast %cst_38 : f32 to vector<8x128xf32>
    %120 = arith.subf %0, %119 : vector<8x128xf32>
    %cst_39 = arith.constant 1.500000e+00 : f32
    %121 = vector.broadcast %cst_39 : f32 to vector<8x128xf32>
    %122 = arith.mulf %120, %121 : vector<8x128xf32>
    %123 = arith.mulf %122, %42 : vector<8x128xf32>
    %cst_40 = arith.constant 1.66666663 : f32
    %124 = vector.broadcast %cst_40 : f32 to vector<8x128xf32>
    %125 = arith.subf %124, %0 : vector<8x128xf32>
    %cst_41 = arith.constant 1.500000e+00 : f32
    %126 = vector.broadcast %cst_41 : f32 to vector<8x128xf32>
    %127 = arith.mulf %125, %126 : vector<8x128xf32>
    %128 = arith.mulf %127, %49 : vector<8x128xf32>
    %129 = arith.addf %123, %128 : vector<8x128xf32>
    %cst_42 = arith.constant 1.000000e+00 : f32
    %130 = vector.broadcast %cst_42 : f32 to vector<8x128xf32>
    %131 = arith.subf %0, %130 : vector<8x128xf32>
    %cst_43 = arith.constant 1.500000e+00 : f32
    %132 = vector.broadcast %cst_43 : f32 to vector<8x128xf32>
    %133 = arith.mulf %131, %132 : vector<8x128xf32>
    %134 = arith.mulf %133, %49 : vector<8x128xf32>
    %cst_44 = arith.constant 2.33333325 : f32
    %135 = vector.broadcast %cst_44 : f32 to vector<8x128xf32>
    %136 = arith.subf %135, %0 : vector<8x128xf32>
    %cst_45 = arith.constant 1.500000e+00 : f32
    %137 = vector.broadcast %cst_45 : f32 to vector<8x128xf32>
    %138 = arith.mulf %136, %137 : vector<8x128xf32>
    %139 = arith.mulf %138, %56 : vector<8x128xf32>
    %140 = arith.addf %134, %139 : vector<8x128xf32>
    %cst_46 = arith.constant 1.66666663 : f32
    %141 = vector.broadcast %cst_46 : f32 to vector<8x128xf32>
    %142 = arith.subf %0, %141 : vector<8x128xf32>
    %cst_47 = arith.constant 1.500000e+00 : f32
    %143 = vector.broadcast %cst_47 : f32 to vector<8x128xf32>
    %144 = arith.mulf %142, %143 : vector<8x128xf32>
    %145 = arith.mulf %144, %56 : vector<8x128xf32>
    %cst_48 = arith.constant 3.000000e+00 : f32
    %146 = vector.broadcast %cst_48 : f32 to vector<8x128xf32>
    %147 = arith.subf %146, %0 : vector<8x128xf32>
    %cst_49 = arith.constant 1.500000e+00 : f32
    %148 = vector.broadcast %cst_49 : f32 to vector<8x128xf32>
    %149 = arith.mulf %147, %148 : vector<8x128xf32>
    %150 = arith.mulf %149, %63 : vector<8x128xf32>
    %151 = arith.addf %145, %150 : vector<8x128xf32>
    %cst_50 = arith.constant -3.000000e+00 : f32
    %152 = vector.broadcast %cst_50 : f32 to vector<8x128xf32>
    %153 = arith.subf %0, %152 : vector<8x128xf32>
    %cst_51 = arith.constant 7.500000e-01 : f32
    %154 = vector.broadcast %cst_51 : f32 to vector<8x128xf32>
    %155 = arith.mulf %153, %154 : vector<8x128xf32>
    %156 = arith.mulf %155, %74 : vector<8x128xf32>
    %cst_52 = arith.constant -1.000000e+00 : f32
    %157 = vector.broadcast %cst_52 : f32 to vector<8x128xf32>
    %158 = arith.subf %157, %0 : vector<8x128xf32>
    %cst_53 = arith.constant 7.500000e-01 : f32
    %159 = vector.broadcast %cst_53 : f32 to vector<8x128xf32>
    %160 = arith.mulf %158, %159 : vector<8x128xf32>
    %161 = arith.mulf %160, %85 : vector<8x128xf32>
    %162 = arith.addf %156, %161 : vector<8x128xf32>
    %cst_54 = arith.constant -2.33333325 : f32
    %163 = vector.broadcast %cst_54 : f32 to vector<8x128xf32>
    %164 = arith.subf %0, %163 : vector<8x128xf32>
    %cst_55 = arith.constant 7.500000e-01 : f32
    %165 = vector.broadcast %cst_55 : f32 to vector<8x128xf32>
    %166 = arith.mulf %164, %165 : vector<8x128xf32>
    %167 = arith.mulf %166, %85 : vector<8x128xf32>
    %cst_56 = arith.constant -0.333333343 : f32
    %168 = vector.broadcast %cst_56 : f32 to vector<8x128xf32>
    %169 = arith.subf %168, %0 : vector<8x128xf32>
    %cst_57 = arith.constant 7.500000e-01 : f32
    %170 = vector.broadcast %cst_57 : f32 to vector<8x128xf32>
    %171 = arith.mulf %169, %170 : vector<8x128xf32>
    %172 = arith.mulf %171, %96 : vector<8x128xf32>
    %173 = arith.addf %167, %172 : vector<8x128xf32>
    %cst_58 = arith.constant -1.66666663 : f32
    %174 = vector.broadcast %cst_58 : f32 to vector<8x128xf32>
    %175 = arith.subf %0, %174 : vector<8x128xf32>
    %cst_59 = arith.constant 7.500000e-01 : f32
    %176 = vector.broadcast %cst_59 : f32 to vector<8x128xf32>
    %177 = arith.mulf %175, %176 : vector<8x128xf32>
    %178 = arith.mulf %177, %96 : vector<8x128xf32>
    %cst_60 = arith.constant 0.333333343 : f32
    %179 = vector.broadcast %cst_60 : f32 to vector<8x128xf32>
    %180 = arith.subf %179, %0 : vector<8x128xf32>
    %cst_61 = arith.constant 7.500000e-01 : f32
    %181 = vector.broadcast %cst_61 : f32 to vector<8x128xf32>
    %182 = arith.mulf %180, %181 : vector<8x128xf32>
    %183 = arith.mulf %182, %107 : vector<8x128xf32>
    %184 = arith.addf %178, %183 : vector<8x128xf32>
    %cst_62 = arith.constant -1.000000e+00 : f32
    %185 = vector.broadcast %cst_62 : f32 to vector<8x128xf32>
    %186 = arith.subf %0, %185 : vector<8x128xf32>
    %cst_63 = arith.constant 7.500000e-01 : f32
    %187 = vector.broadcast %cst_63 : f32 to vector<8x128xf32>
    %188 = arith.mulf %186, %187 : vector<8x128xf32>
    %189 = arith.mulf %188, %107 : vector<8x128xf32>
    %cst_64 = arith.constant 1.000000e+00 : f32
    %190 = vector.broadcast %cst_64 : f32 to vector<8x128xf32>
    %191 = arith.subf %190, %0 : vector<8x128xf32>
    %cst_65 = arith.constant 7.500000e-01 : f32
    %192 = vector.broadcast %cst_65 : f32 to vector<8x128xf32>
    %193 = arith.mulf %191, %192 : vector<8x128xf32>
    %194 = arith.mulf %193, %118 : vector<8x128xf32>
    %195 = arith.addf %189, %194 : vector<8x128xf32>
    %cst_66 = arith.constant -0.333333343 : f32
    %196 = vector.broadcast %cst_66 : f32 to vector<8x128xf32>
    %197 = arith.subf %0, %196 : vector<8x128xf32>
    %cst_67 = arith.constant 7.500000e-01 : f32
    %198 = vector.broadcast %cst_67 : f32 to vector<8x128xf32>
    %199 = arith.mulf %197, %198 : vector<8x128xf32>
    %200 = arith.mulf %199, %118 : vector<8x128xf32>
    %cst_68 = arith.constant 1.66666663 : f32
    %201 = vector.broadcast %cst_68 : f32 to vector<8x128xf32>
    %202 = arith.subf %201, %0 : vector<8x128xf32>
    %cst_69 = arith.constant 7.500000e-01 : f32
    %203 = vector.broadcast %cst_69 : f32 to vector<8x128xf32>
    %204 = arith.mulf %202, %203 : vector<8x128xf32>
    %205 = arith.mulf %204, %129 : vector<8x128xf32>
    %206 = arith.addf %200, %205 : vector<8x128xf32>
    %cst_70 = arith.constant 0.333333343 : f32
    %207 = vector.broadcast %cst_70 : f32 to vector<8x128xf32>
    %208 = arith.subf %0, %207 : vector<8x128xf32>
    %cst_71 = arith.constant 7.500000e-01 : f32
    %209 = vector.broadcast %cst_71 : f32 to vector<8x128xf32>
    %210 = arith.mulf %208, %209 : vector<8x128xf32>
    %211 = arith.mulf %210, %129 : vector<8x128xf32>
    %cst_72 = arith.constant 2.33333325 : f32
    %212 = vector.broadcast %cst_72 : f32 to vector<8x128xf32>
    %213 = arith.subf %212, %0 : vector<8x128xf32>
    %cst_73 = arith.constant 7.500000e-01 : f32
    %214 = vector.broadcast %cst_73 : f32 to vector<8x128xf32>
    %215 = arith.mulf %213, %214 : vector<8x128xf32>
    %216 = arith.mulf %215, %140 : vector<8x128xf32>
    %217 = arith.addf %211, %216 : vector<8x128xf32>
    %cst_74 = arith.constant 1.000000e+00 : f32
    %218 = vector.broadcast %cst_74 : f32 to vector<8x128xf32>
    %219 = arith.subf %0, %218 : vector<8x128xf32>
    %cst_75 = arith.constant 7.500000e-01 : f32
    %220 = vector.broadcast %cst_75 : f32 to vector<8x128xf32>
    %221 = arith.mulf %219, %220 : vector<8x128xf32>
    %222 = arith.mulf %221, %140 : vector<8x128xf32>
    %cst_76 = arith.constant 3.000000e+00 : f32
    %223 = vector.broadcast %cst_76 : f32 to vector<8x128xf32>
    %224 = arith.subf %223, %0 : vector<8x128xf32>
    %cst_77 = arith.constant 7.500000e-01 : f32
    %225 = vector.broadcast %cst_77 : f32 to vector<8x128xf32>
    %226 = arith.mulf %224, %225 : vector<8x128xf32>
    %227 = arith.mulf %226, %151 : vector<8x128xf32>
    %228 = arith.addf %222, %227 : vector<8x128xf32>
    %cst_78 = arith.constant -3.000000e+00 : f32
    %229 = vector.broadcast %cst_78 : f32 to vector<8x128xf32>
    %230 = arith.subf %0, %229 : vector<8x128xf32>
    %cst_79 = arith.constant 5.000000e-01 : f32
    %231 = vector.broadcast %cst_79 : f32 to vector<8x128xf32>
    %232 = arith.mulf %230, %231 : vector<8x128xf32>
    %233 = arith.mulf %232, %162 : vector<8x128xf32>
    %cst_80 = arith.constant -0.333333343 : f32
    %234 = vector.broadcast %cst_80 : f32 to vector<8x128xf32>
    %235 = arith.subf %234, %0 : vector<8x128xf32>
    %cst_81 = arith.constant 5.000000e-01 : f32
    %236 = vector.broadcast %cst_81 : f32 to vector<8x128xf32>
    %237 = arith.mulf %235, %236 : vector<8x128xf32>
    %238 = arith.mulf %237, %173 : vector<8x128xf32>
    %239 = arith.addf %233, %238 : vector<8x128xf32>
    %cst_82 = arith.constant -2.33333325 : f32
    %240 = vector.broadcast %cst_82 : f32 to vector<8x128xf32>
    %241 = arith.subf %0, %240 : vector<8x128xf32>
    %cst_83 = arith.constant 5.000000e-01 : f32
    %242 = vector.broadcast %cst_83 : f32 to vector<8x128xf32>
    %243 = arith.mulf %241, %242 : vector<8x128xf32>
    %244 = arith.mulf %243, %173 : vector<8x128xf32>
    %cst_84 = arith.constant 0.333333343 : f32
    %245 = vector.broadcast %cst_84 : f32 to vector<8x128xf32>
    %246 = arith.subf %245, %0 : vector<8x128xf32>
    %cst_85 = arith.constant 5.000000e-01 : f32
    %247 = vector.broadcast %cst_85 : f32 to vector<8x128xf32>
    %248 = arith.mulf %246, %247 : vector<8x128xf32>
    %249 = arith.mulf %248, %184 : vector<8x128xf32>
    %250 = arith.addf %244, %249 : vector<8x128xf32>
    %cst_86 = arith.constant -1.66666663 : f32
    %251 = vector.broadcast %cst_86 : f32 to vector<8x128xf32>
    %252 = arith.subf %0, %251 : vector<8x128xf32>
    %cst_87 = arith.constant 5.000000e-01 : f32
    %253 = vector.broadcast %cst_87 : f32 to vector<8x128xf32>
    %254 = arith.mulf %252, %253 : vector<8x128xf32>
    %255 = arith.mulf %254, %184 : vector<8x128xf32>
    %cst_88 = arith.constant 1.000000e+00 : f32
    %256 = vector.broadcast %cst_88 : f32 to vector<8x128xf32>
    %257 = arith.subf %256, %0 : vector<8x128xf32>
    %cst_89 = arith.constant 5.000000e-01 : f32
    %258 = vector.broadcast %cst_89 : f32 to vector<8x128xf32>
    %259 = arith.mulf %257, %258 : vector<8x128xf32>
    %260 = arith.mulf %259, %195 : vector<8x128xf32>
    %261 = arith.addf %255, %260 : vector<8x128xf32>
    %cst_90 = arith.constant -1.000000e+00 : f32
    %262 = vector.broadcast %cst_90 : f32 to vector<8x128xf32>
    %263 = arith.subf %0, %262 : vector<8x128xf32>
    %cst_91 = arith.constant 5.000000e-01 : f32
    %264 = vector.broadcast %cst_91 : f32 to vector<8x128xf32>
    %265 = arith.mulf %263, %264 : vector<8x128xf32>
    %266 = arith.mulf %265, %195 : vector<8x128xf32>
    %cst_92 = arith.constant 1.66666663 : f32
    %267 = vector.broadcast %cst_92 : f32 to vector<8x128xf32>
    %268 = arith.subf %267, %0 : vector<8x128xf32>
    %cst_93 = arith.constant 5.000000e-01 : f32
    %269 = vector.broadcast %cst_93 : f32 to vector<8x128xf32>
    %270 = arith.mulf %268, %269 : vector<8x128xf32>
    %271 = arith.mulf %270, %206 : vector<8x128xf32>
    %272 = arith.addf %266, %271 : vector<8x128xf32>
    %cst_94 = arith.constant -0.333333343 : f32
    %273 = vector.broadcast %cst_94 : f32 to vector<8x128xf32>
    %274 = arith.subf %0, %273 : vector<8x128xf32>
    %cst_95 = arith.constant 5.000000e-01 : f32
    %275 = vector.broadcast %cst_95 : f32 to vector<8x128xf32>
    %276 = arith.mulf %274, %275 : vector<8x128xf32>
    %277 = arith.mulf %276, %206 : vector<8x128xf32>
    %cst_96 = arith.constant 2.33333325 : f32
    %278 = vector.broadcast %cst_96 : f32 to vector<8x128xf32>
    %279 = arith.subf %278, %0 : vector<8x128xf32>
    %cst_97 = arith.constant 5.000000e-01 : f32
    %280 = vector.broadcast %cst_97 : f32 to vector<8x128xf32>
    %281 = arith.mulf %279, %280 : vector<8x128xf32>
    %282 = arith.mulf %281, %217 : vector<8x128xf32>
    %283 = arith.addf %277, %282 : vector<8x128xf32>
    %cst_98 = arith.constant 0.333333343 : f32
    %284 = vector.broadcast %cst_98 : f32 to vector<8x128xf32>
    %285 = arith.subf %0, %284 : vector<8x128xf32>
    %cst_99 = arith.constant 5.000000e-01 : f32
    %286 = vector.broadcast %cst_99 : f32 to vector<8x128xf32>
    %287 = arith.mulf %285, %286 : vector<8x128xf32>
    %288 = arith.mulf %287, %217 : vector<8x128xf32>
    %cst_100 = arith.constant 3.000000e+00 : f32
    %289 = vector.broadcast %cst_100 : f32 to vector<8x128xf32>
    %290 = arith.subf %289, %0 : vector<8x128xf32>
    %cst_101 = arith.constant 5.000000e-01 : f32
    %291 = vector.broadcast %cst_101 : f32 to vector<8x128xf32>
    %292 = arith.mulf %290, %291 : vector<8x128xf32>
    %293 = arith.mulf %292, %228 : vector<8x128xf32>
    %294 = arith.addf %288, %293 : vector<8x128xf32>
    %295 = arith.negf %0 : vector<8x128xf32>
    %296 = math.exp %295 : vector<8x128xf32>
    %cst_102 = arith.constant 1.000000e+00 : f32
    %297 = vector.broadcast %cst_102 : f32 to vector<8x128xf32>
    %298 = arith.addf %297, %296 : vector<8x128xf32>
    %299 = arith.divf %297, %298 : vector<8x128xf32>
    %300 = arith.mulf %0, %299 : vector<8x128xf32>
    %301 = tpu.concatenate %239, %250, %261, %272, %283, %294, %300 in 1 : vector<8x128xf32>, vector<8x128xf32>, vector<8x128xf32>, vector<8x128xf32>, vector<8x128xf32>, vector<8x128xf32>, vector<8x128xf32> -> vector<8x896xf32>
    %c0_103 = arith.constant 0 : index
    %c0_104 = arith.constant 0 : index
    %302 = vector.load %arg2[%c0_103, %c0_104] : memref<896x128xf32, #tpu.memory_space<vmem>>, vector<896x128xf32>
    %cst_105 = arith.constant dense<0.000000e+00> : vector<8x128xf32>
    %303 = tpu.matmul %301, %302, %cst_105 {dimension_numbers = #tpu.dot_dimension_numbers<[1], [0], [0], [1], [0, 0, 1, 1], [], []>} : vector<8x896xf32>, vector<896x128xf32>, vector<8x128xf32> -> vector<8x128xf32>
    %c0_106 = arith.constant 0 : index
    %c0_107 = arith.constant 0 : index
    %304 = vector.load %arg3[%c0_106, %c0_107] : memref<1x128xf32, #tpu.memory_space<vmem>>, vector<1x128xf32>
    %305 = vector.broadcast %304 : vector<1x128xf32> to vector<8x128xf32>
    %306 = arith.addf %303, %305 : vector<8x128xf32>
    %cst_108 = arith.constant -3.000000e+00 : f32
    %307 = vector.broadcast %cst_108 : f32 to vector<8x128xf32>
    %308 = arith.cmpf oge, %306, %307 : vector<8x128xf32>
    %cst_109 = arith.constant -2.33333325 : f32
    %309 = vector.broadcast %cst_109 : f32 to vector<8x128xf32>
    %310 = arith.cmpf olt, %306, %309 : vector<8x128xf32>
    %311 = arith.andi %308, %310 : vector<8x128xi1>
    %312 = arith.extui %311 : vector<8x128xi1> to vector<8x128xi32>
    %313 = arith.sitofp %312 : vector<8x128xi32> to vector<8x128xf32>
    %cst_110 = arith.constant -2.33333325 : f32
    %314 = vector.broadcast %cst_110 : f32 to vector<8x128xf32>
    %315 = arith.cmpf oge, %306, %314 : vector<8x128xf32>
    %cst_111 = arith.constant -1.66666663 : f32
    %316 = vector.broadcast %cst_111 : f32 to vector<8x128xf32>
    %317 = arith.cmpf olt, %306, %316 : vector<8x128xf32>
    %318 = arith.andi %315, %317 : vector<8x128xi1>
    %319 = arith.extui %318 : vector<8x128xi1> to vector<8x128xi32>
    %320 = arith.sitofp %319 : vector<8x128xi32> to vector<8x128xf32>
    %cst_112 = arith.constant -1.66666663 : f32
    %321 = vector.broadcast %cst_112 : f32 to vector<8x128xf32>
    %322 = arith.cmpf oge, %306, %321 : vector<8x128xf32>
    %cst_113 = arith.constant -1.000000e+00 : f32
    %323 = vector.broadcast %cst_113 : f32 to vector<8x128xf32>
    %324 = arith.cmpf olt, %306, %323 : vector<8x128xf32>
    %325 = arith.andi %322, %324 : vector<8x128xi1>
    %326 = arith.extui %325 : vector<8x128xi1> to vector<8x128xi32>
    %327 = arith.sitofp %326 : vector<8x128xi32> to vector<8x128xf32>
    %cst_114 = arith.constant -1.000000e+00 : f32
    %328 = vector.broadcast %cst_114 : f32 to vector<8x128xf32>
    %329 = arith.cmpf oge, %306, %328 : vector<8x128xf32>
    %cst_115 = arith.constant -0.333333343 : f32
    %330 = vector.broadcast %cst_115 : f32 to vector<8x128xf32>
    %331 = arith.cmpf olt, %306, %330 : vector<8x128xf32>
    %332 = arith.andi %329, %331 : vector<8x128xi1>
    %333 = arith.extui %332 : vector<8x128xi1> to vector<8x128xi32>
    %334 = arith.sitofp %333 : vector<8x128xi32> to vector<8x128xf32>
    %cst_116 = arith.constant -0.333333343 : f32
    %335 = vector.broadcast %cst_116 : f32 to vector<8x128xf32>
    %336 = arith.cmpf oge, %306, %335 : vector<8x128xf32>
    %cst_117 = arith.constant 0.333333343 : f32
    %337 = vector.broadcast %cst_117 : f32 to vector<8x128xf32>
    %338 = arith.cmpf olt, %306, %337 : vector<8x128xf32>
    %339 = arith.andi %336, %338 : vector<8x128xi1>
    %340 = arith.extui %339 : vector<8x128xi1> to vector<8x128xi32>
    %341 = arith.sitofp %340 : vector<8x128xi32> to vector<8x128xf32>
    %cst_118 = arith.constant 0.333333343 : f32
    %342 = vector.broadcast %cst_118 : f32 to vector<8x128xf32>
    %343 = arith.cmpf oge, %306, %342 : vector<8x128xf32>
    %cst_119 = arith.constant 1.000000e+00 : f32
    %344 = vector.broadcast %cst_119 : f32 to vector<8x128xf32>
    %345 = arith.cmpf olt, %306, %344 : vector<8x128xf32>
    %346 = arith.andi %343, %345 : vector<8x128xi1>
    %347 = arith.extui %346 : vector<8x128xi1> to vector<8x128xi32>
    %348 = arith.sitofp %347 : vector<8x128xi32> to vector<8x128xf32>
    %cst_120 = arith.constant 1.000000e+00 : f32
    %349 = vector.broadcast %cst_120 : f32 to vector<8x128xf32>
    %350 = arith.cmpf oge, %306, %349 : vector<8x128xf32>
    %cst_121 = arith.constant 1.66666663 : f32
    %351 = vector.broadcast %cst_121 : f32 to vector<8x128xf32>
    %352 = arith.cmpf olt, %306, %351 : vector<8x128xf32>
    %353 = arith.andi %350, %352 : vector<8x128xi1>
    %354 = arith.extui %353 : vector<8x128xi1> to vector<8x128xi32>
    %355 = arith.sitofp %354 : vector<8x128xi32> to vector<8x128xf32>
    %cst_122 = arith.constant 1.66666663 : f32
    %356 = vector.broadcast %cst_122 : f32 to vector<8x128xf32>
    %357 = arith.cmpf oge, %306, %356 : vector<8x128xf32>
    %cst_123 = arith.constant 2.33333325 : f32
    %358 = vector.broadcast %cst_123 : f32 to vector<8x128xf32>
    %359 = arith.cmpf olt, %306, %358 : vector<8x128xf32>
    %360 = arith.andi %357, %359 : vector<8x128xi1>
    %361 = arith.extui %360 : vector<8x128xi1> to vector<8x128xi32>
    %362 = arith.sitofp %361 : vector<8x128xi32> to vector<8x128xf32>
    %cst_124 = arith.constant 2.33333325 : f32
    %363 = vector.broadcast %cst_124 : f32 to vector<8x128xf32>
    %364 = arith.cmpf oge, %306, %363 : vector<8x128xf32>
    %cst_125 = arith.constant 3.000000e+00 : f32
    %365 = vector.broadcast %cst_125 : f32 to vector<8x128xf32>
    %366 = arith.cmpf olt, %306, %365 : vector<8x128xf32>
    %367 = arith.andi %364, %366 : vector<8x128xi1>
    %368 = arith.extui %367 : vector<8x128xi1> to vector<8x128xi32>
    %369 = arith.sitofp %368 : vector<8x128xi32> to vector<8x128xf32>
    %cst_126 = arith.constant -3.000000e+00 : f32
    %370 = vector.broadcast %cst_126 : f32 to vector<8x128xf32>
    %371 = arith.subf %306, %370 : vector<8x128xf32>
    %cst_127 = arith.constant 1.500000e+00 : f32
    %372 = vector.broadcast %cst_127 : f32 to vector<8x128xf32>
    %373 = arith.mulf %371, %372 : vector<8x128xf32>
    %374 = arith.mulf %373, %313 : vector<8x128xf32>
    %cst_128 = arith.constant -1.66666663 : f32
    %375 = vector.broadcast %cst_128 : f32 to vector<8x128xf32>
    %376 = arith.subf %375, %306 : vector<8x128xf32>
    %cst_129 = arith.constant 1.500000e+00 : f32
    %377 = vector.broadcast %cst_129 : f32 to vector<8x128xf32>
    %378 = arith.mulf %376, %377 : vector<8x128xf32>
    %379 = arith.mulf %378, %320 : vector<8x128xf32>
    %380 = arith.addf %374, %379 : vector<8x128xf32>
    %cst_130 = arith.constant -2.33333325 : f32
    %381 = vector.broadcast %cst_130 : f32 to vector<8x128xf32>
    %382 = arith.subf %306, %381 : vector<8x128xf32>
    %cst_131 = arith.constant 1.500000e+00 : f32
    %383 = vector.broadcast %cst_131 : f32 to vector<8x128xf32>
    %384 = arith.mulf %382, %383 : vector<8x128xf32>
    %385 = arith.mulf %384, %320 : vector<8x128xf32>
    %cst_132 = arith.constant -1.000000e+00 : f32
    %386 = vector.broadcast %cst_132 : f32 to vector<8x128xf32>
    %387 = arith.subf %386, %306 : vector<8x128xf32>
    %cst_133 = arith.constant 1.500000e+00 : f32
    %388 = vector.broadcast %cst_133 : f32 to vector<8x128xf32>
    %389 = arith.mulf %387, %388 : vector<8x128xf32>
    %390 = arith.mulf %389, %327 : vector<8x128xf32>
    %391 = arith.addf %385, %390 : vector<8x128xf32>
    %cst_134 = arith.constant -1.66666663 : f32
    %392 = vector.broadcast %cst_134 : f32 to vector<8x128xf32>
    %393 = arith.subf %306, %392 : vector<8x128xf32>
    %cst_135 = arith.constant 1.500000e+00 : f32
    %394 = vector.broadcast %cst_135 : f32 to vector<8x128xf32>
    %395 = arith.mulf %393, %394 : vector<8x128xf32>
    %396 = arith.mulf %395, %327 : vector<8x128xf32>
    %cst_136 = arith.constant -0.333333343 : f32
    %397 = vector.broadcast %cst_136 : f32 to vector<8x128xf32>
    %398 = arith.subf %397, %306 : vector<8x128xf32>
    %cst_137 = arith.constant 1.500000e+00 : f32
    %399 = vector.broadcast %cst_137 : f32 to vector<8x128xf32>
    %400 = arith.mulf %398, %399 : vector<8x128xf32>
    %401 = arith.mulf %400, %334 : vector<8x128xf32>
    %402 = arith.addf %396, %401 : vector<8x128xf32>
    %cst_138 = arith.constant -1.000000e+00 : f32
    %403 = vector.broadcast %cst_138 : f32 to vector<8x128xf32>
    %404 = arith.subf %306, %403 : vector<8x128xf32>
    %cst_139 = arith.constant 1.500000e+00 : f32
    %405 = vector.broadcast %cst_139 : f32 to vector<8x128xf32>
    %406 = arith.mulf %404, %405 : vector<8x128xf32>
    %407 = arith.mulf %406, %334 : vector<8x128xf32>
    %cst_140 = arith.constant 0.333333343 : f32
    %408 = vector.broadcast %cst_140 : f32 to vector<8x128xf32>
    %409 = arith.subf %408, %306 : vector<8x128xf32>
    %cst_141 = arith.constant 1.500000e+00 : f32
    %410 = vector.broadcast %cst_141 : f32 to vector<8x128xf32>
    %411 = arith.mulf %409, %410 : vector<8x128xf32>
    %412 = arith.mulf %411, %341 : vector<8x128xf32>
    %413 = arith.addf %407, %412 : vector<8x128xf32>
    %cst_142 = arith.constant -0.333333343 : f32
    %414 = vector.broadcast %cst_142 : f32 to vector<8x128xf32>
    %415 = arith.subf %306, %414 : vector<8x128xf32>
    %cst_143 = arith.constant 1.500000e+00 : f32
    %416 = vector.broadcast %cst_143 : f32 to vector<8x128xf32>
    %417 = arith.mulf %415, %416 : vector<8x128xf32>
    %418 = arith.mulf %417, %341 : vector<8x128xf32>
    %cst_144 = arith.constant 1.000000e+00 : f32
    %419 = vector.broadcast %cst_144 : f32 to vector<8x128xf32>
    %420 = arith.subf %419, %306 : vector<8x128xf32>
    %cst_145 = arith.constant 1.500000e+00 : f32
    %421 = vector.broadcast %cst_145 : f32 to vector<8x128xf32>
    %422 = arith.mulf %420, %421 : vector<8x128xf32>
    %423 = arith.mulf %422, %348 : vector<8x128xf32>
    %424 = arith.addf %418, %423 : vector<8x128xf32>
    %cst_146 = arith.constant 0.333333343 : f32
    %425 = vector.broadcast %cst_146 : f32 to vector<8x128xf32>
    %426 = arith.subf %306, %425 : vector<8x128xf32>
    %cst_147 = arith.constant 1.500000e+00 : f32
    %427 = vector.broadcast %cst_147 : f32 to vector<8x128xf32>
    %428 = arith.mulf %426, %427 : vector<8x128xf32>
    %429 = arith.mulf %428, %348 : vector<8x128xf32>
    %cst_148 = arith.constant 1.66666663 : f32
    %430 = vector.broadcast %cst_148 : f32 to vector<8x128xf32>
    %431 = arith.subf %430, %306 : vector<8x128xf32>
    %cst_149 = arith.constant 1.500000e+00 : f32
    %432 = vector.broadcast %cst_149 : f32 to vector<8x128xf32>
    %433 = arith.mulf %431, %432 : vector<8x128xf32>
    %434 = arith.mulf %433, %355 : vector<8x128xf32>
    %435 = arith.addf %429, %434 : vector<8x128xf32>
    %cst_150 = arith.constant 1.000000e+00 : f32
    %436 = vector.broadcast %cst_150 : f32 to vector<8x128xf32>
    %437 = arith.subf %306, %436 : vector<8x128xf32>
    %cst_151 = arith.constant 1.500000e+00 : f32
    %438 = vector.broadcast %cst_151 : f32 to vector<8x128xf32>
    %439 = arith.mulf %437, %438 : vector<8x128xf32>
    %440 = arith.mulf %439, %355 : vector<8x128xf32>
    %cst_152 = arith.constant 2.33333325 : f32
    %441 = vector.broadcast %cst_152 : f32 to vector<8x128xf32>
    %442 = arith.subf %441, %306 : vector<8x128xf32>
    %cst_153 = arith.constant 1.500000e+00 : f32
    %443 = vector.broadcast %cst_153 : f32 to vector<8x128xf32>
    %444 = arith.mulf %442, %443 : vector<8x128xf32>
    %445 = arith.mulf %444, %362 : vector<8x128xf32>
    %446 = arith.addf %440, %445 : vector<8x128xf32>
    %cst_154 = arith.constant 1.66666663 : f32
    %447 = vector.broadcast %cst_154 : f32 to vector<8x128xf32>
    %448 = arith.subf %306, %447 : vector<8x128xf32>
    %cst_155 = arith.constant 1.500000e+00 : f32
    %449 = vector.broadcast %cst_155 : f32 to vector<8x128xf32>
    %450 = arith.mulf %448, %449 : vector<8x128xf32>
    %451 = arith.mulf %450, %362 : vector<8x128xf32>
    %cst_156 = arith.constant 3.000000e+00 : f32
    %452 = vector.broadcast %cst_156 : f32 to vector<8x128xf32>
    %453 = arith.subf %452, %306 : vector<8x128xf32>
    %cst_157 = arith.constant 1.500000e+00 : f32
    %454 = vector.broadcast %cst_157 : f32 to vector<8x128xf32>
    %455 = arith.mulf %453, %454 : vector<8x128xf32>
    %456 = arith.mulf %455, %369 : vector<8x128xf32>
    %457 = arith.addf %451, %456 : vector<8x128xf32>
    %cst_158 = arith.constant -3.000000e+00 : f32
    %458 = vector.broadcast %cst_158 : f32 to vector<8x128xf32>
    %459 = arith.subf %306, %458 : vector<8x128xf32>
    %cst_159 = arith.constant 7.500000e-01 : f32
    %460 = vector.broadcast %cst_159 : f32 to vector<8x128xf32>
    %461 = arith.mulf %459, %460 : vector<8x128xf32>
    %462 = arith.mulf %461, %380 : vector<8x128xf32>
    %cst_160 = arith.constant -1.000000e+00 : f32
    %463 = vector.broadcast %cst_160 : f32 to vector<8x128xf32>
    %464 = arith.subf %463, %306 : vector<8x128xf32>
    %cst_161 = arith.constant 7.500000e-01 : f32
    %465 = vector.broadcast %cst_161 : f32 to vector<8x128xf32>
    %466 = arith.mulf %464, %465 : vector<8x128xf32>
    %467 = arith.mulf %466, %391 : vector<8x128xf32>
    %468 = arith.addf %462, %467 : vector<8x128xf32>
    %cst_162 = arith.constant -2.33333325 : f32
    %469 = vector.broadcast %cst_162 : f32 to vector<8x128xf32>
    %470 = arith.subf %306, %469 : vector<8x128xf32>
    %cst_163 = arith.constant 7.500000e-01 : f32
    %471 = vector.broadcast %cst_163 : f32 to vector<8x128xf32>
    %472 = arith.mulf %470, %471 : vector<8x128xf32>
    %473 = arith.mulf %472, %391 : vector<8x128xf32>
    %cst_164 = arith.constant -0.333333343 : f32
    %474 = vector.broadcast %cst_164 : f32 to vector<8x128xf32>
    %475 = arith.subf %474, %306 : vector<8x128xf32>
    %cst_165 = arith.constant 7.500000e-01 : f32
    %476 = vector.broadcast %cst_165 : f32 to vector<8x128xf32>
    %477 = arith.mulf %475, %476 : vector<8x128xf32>
    %478 = arith.mulf %477, %402 : vector<8x128xf32>
    %479 = arith.addf %473, %478 : vector<8x128xf32>
    %cst_166 = arith.constant -1.66666663 : f32
    %480 = vector.broadcast %cst_166 : f32 to vector<8x128xf32>
    %481 = arith.subf %306, %480 : vector<8x128xf32>
    %cst_167 = arith.constant 7.500000e-01 : f32
    %482 = vector.broadcast %cst_167 : f32 to vector<8x128xf32>
    %483 = arith.mulf %481, %482 : vector<8x128xf32>
    %484 = arith.mulf %483, %402 : vector<8x128xf32>
    %cst_168 = arith.constant 0.333333343 : f32
    %485 = vector.broadcast %cst_168 : f32 to vector<8x128xf32>
    %486 = arith.subf %485, %306 : vector<8x128xf32>
    %cst_169 = arith.constant 7.500000e-01 : f32
    %487 = vector.broadcast %cst_169 : f32 to vector<8x128xf32>
    %488 = arith.mulf %486, %487 : vector<8x128xf32>
    %489 = arith.mulf %488, %413 : vector<8x128xf32>
    %490 = arith.addf %484, %489 : vector<8x128xf32>
    %cst_170 = arith.constant -1.000000e+00 : f32
    %491 = vector.broadcast %cst_170 : f32 to vector<8x128xf32>
    %492 = arith.subf %306, %491 : vector<8x128xf32>
    %cst_171 = arith.constant 7.500000e-01 : f32
    %493 = vector.broadcast %cst_171 : f32 to vector<8x128xf32>
    %494 = arith.mulf %492, %493 : vector<8x128xf32>
    %495 = arith.mulf %494, %413 : vector<8x128xf32>
    %cst_172 = arith.constant 1.000000e+00 : f32
    %496 = vector.broadcast %cst_172 : f32 to vector<8x128xf32>
    %497 = arith.subf %496, %306 : vector<8x128xf32>
    %cst_173 = arith.constant 7.500000e-01 : f32
    %498 = vector.broadcast %cst_173 : f32 to vector<8x128xf32>
    %499 = arith.mulf %497, %498 : vector<8x128xf32>
    %500 = arith.mulf %499, %424 : vector<8x128xf32>
    %501 = arith.addf %495, %500 : vector<8x128xf32>
    %cst_174 = arith.constant -0.333333343 : f32
    %502 = vector.broadcast %cst_174 : f32 to vector<8x128xf32>
    %503 = arith.subf %306, %502 : vector<8x128xf32>
    %cst_175 = arith.constant 7.500000e-01 : f32
    %504 = vector.broadcast %cst_175 : f32 to vector<8x128xf32>
    %505 = arith.mulf %503, %504 : vector<8x128xf32>
    %506 = arith.mulf %505, %424 : vector<8x128xf32>
    %cst_176 = arith.constant 1.66666663 : f32
    %507 = vector.broadcast %cst_176 : f32 to vector<8x128xf32>
    %508 = arith.subf %507, %306 : vector<8x128xf32>
    %cst_177 = arith.constant 7.500000e-01 : f32
    %509 = vector.broadcast %cst_177 : f32 to vector<8x128xf32>
    %510 = arith.mulf %508, %509 : vector<8x128xf32>
    %511 = arith.mulf %510, %435 : vector<8x128xf32>
    %512 = arith.addf %506, %511 : vector<8x128xf32>
    %cst_178 = arith.constant 0.333333343 : f32
    %513 = vector.broadcast %cst_178 : f32 to vector<8x128xf32>
    %514 = arith.subf %306, %513 : vector<8x128xf32>
    %cst_179 = arith.constant 7.500000e-01 : f32
    %515 = vector.broadcast %cst_179 : f32 to vector<8x128xf32>
    %516 = arith.mulf %514, %515 : vector<8x128xf32>
    %517 = arith.mulf %516, %435 : vector<8x128xf32>
    %cst_180 = arith.constant 2.33333325 : f32
    %518 = vector.broadcast %cst_180 : f32 to vector<8x128xf32>
    %519 = arith.subf %518, %306 : vector<8x128xf32>
    %cst_181 = arith.constant 7.500000e-01 : f32
    %520 = vector.broadcast %cst_181 : f32 to vector<8x128xf32>
    %521 = arith.mulf %519, %520 : vector<8x128xf32>
    %522 = arith.mulf %521, %446 : vector<8x128xf32>
    %523 = arith.addf %517, %522 : vector<8x128xf32>
    %cst_182 = arith.constant 1.000000e+00 : f32
    %524 = vector.broadcast %cst_182 : f32 to vector<8x128xf32>
    %525 = arith.subf %306, %524 : vector<8x128xf32>
    %cst_183 = arith.constant 7.500000e-01 : f32
    %526 = vector.broadcast %cst_183 : f32 to vector<8x128xf32>
    %527 = arith.mulf %525, %526 : vector<8x128xf32>
    %528 = arith.mulf %527, %446 : vector<8x128xf32>
    %cst_184 = arith.constant 3.000000e+00 : f32
    %529 = vector.broadcast %cst_184 : f32 to vector<8x128xf32>
    %530 = arith.subf %529, %306 : vector<8x128xf32>
    %cst_185 = arith.constant 7.500000e-01 : f32
    %531 = vector.broadcast %cst_185 : f32 to vector<8x128xf32>
    %532 = arith.mulf %530, %531 : vector<8x128xf32>
    %533 = arith.mulf %532, %457 : vector<8x128xf32>
    %534 = arith.addf %528, %533 : vector<8x128xf32>
    %cst_186 = arith.constant -3.000000e+00 : f32
    %535 = vector.broadcast %cst_186 : f32 to vector<8x128xf32>
    %536 = arith.subf %306, %535 : vector<8x128xf32>
    %cst_187 = arith.constant 5.000000e-01 : f32
    %537 = vector.broadcast %cst_187 : f32 to vector<8x128xf32>
    %538 = arith.mulf %536, %537 : vector<8x128xf32>
    %539 = arith.mulf %538, %468 : vector<8x128xf32>
    %cst_188 = arith.constant -0.333333343 : f32
    %540 = vector.broadcast %cst_188 : f32 to vector<8x128xf32>
    %541 = arith.subf %540, %306 : vector<8x128xf32>
    %cst_189 = arith.constant 5.000000e-01 : f32
    %542 = vector.broadcast %cst_189 : f32 to vector<8x128xf32>
    %543 = arith.mulf %541, %542 : vector<8x128xf32>
    %544 = arith.mulf %543, %479 : vector<8x128xf32>
    %545 = arith.addf %539, %544 : vector<8x128xf32>
    %cst_190 = arith.constant -2.33333325 : f32
    %546 = vector.broadcast %cst_190 : f32 to vector<8x128xf32>
    %547 = arith.subf %306, %546 : vector<8x128xf32>
    %cst_191 = arith.constant 5.000000e-01 : f32
    %548 = vector.broadcast %cst_191 : f32 to vector<8x128xf32>
    %549 = arith.mulf %547, %548 : vector<8x128xf32>
    %550 = arith.mulf %549, %479 : vector<8x128xf32>
    %cst_192 = arith.constant 0.333333343 : f32
    %551 = vector.broadcast %cst_192 : f32 to vector<8x128xf32>
    %552 = arith.subf %551, %306 : vector<8x128xf32>
    %cst_193 = arith.constant 5.000000e-01 : f32
    %553 = vector.broadcast %cst_193 : f32 to vector<8x128xf32>
    %554 = arith.mulf %552, %553 : vector<8x128xf32>
    %555 = arith.mulf %554, %490 : vector<8x128xf32>
    %556 = arith.addf %550, %555 : vector<8x128xf32>
    %cst_194 = arith.constant -1.66666663 : f32
    %557 = vector.broadcast %cst_194 : f32 to vector<8x128xf32>
    %558 = arith.subf %306, %557 : vector<8x128xf32>
    %cst_195 = arith.constant 5.000000e-01 : f32
    %559 = vector.broadcast %cst_195 : f32 to vector<8x128xf32>
    %560 = arith.mulf %558, %559 : vector<8x128xf32>
    %561 = arith.mulf %560, %490 : vector<8x128xf32>
    %cst_196 = arith.constant 1.000000e+00 : f32
    %562 = vector.broadcast %cst_196 : f32 to vector<8x128xf32>
    %563 = arith.subf %562, %306 : vector<8x128xf32>
    %cst_197 = arith.constant 5.000000e-01 : f32
    %564 = vector.broadcast %cst_197 : f32 to vector<8x128xf32>
    %565 = arith.mulf %563, %564 : vector<8x128xf32>
    %566 = arith.mulf %565, %501 : vector<8x128xf32>
    %567 = arith.addf %561, %566 : vector<8x128xf32>
    %cst_198 = arith.constant -1.000000e+00 : f32
    %568 = vector.broadcast %cst_198 : f32 to vector<8x128xf32>
    %569 = arith.subf %306, %568 : vector<8x128xf32>
    %cst_199 = arith.constant 5.000000e-01 : f32
    %570 = vector.broadcast %cst_199 : f32 to vector<8x128xf32>
    %571 = arith.mulf %569, %570 : vector<8x128xf32>
    %572 = arith.mulf %571, %501 : vector<8x128xf32>
    %cst_200 = arith.constant 1.66666663 : f32
    %573 = vector.broadcast %cst_200 : f32 to vector<8x128xf32>
    %574 = arith.subf %573, %306 : vector<8x128xf32>
    %cst_201 = arith.constant 5.000000e-01 : f32
    %575 = vector.broadcast %cst_201 : f32 to vector<8x128xf32>
    %576 = arith.mulf %574, %575 : vector<8x128xf32>
    %577 = arith.mulf %576, %512 : vector<8x128xf32>
    %578 = arith.addf %572, %577 : vector<8x128xf32>
    %cst_202 = arith.constant -0.333333343 : f32
    %579 = vector.broadcast %cst_202 : f32 to vector<8x128xf32>
    %580 = arith.subf %306, %579 : vector<8x128xf32>
    %cst_203 = arith.constant 5.000000e-01 : f32
    %581 = vector.broadcast %cst_203 : f32 to vector<8x128xf32>
    %582 = arith.mulf %580, %581 : vector<8x128xf32>
    %583 = arith.mulf %582, %512 : vector<8x128xf32>
    %cst_204 = arith.constant 2.33333325 : f32
    %584 = vector.broadcast %cst_204 : f32 to vector<8x128xf32>
    %585 = arith.subf %584, %306 : vector<8x128xf32>
    %cst_205 = arith.constant 5.000000e-01 : f32
    %586 = vector.broadcast %cst_205 : f32 to vector<8x128xf32>
    %587 = arith.mulf %585, %586 : vector<8x128xf32>
    %588 = arith.mulf %587, %523 : vector<8x128xf32>
    %589 = arith.addf %583, %588 : vector<8x128xf32>
    %cst_206 = arith.constant 0.333333343 : f32
    %590 = vector.broadcast %cst_206 : f32 to vector<8x128xf32>
    %591 = arith.subf %306, %590 : vector<8x128xf32>
    %cst_207 = arith.constant 5.000000e-01 : f32
    %592 = vector.broadcast %cst_207 : f32 to vector<8x128xf32>
    %593 = arith.mulf %591, %592 : vector<8x128xf32>
    %594 = arith.mulf %593, %523 : vector<8x128xf32>
    %cst_208 = arith.constant 3.000000e+00 : f32
    %595 = vector.broadcast %cst_208 : f32 to vector<8x128xf32>
    %596 = arith.subf %595, %306 : vector<8x128xf32>
    %cst_209 = arith.constant 5.000000e-01 : f32
    %597 = vector.broadcast %cst_209 : f32 to vector<8x128xf32>
    %598 = arith.mulf %596, %597 : vector<8x128xf32>
    %599 = arith.mulf %598, %534 : vector<8x128xf32>
    %600 = arith.addf %594, %599 : vector<8x128xf32>
    %601 = arith.negf %306 : vector<8x128xf32>
    %602 = math.exp %601 : vector<8x128xf32>
    %cst_210 = arith.constant 1.000000e+00 : f32
    %603 = vector.broadcast %cst_210 : f32 to vector<8x128xf32>
    %604 = arith.addf %603, %602 : vector<8x128xf32>
    %605 = arith.divf %603, %604 : vector<8x128xf32>
    %606 = arith.mulf %306, %605 : vector<8x128xf32>
    %607 = tpu.concatenate %545, %556, %567, %578, %589, %600, %606 in 1 : vector<8x128xf32>, vector<8x128xf32>, vector<8x128xf32>, vector<8x128xf32>, vector<8x128xf32>, vector<8x128xf32>, vector<8x128xf32> -> vector<8x896xf32>
    %c0_211 = arith.constant 0 : index
    %c0_212 = arith.constant 0 : index
    %608 = vector.load %arg4[%c0_211, %c0_212] : memref<896x128xf32, #tpu.memory_space<vmem>>, vector<896x128xf32>
    %cst_213 = arith.constant dense<0.000000e+00> : vector<8x128xf32>
    %609 = tpu.matmul %607, %608, %cst_213 {dimension_numbers = #tpu.dot_dimension_numbers<[1], [0], [0], [1], [0, 0, 1, 1], [], []>} : vector<8x896xf32>, vector<896x128xf32>, vector<8x128xf32> -> vector<8x128xf32>
    %c0_214 = arith.constant 0 : index
    %c0_215 = arith.constant 0 : index
    %610 = vector.load %arg5[%c0_214, %c0_215] : memref<1x128xf32, #tpu.memory_space<vmem>>, vector<1x128xf32>
    %611 = vector.broadcast %610 : vector<1x128xf32> to vector<8x128xf32>
    %612 = arith.addf %609, %611 : vector<8x128xf32>
    %cst_216 = arith.constant -3.000000e+00 : f32
    %613 = vector.broadcast %cst_216 : f32 to vector<8x128xf32>
    %614 = arith.cmpf oge, %612, %613 : vector<8x128xf32>
    %cst_217 = arith.constant -2.33333325 : f32
    %615 = vector.broadcast %cst_217 : f32 to vector<8x128xf32>
    %616 = arith.cmpf olt, %612, %615 : vector<8x128xf32>
    %617 = arith.andi %614, %616 : vector<8x128xi1>
    %618 = arith.extui %617 : vector<8x128xi1> to vector<8x128xi32>
    %619 = arith.sitofp %618 : vector<8x128xi32> to vector<8x128xf32>
    %cst_218 = arith.constant -2.33333325 : f32
    %620 = vector.broadcast %cst_218 : f32 to vector<8x128xf32>
    %621 = arith.cmpf oge, %612, %620 : vector<8x128xf32>
    %cst_219 = arith.constant -1.66666663 : f32
    %622 = vector.broadcast %cst_219 : f32 to vector<8x128xf32>
    %623 = arith.cmpf olt, %612, %622 : vector<8x128xf32>
    %624 = arith.andi %621, %623 : vector<8x128xi1>
    %625 = arith.extui %624 : vector<8x128xi1> to vector<8x128xi32>
    %626 = arith.sitofp %625 : vector<8x128xi32> to vector<8x128xf32>
    %cst_220 = arith.constant -1.66666663 : f32
    %627 = vector.broadcast %cst_220 : f32 to vector<8x128xf32>
    %628 = arith.cmpf oge, %612, %627 : vector<8x128xf32>
    %cst_221 = arith.constant -1.000000e+00 : f32
    %629 = vector.broadcast %cst_221 : f32 to vector<8x128xf32>
    %630 = arith.cmpf olt, %612, %629 : vector<8x128xf32>
    %631 = arith.andi %628, %630 : vector<8x128xi1>
    %632 = arith.extui %631 : vector<8x128xi1> to vector<8x128xi32>
    %633 = arith.sitofp %632 : vector<8x128xi32> to vector<8x128xf32>
    %cst_222 = arith.constant -1.000000e+00 : f32
    %634 = vector.broadcast %cst_222 : f32 to vector<8x128xf32>
    %635 = arith.cmpf oge, %612, %634 : vector<8x128xf32>
    %cst_223 = arith.constant -0.333333343 : f32
    %636 = vector.broadcast %cst_223 : f32 to vector<8x128xf32>
    %637 = arith.cmpf olt, %612, %636 : vector<8x128xf32>
    %638 = arith.andi %635, %637 : vector<8x128xi1>
    %639 = arith.extui %638 : vector<8x128xi1> to vector<8x128xi32>
    %640 = arith.sitofp %639 : vector<8x128xi32> to vector<8x128xf32>
    %cst_224 = arith.constant -0.333333343 : f32
    %641 = vector.broadcast %cst_224 : f32 to vector<8x128xf32>
    %642 = arith.cmpf oge, %612, %641 : vector<8x128xf32>
    %cst_225 = arith.constant 0.333333343 : f32
    %643 = vector.broadcast %cst_225 : f32 to vector<8x128xf32>
    %644 = arith.cmpf olt, %612, %643 : vector<8x128xf32>
    %645 = arith.andi %642, %644 : vector<8x128xi1>
    %646 = arith.extui %645 : vector<8x128xi1> to vector<8x128xi32>
    %647 = arith.sitofp %646 : vector<8x128xi32> to vector<8x128xf32>
    %cst_226 = arith.constant 0.333333343 : f32
    %648 = vector.broadcast %cst_226 : f32 to vector<8x128xf32>
    %649 = arith.cmpf oge, %612, %648 : vector<8x128xf32>
    %cst_227 = arith.constant 1.000000e+00 : f32
    %650 = vector.broadcast %cst_227 : f32 to vector<8x128xf32>
    %651 = arith.cmpf olt, %612, %650 : vector<8x128xf32>
    %652 = arith.andi %649, %651 : vector<8x128xi1>
    %653 = arith.extui %652 : vector<8x128xi1> to vector<8x128xi32>
    %654 = arith.sitofp %653 : vector<8x128xi32> to vector<8x128xf32>
    %cst_228 = arith.constant 1.000000e+00 : f32
    %655 = vector.broadcast %cst_228 : f32 to vector<8x128xf32>
    %656 = arith.cmpf oge, %612, %655 : vector<8x128xf32>
    %cst_229 = arith.constant 1.66666663 : f32
    %657 = vector.broadcast %cst_229 : f32 to vector<8x128xf32>
    %658 = arith.cmpf olt, %612, %657 : vector<8x128xf32>
    %659 = arith.andi %656, %658 : vector<8x128xi1>
    %660 = arith.extui %659 : vector<8x128xi1> to vector<8x128xi32>
    %661 = arith.sitofp %660 : vector<8x128xi32> to vector<8x128xf32>
    %cst_230 = arith.constant 1.66666663 : f32
    %662 = vector.broadcast %cst_230 : f32 to vector<8x128xf32>
    %663 = arith.cmpf oge, %612, %662 : vector<8x128xf32>
    %cst_231 = arith.constant 2.33333325 : f32
    %664 = vector.broadcast %cst_231 : f32 to vector<8x128xf32>
    %665 = arith.cmpf olt, %612, %664 : vector<8x128xf32>
    %666 = arith.andi %663, %665 : vector<8x128xi1>
    %667 = arith.extui %666 : vector<8x128xi1> to vector<8x128xi32>
    %668 = arith.sitofp %667 : vector<8x128xi32> to vector<8x128xf32>
    %cst_232 = arith.constant 2.33333325 : f32
    %669 = vector.broadcast %cst_232 : f32 to vector<8x128xf32>
    %670 = arith.cmpf oge, %612, %669 : vector<8x128xf32>
    %cst_233 = arith.constant 3.000000e+00 : f32
    %671 = vector.broadcast %cst_233 : f32 to vector<8x128xf32>
    %672 = arith.cmpf olt, %612, %671 : vector<8x128xf32>
    %673 = arith.andi %670, %672 : vector<8x128xi1>
    %674 = arith.extui %673 : vector<8x128xi1> to vector<8x128xi32>
    %675 = arith.sitofp %674 : vector<8x128xi32> to vector<8x128xf32>
    %cst_234 = arith.constant -3.000000e+00 : f32
    %676 = vector.broadcast %cst_234 : f32 to vector<8x128xf32>
    %677 = arith.subf %612, %676 : vector<8x128xf32>
    %cst_235 = arith.constant 1.500000e+00 : f32
    %678 = vector.broadcast %cst_235 : f32 to vector<8x128xf32>
    %679 = arith.mulf %677, %678 : vector<8x128xf32>
    %680 = arith.mulf %679, %619 : vector<8x128xf32>
    %cst_236 = arith.constant -1.66666663 : f32
    %681 = vector.broadcast %cst_236 : f32 to vector<8x128xf32>
    %682 = arith.subf %681, %612 : vector<8x128xf32>
    %cst_237 = arith.constant 1.500000e+00 : f32
    %683 = vector.broadcast %cst_237 : f32 to vector<8x128xf32>
    %684 = arith.mulf %682, %683 : vector<8x128xf32>
    %685 = arith.mulf %684, %626 : vector<8x128xf32>
    %686 = arith.addf %680, %685 : vector<8x128xf32>
    %cst_238 = arith.constant -2.33333325 : f32
    %687 = vector.broadcast %cst_238 : f32 to vector<8x128xf32>
    %688 = arith.subf %612, %687 : vector<8x128xf32>
    %cst_239 = arith.constant 1.500000e+00 : f32
    %689 = vector.broadcast %cst_239 : f32 to vector<8x128xf32>
    %690 = arith.mulf %688, %689 : vector<8x128xf32>
    %691 = arith.mulf %690, %626 : vector<8x128xf32>
    %cst_240 = arith.constant -1.000000e+00 : f32
    %692 = vector.broadcast %cst_240 : f32 to vector<8x128xf32>
    %693 = arith.subf %692, %612 : vector<8x128xf32>
    %cst_241 = arith.constant 1.500000e+00 : f32
    %694 = vector.broadcast %cst_241 : f32 to vector<8x128xf32>
    %695 = arith.mulf %693, %694 : vector<8x128xf32>
    %696 = arith.mulf %695, %633 : vector<8x128xf32>
    %697 = arith.addf %691, %696 : vector<8x128xf32>
    %cst_242 = arith.constant -1.66666663 : f32
    %698 = vector.broadcast %cst_242 : f32 to vector<8x128xf32>
    %699 = arith.subf %612, %698 : vector<8x128xf32>
    %cst_243 = arith.constant 1.500000e+00 : f32
    %700 = vector.broadcast %cst_243 : f32 to vector<8x128xf32>
    %701 = arith.mulf %699, %700 : vector<8x128xf32>
    %702 = arith.mulf %701, %633 : vector<8x128xf32>
    %cst_244 = arith.constant -0.333333343 : f32
    %703 = vector.broadcast %cst_244 : f32 to vector<8x128xf32>
    %704 = arith.subf %703, %612 : vector<8x128xf32>
    %cst_245 = arith.constant 1.500000e+00 : f32
    %705 = vector.broadcast %cst_245 : f32 to vector<8x128xf32>
    %706 = arith.mulf %704, %705 : vector<8x128xf32>
    %707 = arith.mulf %706, %640 : vector<8x128xf32>
    %708 = arith.addf %702, %707 : vector<8x128xf32>
    %cst_246 = arith.constant -1.000000e+00 : f32
    %709 = vector.broadcast %cst_246 : f32 to vector<8x128xf32>
    %710 = arith.subf %612, %709 : vector<8x128xf32>
    %cst_247 = arith.constant 1.500000e+00 : f32
    %711 = vector.broadcast %cst_247 : f32 to vector<8x128xf32>
    %712 = arith.mulf %710, %711 : vector<8x128xf32>
    %713 = arith.mulf %712, %640 : vector<8x128xf32>
    %cst_248 = arith.constant 0.333333343 : f32
    %714 = vector.broadcast %cst_248 : f32 to vector<8x128xf32>
    %715 = arith.subf %714, %612 : vector<8x128xf32>
    %cst_249 = arith.constant 1.500000e+00 : f32
    %716 = vector.broadcast %cst_249 : f32 to vector<8x128xf32>
    %717 = arith.mulf %715, %716 : vector<8x128xf32>
    %718 = arith.mulf %717, %647 : vector<8x128xf32>
    %719 = arith.addf %713, %718 : vector<8x128xf32>
    %cst_250 = arith.constant -0.333333343 : f32
    %720 = vector.broadcast %cst_250 : f32 to vector<8x128xf32>
    %721 = arith.subf %612, %720 : vector<8x128xf32>
    %cst_251 = arith.constant 1.500000e+00 : f32
    %722 = vector.broadcast %cst_251 : f32 to vector<8x128xf32>
    %723 = arith.mulf %721, %722 : vector<8x128xf32>
    %724 = arith.mulf %723, %647 : vector<8x128xf32>
    %cst_252 = arith.constant 1.000000e+00 : f32
    %725 = vector.broadcast %cst_252 : f32 to vector<8x128xf32>
    %726 = arith.subf %725, %612 : vector<8x128xf32>
    %cst_253 = arith.constant 1.500000e+00 : f32
    %727 = vector.broadcast %cst_253 : f32 to vector<8x128xf32>
    %728 = arith.mulf %726, %727 : vector<8x128xf32>
    %729 = arith.mulf %728, %654 : vector<8x128xf32>
    %730 = arith.addf %724, %729 : vector<8x128xf32>
    %cst_254 = arith.constant 0.333333343 : f32
    %731 = vector.broadcast %cst_254 : f32 to vector<8x128xf32>
    %732 = arith.subf %612, %731 : vector<8x128xf32>
    %cst_255 = arith.constant 1.500000e+00 : f32
    %733 = vector.broadcast %cst_255 : f32 to vector<8x128xf32>
    %734 = arith.mulf %732, %733 : vector<8x128xf32>
    %735 = arith.mulf %734, %654 : vector<8x128xf32>
    %cst_256 = arith.constant 1.66666663 : f32
    %736 = vector.broadcast %cst_256 : f32 to vector<8x128xf32>
    %737 = arith.subf %736, %612 : vector<8x128xf32>
    %cst_257 = arith.constant 1.500000e+00 : f32
    %738 = vector.broadcast %cst_257 : f32 to vector<8x128xf32>
    %739 = arith.mulf %737, %738 : vector<8x128xf32>
    %740 = arith.mulf %739, %661 : vector<8x128xf32>
    %741 = arith.addf %735, %740 : vector<8x128xf32>
    %cst_258 = arith.constant 1.000000e+00 : f32
    %742 = vector.broadcast %cst_258 : f32 to vector<8x128xf32>
    %743 = arith.subf %612, %742 : vector<8x128xf32>
    %cst_259 = arith.constant 1.500000e+00 : f32
    %744 = vector.broadcast %cst_259 : f32 to vector<8x128xf32>
    %745 = arith.mulf %743, %744 : vector<8x128xf32>
    %746 = arith.mulf %745, %661 : vector<8x128xf32>
    %cst_260 = arith.constant 2.33333325 : f32
    %747 = vector.broadcast %cst_260 : f32 to vector<8x128xf32>
    %748 = arith.subf %747, %612 : vector<8x128xf32>
    %cst_261 = arith.constant 1.500000e+00 : f32
    %749 = vector.broadcast %cst_261 : f32 to vector<8x128xf32>
    %750 = arith.mulf %748, %749 : vector<8x128xf32>
    %751 = arith.mulf %750, %668 : vector<8x128xf32>
    %752 = arith.addf %746, %751 : vector<8x128xf32>
    %cst_262 = arith.constant 1.66666663 : f32
    %753 = vector.broadcast %cst_262 : f32 to vector<8x128xf32>
    %754 = arith.subf %612, %753 : vector<8x128xf32>
    %cst_263 = arith.constant 1.500000e+00 : f32
    %755 = vector.broadcast %cst_263 : f32 to vector<8x128xf32>
    %756 = arith.mulf %754, %755 : vector<8x128xf32>
    %757 = arith.mulf %756, %668 : vector<8x128xf32>
    %cst_264 = arith.constant 3.000000e+00 : f32
    %758 = vector.broadcast %cst_264 : f32 to vector<8x128xf32>
    %759 = arith.subf %758, %612 : vector<8x128xf32>
    %cst_265 = arith.constant 1.500000e+00 : f32
    %760 = vector.broadcast %cst_265 : f32 to vector<8x128xf32>
    %761 = arith.mulf %759, %760 : vector<8x128xf32>
    %762 = arith.mulf %761, %675 : vector<8x128xf32>
    %763 = arith.addf %757, %762 : vector<8x128xf32>
    %cst_266 = arith.constant -3.000000e+00 : f32
    %764 = vector.broadcast %cst_266 : f32 to vector<8x128xf32>
    %765 = arith.subf %612, %764 : vector<8x128xf32>
    %cst_267 = arith.constant 7.500000e-01 : f32
    %766 = vector.broadcast %cst_267 : f32 to vector<8x128xf32>
    %767 = arith.mulf %765, %766 : vector<8x128xf32>
    %768 = arith.mulf %767, %686 : vector<8x128xf32>
    %cst_268 = arith.constant -1.000000e+00 : f32
    %769 = vector.broadcast %cst_268 : f32 to vector<8x128xf32>
    %770 = arith.subf %769, %612 : vector<8x128xf32>
    %cst_269 = arith.constant 7.500000e-01 : f32
    %771 = vector.broadcast %cst_269 : f32 to vector<8x128xf32>
    %772 = arith.mulf %770, %771 : vector<8x128xf32>
    %773 = arith.mulf %772, %697 : vector<8x128xf32>
    %774 = arith.addf %768, %773 : vector<8x128xf32>
    %cst_270 = arith.constant -2.33333325 : f32
    %775 = vector.broadcast %cst_270 : f32 to vector<8x128xf32>
    %776 = arith.subf %612, %775 : vector<8x128xf32>
    %cst_271 = arith.constant 7.500000e-01 : f32
    %777 = vector.broadcast %cst_271 : f32 to vector<8x128xf32>
    %778 = arith.mulf %776, %777 : vector<8x128xf32>
    %779 = arith.mulf %778, %697 : vector<8x128xf32>
    %cst_272 = arith.constant -0.333333343 : f32
    %780 = vector.broadcast %cst_272 : f32 to vector<8x128xf32>
    %781 = arith.subf %780, %612 : vector<8x128xf32>
    %cst_273 = arith.constant 7.500000e-01 : f32
    %782 = vector.broadcast %cst_273 : f32 to vector<8x128xf32>
    %783 = arith.mulf %781, %782 : vector<8x128xf32>
    %784 = arith.mulf %783, %708 : vector<8x128xf32>
    %785 = arith.addf %779, %784 : vector<8x128xf32>
    %cst_274 = arith.constant -1.66666663 : f32
    %786 = vector.broadcast %cst_274 : f32 to vector<8x128xf32>
    %787 = arith.subf %612, %786 : vector<8x128xf32>
    %cst_275 = arith.constant 7.500000e-01 : f32
    %788 = vector.broadcast %cst_275 : f32 to vector<8x128xf32>
    %789 = arith.mulf %787, %788 : vector<8x128xf32>
    %790 = arith.mulf %789, %708 : vector<8x128xf32>
    %cst_276 = arith.constant 0.333333343 : f32
    %791 = vector.broadcast %cst_276 : f32 to vector<8x128xf32>
    %792 = arith.subf %791, %612 : vector<8x128xf32>
    %cst_277 = arith.constant 7.500000e-01 : f32
    %793 = vector.broadcast %cst_277 : f32 to vector<8x128xf32>
    %794 = arith.mulf %792, %793 : vector<8x128xf32>
    %795 = arith.mulf %794, %719 : vector<8x128xf32>
    %796 = arith.addf %790, %795 : vector<8x128xf32>
    %cst_278 = arith.constant -1.000000e+00 : f32
    %797 = vector.broadcast %cst_278 : f32 to vector<8x128xf32>
    %798 = arith.subf %612, %797 : vector<8x128xf32>
    %cst_279 = arith.constant 7.500000e-01 : f32
    %799 = vector.broadcast %cst_279 : f32 to vector<8x128xf32>
    %800 = arith.mulf %798, %799 : vector<8x128xf32>
    %801 = arith.mulf %800, %719 : vector<8x128xf32>
    %cst_280 = arith.constant 1.000000e+00 : f32
    %802 = vector.broadcast %cst_280 : f32 to vector<8x128xf32>
    %803 = arith.subf %802, %612 : vector<8x128xf32>
    %cst_281 = arith.constant 7.500000e-01 : f32
    %804 = vector.broadcast %cst_281 : f32 to vector<8x128xf32>
    %805 = arith.mulf %803, %804 : vector<8x128xf32>
    %806 = arith.mulf %805, %730 : vector<8x128xf32>
    %807 = arith.addf %801, %806 : vector<8x128xf32>
    %cst_282 = arith.constant -0.333333343 : f32
    %808 = vector.broadcast %cst_282 : f32 to vector<8x128xf32>
    %809 = arith.subf %612, %808 : vector<8x128xf32>
    %cst_283 = arith.constant 7.500000e-01 : f32
    %810 = vector.broadcast %cst_283 : f32 to vector<8x128xf32>
    %811 = arith.mulf %809, %810 : vector<8x128xf32>
    %812 = arith.mulf %811, %730 : vector<8x128xf32>
    %cst_284 = arith.constant 1.66666663 : f32
    %813 = vector.broadcast %cst_284 : f32 to vector<8x128xf32>
    %814 = arith.subf %813, %612 : vector<8x128xf32>
    %cst_285 = arith.constant 7.500000e-01 : f32
    %815 = vector.broadcast %cst_285 : f32 to vector<8x128xf32>
    %816 = arith.mulf %814, %815 : vector<8x128xf32>
    %817 = arith.mulf %816, %741 : vector<8x128xf32>
    %818 = arith.addf %812, %817 : vector<8x128xf32>
    %cst_286 = arith.constant 0.333333343 : f32
    %819 = vector.broadcast %cst_286 : f32 to vector<8x128xf32>
    %820 = arith.subf %612, %819 : vector<8x128xf32>
    %cst_287 = arith.constant 7.500000e-01 : f32
    %821 = vector.broadcast %cst_287 : f32 to vector<8x128xf32>
    %822 = arith.mulf %820, %821 : vector<8x128xf32>
    %823 = arith.mulf %822, %741 : vector<8x128xf32>
    %cst_288 = arith.constant 2.33333325 : f32
    %824 = vector.broadcast %cst_288 : f32 to vector<8x128xf32>
    %825 = arith.subf %824, %612 : vector<8x128xf32>
    %cst_289 = arith.constant 7.500000e-01 : f32
    %826 = vector.broadcast %cst_289 : f32 to vector<8x128xf32>
    %827 = arith.mulf %825, %826 : vector<8x128xf32>
    %828 = arith.mulf %827, %752 : vector<8x128xf32>
    %829 = arith.addf %823, %828 : vector<8x128xf32>
    %cst_290 = arith.constant 1.000000e+00 : f32
    %830 = vector.broadcast %cst_290 : f32 to vector<8x128xf32>
    %831 = arith.subf %612, %830 : vector<8x128xf32>
    %cst_291 = arith.constant 7.500000e-01 : f32
    %832 = vector.broadcast %cst_291 : f32 to vector<8x128xf32>
    %833 = arith.mulf %831, %832 : vector<8x128xf32>
    %834 = arith.mulf %833, %752 : vector<8x128xf32>
    %cst_292 = arith.constant 3.000000e+00 : f32
    %835 = vector.broadcast %cst_292 : f32 to vector<8x128xf32>
    %836 = arith.subf %835, %612 : vector<8x128xf32>
    %cst_293 = arith.constant 7.500000e-01 : f32
    %837 = vector.broadcast %cst_293 : f32 to vector<8x128xf32>
    %838 = arith.mulf %836, %837 : vector<8x128xf32>
    %839 = arith.mulf %838, %763 : vector<8x128xf32>
    %840 = arith.addf %834, %839 : vector<8x128xf32>
    %cst_294 = arith.constant -3.000000e+00 : f32
    %841 = vector.broadcast %cst_294 : f32 to vector<8x128xf32>
    %842 = arith.subf %612, %841 : vector<8x128xf32>
    %cst_295 = arith.constant 5.000000e-01 : f32
    %843 = vector.broadcast %cst_295 : f32 to vector<8x128xf32>
    %844 = arith.mulf %842, %843 : vector<8x128xf32>
    %845 = arith.mulf %844, %774 : vector<8x128xf32>
    %cst_296 = arith.constant -0.333333343 : f32
    %846 = vector.broadcast %cst_296 : f32 to vector<8x128xf32>
    %847 = arith.subf %846, %612 : vector<8x128xf32>
    %cst_297 = arith.constant 5.000000e-01 : f32
    %848 = vector.broadcast %cst_297 : f32 to vector<8x128xf32>
    %849 = arith.mulf %847, %848 : vector<8x128xf32>
    %850 = arith.mulf %849, %785 : vector<8x128xf32>
    %851 = arith.addf %845, %850 : vector<8x128xf32>
    %cst_298 = arith.constant -2.33333325 : f32
    %852 = vector.broadcast %cst_298 : f32 to vector<8x128xf32>
    %853 = arith.subf %612, %852 : vector<8x128xf32>
    %cst_299 = arith.constant 5.000000e-01 : f32
    %854 = vector.broadcast %cst_299 : f32 to vector<8x128xf32>
    %855 = arith.mulf %853, %854 : vector<8x128xf32>
    %856 = arith.mulf %855, %785 : vector<8x128xf32>
    %cst_300 = arith.constant 0.333333343 : f32
    %857 = vector.broadcast %cst_300 : f32 to vector<8x128xf32>
    %858 = arith.subf %857, %612 : vector<8x128xf32>
    %cst_301 = arith.constant 5.000000e-01 : f32
    %859 = vector.broadcast %cst_301 : f32 to vector<8x128xf32>
    %860 = arith.mulf %858, %859 : vector<8x128xf32>
    %861 = arith.mulf %860, %796 : vector<8x128xf32>
    %862 = arith.addf %856, %861 : vector<8x128xf32>
    %cst_302 = arith.constant -1.66666663 : f32
    %863 = vector.broadcast %cst_302 : f32 to vector<8x128xf32>
    %864 = arith.subf %612, %863 : vector<8x128xf32>
    %cst_303 = arith.constant 5.000000e-01 : f32
    %865 = vector.broadcast %cst_303 : f32 to vector<8x128xf32>
    %866 = arith.mulf %864, %865 : vector<8x128xf32>
    %867 = arith.mulf %866, %796 : vector<8x128xf32>
    %cst_304 = arith.constant 1.000000e+00 : f32
    %868 = vector.broadcast %cst_304 : f32 to vector<8x128xf32>
    %869 = arith.subf %868, %612 : vector<8x128xf32>
    %cst_305 = arith.constant 5.000000e-01 : f32
    %870 = vector.broadcast %cst_305 : f32 to vector<8x128xf32>
    %871 = arith.mulf %869, %870 : vector<8x128xf32>
    %872 = arith.mulf %871, %807 : vector<8x128xf32>
    %873 = arith.addf %867, %872 : vector<8x128xf32>
    %cst_306 = arith.constant -1.000000e+00 : f32
    %874 = vector.broadcast %cst_306 : f32 to vector<8x128xf32>
    %875 = arith.subf %612, %874 : vector<8x128xf32>
    %cst_307 = arith.constant 5.000000e-01 : f32
    %876 = vector.broadcast %cst_307 : f32 to vector<8x128xf32>
    %877 = arith.mulf %875, %876 : vector<8x128xf32>
    %878 = arith.mulf %877, %807 : vector<8x128xf32>
    %cst_308 = arith.constant 1.66666663 : f32
    %879 = vector.broadcast %cst_308 : f32 to vector<8x128xf32>
    %880 = arith.subf %879, %612 : vector<8x128xf32>
    %cst_309 = arith.constant 5.000000e-01 : f32
    %881 = vector.broadcast %cst_309 : f32 to vector<8x128xf32>
    %882 = arith.mulf %880, %881 : vector<8x128xf32>
    %883 = arith.mulf %882, %818 : vector<8x128xf32>
    %884 = arith.addf %878, %883 : vector<8x128xf32>
    %cst_310 = arith.constant -0.333333343 : f32
    %885 = vector.broadcast %cst_310 : f32 to vector<8x128xf32>
    %886 = arith.subf %612, %885 : vector<8x128xf32>
    %cst_311 = arith.constant 5.000000e-01 : f32
    %887 = vector.broadcast %cst_311 : f32 to vector<8x128xf32>
    %888 = arith.mulf %886, %887 : vector<8x128xf32>
    %889 = arith.mulf %888, %818 : vector<8x128xf32>
    %cst_312 = arith.constant 2.33333325 : f32
    %890 = vector.broadcast %cst_312 : f32 to vector<8x128xf32>
    %891 = arith.subf %890, %612 : vector<8x128xf32>
    %cst_313 = arith.constant 5.000000e-01 : f32
    %892 = vector.broadcast %cst_313 : f32 to vector<8x128xf32>
    %893 = arith.mulf %891, %892 : vector<8x128xf32>
    %894 = arith.mulf %893, %829 : vector<8x128xf32>
    %895 = arith.addf %889, %894 : vector<8x128xf32>
    %cst_314 = arith.constant 0.333333343 : f32
    %896 = vector.broadcast %cst_314 : f32 to vector<8x128xf32>
    %897 = arith.subf %612, %896 : vector<8x128xf32>
    %cst_315 = arith.constant 5.000000e-01 : f32
    %898 = vector.broadcast %cst_315 : f32 to vector<8x128xf32>
    %899 = arith.mulf %897, %898 : vector<8x128xf32>
    %900 = arith.mulf %899, %829 : vector<8x128xf32>
    %cst_316 = arith.constant 3.000000e+00 : f32
    %901 = vector.broadcast %cst_316 : f32 to vector<8x128xf32>
    %902 = arith.subf %901, %612 : vector<8x128xf32>
    %cst_317 = arith.constant 5.000000e-01 : f32
    %903 = vector.broadcast %cst_317 : f32 to vector<8x128xf32>
    %904 = arith.mulf %902, %903 : vector<8x128xf32>
    %905 = arith.mulf %904, %840 : vector<8x128xf32>
    %906 = arith.addf %900, %905 : vector<8x128xf32>
    %907 = arith.negf %612 : vector<8x128xf32>
    %908 = math.exp %907 : vector<8x128xf32>
    %cst_318 = arith.constant 1.000000e+00 : f32
    %909 = vector.broadcast %cst_318 : f32 to vector<8x128xf32>
    %910 = arith.addf %909, %908 : vector<8x128xf32>
    %911 = arith.divf %909, %910 : vector<8x128xf32>
    %912 = arith.mulf %612, %911 : vector<8x128xf32>
    %913 = tpu.concatenate %851, %862, %873, %884, %895, %906, %912 in 1 : vector<8x128xf32>, vector<8x128xf32>, vector<8x128xf32>, vector<8x128xf32>, vector<8x128xf32>, vector<8x128xf32>, vector<8x128xf32> -> vector<8x896xf32>
    %c0_319 = arith.constant 0 : index
    %c0_320 = arith.constant 0 : index
    %914 = vector.load %arg6[%c0_319, %c0_320] : memref<896x128xf32, #tpu.memory_space<vmem>>, vector<896x128xf32>
    %cst_321 = arith.constant dense<0.000000e+00> : vector<8x128xf32>
    %915 = tpu.matmul %913, %914, %cst_321 {dimension_numbers = #tpu.dot_dimension_numbers<[1], [0], [0], [1], [0, 0, 1, 1], [], []>} : vector<8x896xf32>, vector<896x128xf32>, vector<8x128xf32> -> vector<8x128xf32>
    %c0_322 = arith.constant 0 : index
    %c0_323 = arith.constant 0 : index
    %916 = vector.load %arg7[%c0_322, %c0_323] : memref<1x128xf32, #tpu.memory_space<vmem>>, vector<1x128xf32>
    %917 = vector.broadcast %916 : vector<1x128xf32> to vector<8x128xf32>
    %918 = arith.addf %915, %917 : vector<8x128xf32>
    %c0_324 = arith.constant 0 : index
    %c0_325 = arith.constant 0 : index
    %919 = vector.load %arg8[%c0_324, %c0_325] : memref<8x128xf32, #tpu.memory_space<vmem>>, vector<8x128xf32>
    tpu.vector_store %arg8[%c0_324, %c0_325], %918 {strides = array<i32>} : memref<8x128xf32, #tpu.memory_space<vmem>>, vector<8x128xf32>,
    return
  }
  func.func @transform_0(%arg0: i32) -> (i32, i32) {
    %c0_i32 = arith.constant 0 : i32
    %c0_i32_0 = arith.constant 0 : i32
    return %arg0, %c0_i32 : i32, i32
  }
  func.func @transform_1(%arg0: i32) -> (i32, i32) {
    %c0_i32 = arith.constant 0 : i32
    %c0_i32_0 = arith.constant 0 : i32
    %c0_i32_1 = arith.constant 0 : i32
    return %c0_i32, %c0_i32_0 : i32, i32
  }
  func.func @transform_2(%arg0: i32) -> (i32, i32) {
    %c0_i32 = arith.constant 0 : i32
    %c0_i32_0 = arith.constant 0 : i32
    %c0_i32_1 = arith.constant 0 : i32
    return %c0_i32, %c0_i32_0 : i32, i32
  }
  func.func @transform_3(%arg0: i32) -> (i32, i32) {
    %c0_i32 = arith.constant 0 : i32
    %c0_i32_0 = arith.constant 0 : i32
    %c0_i32_1 = arith.constant 0 : i32
    return %c0_i32, %c0_i32_0 : i32, i32
  }
  func.func @transform_4(%arg0: i32) -> (i32, i32) {
    %c0_i32 = arith.constant 0 : i32
    %c0_i32_0 = arith.constant 0 : i32
    %c0_i32_1 = arith.constant 0 : i32
    return %c0_i32, %c0_i32_0 : i32, i32
  }
  func.func @transform_5(%arg0: i32) -> (i32, i32) {
    %c0_i32 = arith.constant 0 : i32
    %c0_i32_0 = arith.constant 0 : i32
    %c0_i32_1 = arith.constant 0 : i32
    return %c0_i32, %c0_i32_0 : i32, i32
  }
  func.func @transform_6(%arg0: i32) -> (i32, i32) {
    %c0_i32 = arith.constant 0 : i32
    %c0_i32_0 = arith.constant 0 : i32
    %c0_i32_1 = arith.constant 0 : i32
    return %c0_i32, %c0_i32_0 : i32, i32
  }
  func.func @transform_7(%arg0: i32) -> (i32, i32) {
    %c0_i32 = arith.constant 0 : i32
    %c0_i32_0 = arith.constant 0 : i32
    return %arg0, %c0_i32 : i32, i32
  }
}

</mosaic_0001>

<llo_original>
// kernel: decoder_forward.1
$region0: #{decoder_forward.1}
  #allocation0 [shape = 'u32[]', space=smem, size = 0x4, offset = 0x4, fixed_abs, tag = 'smem constant byte address 0x4 - core index']
  #allocation1 [shape = 'u32[144,128]{1,0:T(1,128)}', space=vmem, size = 0x12000, scoped, tag = 'internal scratch']
  %s0 = inlined_call_operand.vmem [shape: f32[8,128], index: 0, kind: input, shape index: {}]
  %s1 = inlined_call_operand.hbm [shape: f32[896,128], index: 1, kind: input, shape index: {}]
  %s2 = inlined_call_operand.vmem [shape: f32[1,128], index: 2, kind: input, shape index: {}]
  %s3 = inlined_call_operand.hbm [shape: f32[896,128], index: 3, kind: input, shape index: {}]
  %s4 = inlined_call_operand.vmem [shape: f32[1,128], index: 4, kind: input, shape index: {}]
  %s5 = inlined_call_operand.hbm [shape: f32[896,128], index: 5, kind: input, shape index: {}]
  %s6 = inlined_call_operand.vmem [shape: f32[1,128], index: 6, kind: input, shape index: {}]
  %s7 = inlined_call_operand.hbm [shape: f32[8,128], index: 7, kind: output, shape index: {}]
  %s8 = sld [smem:[#allocation0]]
  $region50: #{decoder_forward.1} parent=0
    _
  %s10 = ssub.s32 1, %s8
  %s11 = scalar_select 0, %s10, %s8
  $region1: #{decoder_forward.1} parent=0
    #allocation2 [shape = 'u8[458752]{0}', space=vmem, size = 0x70000, scoped, tag = 'input window, operand 1, single buffered']
    #allocation3 [shape = 's32[1]{0}', space=sflag, size = 0x4, scoped, tag = 'scoped memory for decoder_forward.1']
    #allocation4 [shape = 's32[1]{0}', space=sflag, size = 0x4, scoped, tag = 'scoped memory for decoder_forward.1']
    #allocation5 [shape = 'u8[458752]{0}', space=vmem, size = 0x70000, scoped, tag = 'input window, operand 3, single buffered']
    #allocation6 [shape = 's32[1]{0}', space=sflag, size = 0x4, scoped, tag = 'scoped memory for decoder_forward.1']
    #allocation7 [shape = 'u8[458752]{0}', space=vmem, size = 0x70000, scoped, tag = 'input window, operand 5, single buffered']
    #allocation8 [shape = 'u8[4096]{0}', space=vmem, size = 0x1000, scoped, tag = 'output window, operand 0, single buffered']
    %12 = vsyncpa [#allocation3], 0
    %13 = vsyncpa [#allocation6], 0
    %14 = vsyncpa [#allocation4], 0
    // Predicated region
    $region2: #{decoder_forward.1} parent=1 // pred_check
      _
    $region3: #{decoder_forward.1} parent=1 // pred_check_branch
      %16 = sbr.rel (0) target = $region5
    $region4: #{decoder_forward.1} parent=1 // pred_region
      _
    $region5: #{decoder_forward.1} parent=1 // pred_fallthru
      _
    // Predicated region
    $region6: #{decoder_forward.1} parent=1 // pred_check
      _
    $region7: #{decoder_forward.1} parent=1 // pred_check_branch
      %18 = sbr.rel (0) target = $region9
    $region8: #{decoder_forward.1} parent=1 // pred_region
      %s20 = ssub.s32 14336, 14336
      %21 = vsyncadd [#allocation3], %s20
      %s22 = sshll.u32 [#allocation2], 4
      %s23 = int_to_ptr.vmem [resolvable:$true] %s22
      %28 = dma.hbm_to_vmem [thread:$0]  %s1, 14336, %s23, [#allocation3], 128, 128, 8
    $region9: #{decoder_forward.1} parent=1 // pred_fallthru
      _
    // Predicated region
    $region10: #{decoder_forward.1} parent=1 // pred_check
      _
    $region11: #{decoder_forward.1} parent=1 // pred_check_branch
      %30 = sbr.rel (0) target = $region13
    $region12: #{decoder_forward.1} parent=1 // pred_region
      _
    $region13: #{decoder_forward.1} parent=1 // pred_fallthru
      _
    // Predicated region
    $region14: #{decoder_forward.1} parent=1 // pred_check
      _
    $region15: #{decoder_forward.1} parent=1 // pred_check_branch
      %32 = sbr.rel (0) target = $region17
    $region16: #{decoder_forward.1} parent=1 // pred_region
      %s34 = ssub.s32 14336, 14336
      %35 = vsyncadd [#allocation6], %s34
      %s36 = sshll.u32 [#allocation5], 4
      %s37 = int_to_ptr.vmem [resolvable:$true] %s36
      %42 = dma.hbm_to_vmem [thread:$0]  %s3, 14336, %s37, [#allocation6], 128, 128, 8
    $region17: #{decoder_forward.1} parent=1 // pred_fallthru
      _
    // Predicated region
    $region18: #{decoder_forward.1} parent=1 // pred_check
      _
    $region19: #{decoder_forward.1} parent=1 // pred_check_branch
      %44 = sbr.rel (0) target = $region21
    $region20: #{decoder_forward.1} parent=1 // pred_region
      _
    $region21: #{decoder_forward.1} parent=1 // pred_fallthru
      _
    // Predicated region
    $region22: #{decoder_forward.1} parent=1 // pred_check
      _
    $region23: #{decoder_forward.1} parent=1 // pred_check_branch
      %46 = sbr.rel (0) target = $region25
    $region24: #{decoder_forward.1} parent=1 // pred_region
      %s48 = ssub.s32 14336, 14336
      %49 = vsyncadd [#allocation6], %s48
      %s50 = sshll.u32 [#allocation7], 4
      %s51 = int_to_ptr.vmem [resolvable:$true] %s50
      %56 = dma.hbm_to_vmem [thread:$0]  %s5, 14336, %s51, [#allocation6], 128, 128, 8
    $region25: #{decoder_forward.1} parent=1 // pred_fallthru
      _
    // Predicated region
    $region26: #{decoder_forward.1} parent=1 // pred_check
      _
    $region27: #{decoder_forward.1} parent=1 // pred_check_branch
      %58 = sbr.rel (0) target = $region29
    $region28: #{decoder_forward.1} parent=1 // pred_region
      _
    $region29: #{decoder_forward.1} parent=1 // pred_fallthru
      _
    // Predicated region
    $region30: #{decoder_forward.1} parent=1 // pred_check
      _
    $region31: #{decoder_forward.1} parent=1 // pred_check_branch
      %60 = sbr.rel (0) target = $region33
    $region32: #{decoder_forward.1} parent=1 // pred_region
      %61 = dma.done [#allocation3], 14336
    $region33: #{decoder_forward.1} parent=1 // pred_fallthru
      _
    // Predicated region
    $region34: #{decoder_forward.1} parent=1 // pred_check
      _
    $region35: #{decoder_forward.1} parent=1 // pred_check_branch
      %63 = sbr.rel (0) target = $region37
    $region36: #{decoder_forward.1} parent=1 // pred_region
      %64 = dma.done [#allocation6], 14336
    $region37: #{decoder_forward.1} parent=1 // pred_fallthru
      _
    // Predicated region
    $region38: #{decoder_forward.1} parent=1 // pred_check
      _
    $region39: #{decoder_forward.1} parent=1 // pred_check_branch
      %66 = sbr.rel (0) target = $region41
    $region40: #{decoder_forward.1} parent=1 // pred_region
      %67 = dma.done [#allocation6], 14336
    $region41: #{decoder_forward.1} parent=1 // pred_fallthru
      _
    %v68 = vld [vmem:[%s0] sm:$0xff]
    %vm69 = vcmp.ge.f32.partialorder %v68, -3.0
    %vm70 = vcmp.lt.f32.partialorder %v68, -2.3333333
    %vm71 = vmand %vm69, %vm70
    %v72 = vsel %vm71, 1, 0
    %v73 = vcvt.s32.f32 %v72
    %vm74 = vcmp.ge.f32.partialorder %v68, -2.3333333
    %vm75 = vcmp.lt.f32.partialorder %v68, -1.6666666
    %vm76 = vmand %vm74, %vm75
    %v77 = vsel %vm76, 1, 0
    %v78 = vcvt.s32.f32 %v77
    %vm79 = vcmp.ge.f32.partialorder %v68, -1.6666666
    %vm80 = vcmp.lt.f32.partialorder %v68, -1.0
    %vm81 = vmand %vm79, %vm80
    %v82 = vsel %vm81, 1, 0
    %v83 = vcvt.s32.f32 %v82
    %vm84 = vcmp.ge.f32.partialorder %v68, -1.0
    %vm85 = vcmp.lt.f32.partialorder %v68, -0.33333334
    %vm86 = vmand %vm84, %vm85
    %v87 = vsel %vm86, 1, 0
    %v88 = vcvt.s32.f32 %v87
    %vm89 = vcmp.ge.f32.partialorder %v68, -0.33333334
    %vm90 = vcmp.lt.f32.partialorder %v68, 0.33333334
    %vm91 = vmand %vm89, %vm90
    %v92 = vsel %vm91, 1, 0
    %v93 = vcvt.s32.f32 %v92
    %vm94 = vcmp.ge.f32.partialorder %v68, 0.33333334
    %vm95 = vcmp.lt.f32.partialorder %v68, 1.0
    %vm96 = vmand %vm94, %vm95
    %v97 = vsel %vm96, 1, 0
    %v98 = vcvt.s32.f32 %v97
    %vm99 = vcmp.ge.f32.partialorder %v68, 1.0
    %vm100 = vcmp.lt.f32.partialorder %v68, 1.6666666
    %vm101 = vmand %vm99, %vm100
    %v102 = vsel %vm101, 1, 0
    %v103 = vcvt.s32.f32 %v102
    %vm104 = vcmp.ge.f32.partialorder %v68, 1.6666666
    %vm105 = vcmp.lt.f32.partialorder %v68, 2.3333333
    %vm106 = vmand %vm104, %vm105
    %v107 = vsel %vm106, 1, 0
    %v108 = vcvt.s32.f32 %v107
    %vm109 = vcmp.ge.f32.partialorder %v68, 2.3333333
    %vm110 = vcmp.lt.f32.partialorder %v68, 3.0
    %vm111 = vmand %vm109, %vm110
    %v112 = vsel %vm111, 1, 0
    %v113 = vcvt.s32.f32 %v112
    %v114 = vsub.f32 %v68, -3.0
    %v115 = vmul.f32 %v114, 1.5
    %v116 = vmul.f32 %v115, %v73
    %v117 = vsub.f32 -1.6666666, %v68
    %v118 = vmul.f32 %v117, 1.5
    %v119 = vmul.f32 %v118, %v78
    %v120 = vadd.f32 %v116, %v119
    %v121 = vsub.f32 %v68, -2.3333333
    %v122 = vmul.f32 %v121, 1.5
    %v123 = vmul.f32 %v122, %v78
    %v124 = vsub.f32 -1.0, %v68
    %v125 = vmul.f32 %v124, 1.5
    %v126 = vmul.f32 %v125, %v83
    %v127 = vadd.f32 %v123, %v126
    %v128 = vsub.f32 %v68, -1.6666666
    %v129 = vmul.f32 %v128, 1.5
    %v130 = vmul.f32 %v129, %v83
    %v131 = vsub.f32 -0.33333334, %v68
    %v132 = vmul.f32 %v131, 1.5
    %v133 = vmul.f32 %v132, %v88
    %v134 = vadd.f32 %v130, %v133
    %v135 = vsub.f32 %v68, -1.0
    %v136 = vmul.f32 %v135, 1.5
    %v137 = vmul.f32 %v136, %v88
    %v138 = vsub.f32 0.33333334, %v68
    %v139 = vmul.f32 %v138, 1.5
    %v140 = vmul.f32 %v139, %v93
    %v141 = vadd.f32 %v137, %v140
    %v142 = vsub.f32 %v68, -0.33333334
    %v143 = vmul.f32 %v142, 1.5
    %v144 = vmul.f32 %v143, %v93
    %v145 = vsub.f32 1.0, %v68
    %v146 = vmul.f32 %v145, 1.5
    %v147 = vmul.f32 %v146, %v98
    %v148 = vadd.f32 %v144, %v147
    %v149 = vsub.f32 %v68, 0.33333334
    %v150 = vmul.f32 %v149, 1.5
    %v151 = vmul.f32 %v150, %v98
    %v152 = vsub.f32 1.6666666, %v68
    %v153 = vmul.f32 %v152, 1.5
    %v154 = vmul.f32 %v153, %v103
    %v155 = vadd.f32 %v151, %v154
    %v156 = vsub.f32 %v68, 1.0
    %v157 = vmul.f32 %v156, 1.5
    %v158 = vmul.f32 %v157, %v103
    %v159 = vsub.f32 2.3333333, %v68
    %v160 = vmul.f32 %v159, 1.5
    %v161 = vmul.f32 %v160, %v108
    %v162 = vadd.f32 %v158, %v161
    %v163 = vsub.f32 %v68, 1.6666666
    %v164 = vmul.f32 %v163, 1.5
    %v165 = vmul.f32 %v164, %v108
    %v166 = vsub.f32 3.0, %v68
    %v167 = vmul.f32 %v166, 1.5
    %v168 = vmul.f32 %v167, %v113
    %v169 = vadd.f32 %v165, %v168
    %v170 = vmul.f32 %v114, 0.75
    %v171 = vmul.f32 %v170, %v120
    %v172 = vmul.f32 %v124, 0.75
    %v173 = vmul.f32 %v172, %v127
    %v174 = vadd.f32 %v171, %v173
    %v175 = vmul.f32 %v121, 0.75
    %v176 = vmul.f32 %v175, %v127
    %v177 = vmul.f32 %v131, 0.75
    %v178 = vmul.f32 %v177, %v134
    %v179 = vadd.f32 %v176, %v178
    %v180 = vmul.f32 %v128, 0.75
    %v181 = vmul.f32 %v180, %v134
    %v182 = vmul.f32 %v138, 0.75
    %v183 = vmul.f32 %v182, %v141
    %v184 = vadd.f32 %v181, %v183
    %v185 = vmul.f32 %v135, 0.75
    %v186 = vmul.f32 %v185, %v141
    %v187 = vmul.f32 %v145, 0.75
    %v188 = vmul.f32 %v187, %v148
    %v189 = vadd.f32 %v186, %v188
    %v190 = vmul.f32 %v142, 0.75
    %v191 = vmul.f32 %v190, %v148
    %v192 = vmul.f32 %v152, 0.75
    %v193 = vmul.f32 %v192, %v155
    %v194 = vadd.f32 %v191, %v193
    %v195 = vmul.f32 %v149, 0.75
    %v196 = vmul.f32 %v195, %v155
    %v197 = vmul.f32 %v159, 0.75
    %v198 = vmul.f32 %v197, %v162
    %v199 = vadd.f32 %v196, %v198
    %v200 = vmul.f32 %v156, 0.75
    %v201 = vmul.f32 %v200, %v162
    %v202 = vmul.f32 %v166, 0.75
    %v203 = vmul.f32 %v202, %v169
    %v204 = vadd.f32 %v201, %v203
    %v205 = vmul.f32 %v114, 0.5
    %v206 = vmul.f32 %v205, %v174
    %v207 = vmul.f32 %v131, 0.5
    %v208 = vmul.f32 %v207, %v179
    %v209 = vadd.f32 %v206, %v208
    %v210 = vmul.f32 %v121, 0.5
    %v211 = vmul.f32 %v210, %v179
    %v212 = vmul.f32 %v138, 0.5
    %v213 = vmul.f32 %v212, %v184
    %v214 = vadd.f32 %v211, %v213
    %v215 = vmul.f32 %v128, 0.5
    %v216 = vmul.f32 %v215, %v184
    %v217 = vmul.f32 %v145, 0.5
    %v218 = vmul.f32 %v217, %v189
    %v219 = vadd.f32 %v216, %v218
    %v220 = vmul.f32 %v135, 0.5
    %v221 = vmul.f32 %v220, %v189
    %v222 = vmul.f32 %v152, 0.5
    %v223 = vmul.f32 %v222, %v194
    %v224 = vadd.f32 %v221, %v223
    %v225 = vmul.f32 %v142, 0.5
    %v226 = vmul.f32 %v225, %v194
    %v227 = vmul.f32 %v159, 0.5
    %v228 = vmul.f32 %v227, %v199
    %v229 = vadd.f32 %v226, %v228
    %v230 = vmul.f32 %v149, 0.5
    %v231 = vmul.f32 %v230, %v199
    %v232 = vmul.f32 %v166, 0.5
    %v233 = vmul.f32 %v232, %v204
    %v234 = vadd.f32 %v231, %v233
    %v235 = vxor.u32 %v68, 2147483648
    %v236 = vmul.f32 %v235, 1.442695
    %v237 = vpow.pop %v236
    %v238 = vadd.f32 %v237, 1.0
    %v239 = vrcp.pop %v238
    %v240 = vmul.f32 1.0, %v239
    %v241 = vmul.f32 %v68, %v240
    %v242 = vld [vmem:[#allocation2] sm:$0xff]
    %v243 = vld [vmem:[#allocation2 + $0x8] sm:$0xff]
    %v244 = vld [vmem:[#allocation2 + $0x10] sm:$0xff]
    %v245 = vld [vmem:[#allocation2 + $0x18] sm:$0xff]
    %v246 = vld [vmem:[#allocation2 + $0x20] sm:$0xff]
    %v247 = vld [vmem:[#allocation2 + $0x28] sm:$0xff]
    %v248 = vld [vmem:[#allocation2 + $0x30] sm:$0xff]
    %v249 = vld [vmem:[#allocation2 + $0x38] sm:$0xff]
    %v250 = vld [vmem:[#allocation2 + $0x40] sm:$0xff]
    %v251 = vld [vmem:[#allocation2 + $0x48] sm:$0xff]
    %v252 = vld [vmem:[#allocation2 + $0x50] sm:$0xff]
    %v253 = vld [vmem:[#allocation2 + $0x58] sm:$0xff]
    %v254 = vld [vmem:[#allocation2 + $0x60] sm:$0xff]
    %v255 = vld [vmem:[#allocation2 + $0x68] sm:$0xff]
    %v256 = vld [vmem:[#allocation2 + $0x70] sm:$0xff]
    %v257 = vld [vmem:[#allocation2 + $0x78] sm:$0xff]
    %v258 = vld [vmem:[#allocation2 + $0x80] sm:$0xff]
    %v259 = vld [vmem:[#allocation2 + $0x88] sm:$0xff]
    %v260 = vld [vmem:[#allocation2 + $0x90] sm:$0xff]
    %v261 = vld [vmem:[#allocation2 + $0x98] sm:$0xff]
    %v262 = vld [vmem:[#allocation2 + $0xa0] sm:$0xff]
    %v263 = vld [vmem:[#allocation2 + $0xa8] sm:$0xff]
    %v264 = vld [vmem:[#allocation2 + $0xb0] sm:$0xff]
    %v265 = vld [vmem:[#allocation2 + $0xb8] sm:$0xff]
    %v266 = vld [vmem:[#allocation2 + $0xc0] sm:$0xff]
    %v267 = vld [vmem:[#allocation2 + $0xc8] sm:$0xff]
    %v268 = vld [vmem:[#allocation2 + $0xd0] sm:$0xff]
    %v269 = vld [vmem:[#allocation2 + $0xd8] sm:$0xff]
    %v270 = vld [vmem:[#allocation2 + $0xe0] sm:$0xff]
    %v271 = vld [vmem:[#allocation2 + $0xe8] sm:$0xff]
    %v272 = vld [vmem:[#allocation2 + $0xf0] sm:$0xff]
    %v273 = vld [vmem:[#allocation2 + $0xf8] sm:$0xff]
    %v274 = vld [vmem:[#allocation2 + $0x100] sm:$0xff]
    %v275 = vld [vmem:[#allocation2 + $0x108] sm:$0xff]
    %v276 = vld [vmem:[#allocation2 + $0x110] sm:$0xff]
    %v277 = vld [vmem:[#allocation2 + $0x118] sm:$0xff]
    %v278 = vld [vmem:[#allocation2 + $0x120] sm:$0xff]
    %v279 = vld [vmem:[#allocation2 + $0x128] sm:$0xff]
    %v280 = vld [vmem:[#allocation2 + $0x130] sm:$0xff]
    %v281 = vld [vmem:[#allocation2 + $0x138] sm:$0xff]
    %v282 = vld [vmem:[#allocation2 + $0x140] sm:$0xff]
    %v283 = vld [vmem:[#allocation2 + $0x148] sm:$0xff]
    %v284 = vld [vmem:[#allocation2 + $0x150] sm:$0xff]
    %v285 = vld [vmem:[#allocation2 + $0x158] sm:$0xff]
    %v286 = vld [vmem:[#allocation2 + $0x160] sm:$0xff]
    %v287 = vld [vmem:[#allocation2 + $0x168] sm:$0xff]
    %v288 = vld [vmem:[#allocation2 + $0x170] sm:$0xff]
    %v289 = vld [vmem:[#allocation2 + $0x178] sm:$0xff]
    %v290 = vld [vmem:[#allocation2 + $0x180] sm:$0xff]
    %v291 = vld [vmem:[#allocation2 + $0x188] sm:$0xff]
    %v292 = vld [vmem:[#allocation2 + $0x190] sm:$0xff]
    %v293 = vld [vmem:[#allocation2 + $0x198] sm:$0xff]
    %v294 = vld [vmem:[#allocation2 + $0x1a0] sm:$0xff]
    %v295 = vld [vmem:[#allocation2 + $0x1a8] sm:$0xff]
    %v296 = vld [vmem:[#allocation2 + $0x1b0] sm:$0xff]
    %v297 = vld [vmem:[#allocation2 + $0x1b8] sm:$0xff]
    %v298 = vld [vmem:[#allocation2 + $0x1c0] sm:$0xff]
    %v299 = vld [vmem:[#allocation2 + $0x1c8] sm:$0xff]
    %v300 = vld [vmem:[#allocation2 + $0x1d0] sm:$0xff]
    %v301 = vld [vmem:[#allocation2 + $0x1d8] sm:$0xff]
    %v302 = vld [vmem:[#allocation2 + $0x1e0] sm:$0xff]
    %v303 = vld [vmem:[#allocation2 + $0x1e8] sm:$0xff]
    %v304 = vld [vmem:[#allocation2 + $0x1f0] sm:$0xff]
    %v305 = vld [vmem:[#allocation2 + $0x1f8] sm:$0xff]
    %v306 = vld [vmem:[#allocation2 + $0x200] sm:$0xff]
    %v307 = vld [vmem:[#allocation2 + $0x208] sm:$0xff]
    %v308 = vld [vmem:[#allocation2 + $0x210] sm:$0xff]
    %v309 = vld [vmem:[#allocation2 + $0x218] sm:$0xff]
    %v310 = vld [vmem:[#allocation2 + $0x220] sm:$0xff]
    %v311 = vld [vmem:[#allocation2 + $0x228] sm:$0xff]
    %v312 = vld [vmem:[#allocation2 + $0x230] sm:$0xff]
    %v313 = vld [vmem:[#allocation2 + $0x238] sm:$0xff]
    %v314 = vld [vmem:[#allocation2 + $0x240] sm:$0xff]
    %v315 = vld [vmem:[#allocation2 + $0x248] sm:$0xff]
    %v316 = vld [vmem:[#allocation2 + $0x250] sm:$0xff]
    %v317 = vld [vmem:[#allocation2 + $0x258] sm:$0xff]
    %v318 = vld [vmem:[#allocation2 + $0x260] sm:$0xff]
    %v319 = vld [vmem:[#allocation2 + $0x268] sm:$0xff]
    %v320 = vld [vmem:[#allocation2 + $0x270] sm:$0xff]
    %v321 = vld [vmem:[#allocation2 + $0x278] sm:$0xff]
    %v322 = vld [vmem:[#allocation2 + $0x280] sm:$0xff]
    %v323 = vld [vmem:[#allocation2 + $0x288] sm:$0xff]
    %v324 = vld [vmem:[#allocation2 + $0x290] sm:$0xff]
    %v325 = vld [vmem:[#allocation2 + $0x298] sm:$0xff]
    %v326 = vld [vmem:[#allocation2 + $0x2a0] sm:$0xff]
    %v327 = vld [vmem:[#allocation2 + $0x2a8] sm:$0xff]
    %v328 = vld [vmem:[#allocation2 + $0x2b0] sm:$0xff]
    %v329 = vld [vmem:[#allocation2 + $0x2b8] sm:$0xff]
    %v330 = vld [vmem:[#allocation2 + $0x2c0] sm:$0xff]
    %v331 = vld [vmem:[#allocation2 + $0x2c8] sm:$0xff]
    %v332 = vld [vmem:[#allocation2 + $0x2d0] sm:$0xff]
    %v333 = vld [vmem:[#allocation2 + $0x2d8] sm:$0xff]
    %v334 = vld [vmem:[#allocation2 + $0x2e0] sm:$0xff]
    %v335 = vld [vmem:[#allocation2 + $0x2e8] sm:$0xff]
    %v336 = vld [vmem:[#allocation2 + $0x2f0] sm:$0xff]
    %v337 = vld [vmem:[#allocation2 + $0x2f8] sm:$0xff]
    %v338 = vld [vmem:[#allocation2 + $0x300] sm:$0xff]
    %v339 = vld [vmem:[#allocation2 + $0x308] sm:$0xff]
    %v340 = vld [vmem:[#allocation2 + $0x310] sm:$0xff]
    %v341 = vld [vmem:[#allocation2 + $0x318] sm:$0xff]
    %v342 = vld [vmem:[#allocation2 + $0x320] sm:$0xff]
    %v343 = vld [vmem:[#allocation2 + $0x328] sm:$0xff]
    %v344 = vld [vmem:[#allocation2 + $0x330] sm:$0xff]
    %v345 = vld [vmem:[#allocation2 + $0x338] sm:$0xff]
    %v346 = vld [vmem:[#allocation2 + $0x340] sm:$0xff]
    %v347 = vld [vmem:[#allocation2 + $0x348] sm:$0xff]
    %v348 = vld [vmem:[#allocation2 + $0x350] sm:$0xff]
    %v349 = vld [vmem:[#allocation2 + $0x358] sm:$0xff]
    %v350 = vld [vmem:[#allocation2 + $0x360] sm:$0xff]
    %v351 = vld [vmem:[#allocation2 + $0x368] sm:$0xff]
    %v352 = vld [vmem:[#allocation2 + $0x370] sm:$0xff]
    %v353 = vld [vmem:[#allocation2 + $0x378] sm:$0xff]
    %v354 = vld [vmem:[%s2] sm:$0x1]
    %v356 = vlaneseq
    %v357 = vshrl.u32 %v356, 7
    %v358 = vsub.s32 0, %v357
    %v359 = vrot.slane %v354, %v358
    %361 = vmatprep.subr.mxu0 0.0
    %362 = vmatpush1.msra.mxu0 %v242
    %363 = vmatprep.subr.mxu0 0.0
    %364 = vmatpush1.msra.mxu0 %v243
    %365 = vmatprep.subr.mxu0 0.0
    %366 = vmatpush1.msra.mxu0 %v244
    %367 = vmatprep.subr.mxu0 0.0
    %368 = vmatpush1.msra.mxu0 %v245
    %369 = vmatprep.subr.mxu0 0.0
    %370 = vmatpush1.msra.mxu0 %v246
    %371 = vmatprep.subr.mxu0 0.0
    %372 = vmatpush1.msra.mxu0 %v247
    %373 = vmatprep.subr.mxu0 0.0
    %374 = vmatpush1.msra.mxu0 %v248
    %375 = vmatprep.subr.mxu0 0.0
    %376 = vmatpush1.msra.mxu0 %v249
    %377 = vmatprep.subr.mxu0 0.0
    %378 = vmatpush1.msra.mxu0 %v250
    %379 = vmatprep.subr.mxu0 0.0
    %380 = vmatpush1.msra.mxu0 %v251
    %381 = vmatprep.subr.mxu0 0.0
    %382 = vmatpush1.msra.mxu0 %v252
    %383 = vmatprep.subr.mxu0 0.0
    %384 = vmatpush1.msra.mxu0 %v253
    %385 = vmatprep.subr.mxu0 0.0
    %386 = vmatpush1.msra.mxu0 %v254
    %387 = vmatprep.subr.mxu0 0.0
    %388 = vmatpush1.msra.mxu0 %v255
    %389 = vmatprep.subr.mxu0 0.0
    %390 = vmatpush1.msra.mxu0 %v256
    %391 = vmatprep.subr.mxu0 0.0
    %392 = vmatpush1.msra.mxu0 %v257
    %393 = vmatprep.subr.mxu0 0.0
    %394 = vmatpush1.msra.mxu0 %v258
    %395 = vmatprep.subr.mxu0 0.0
    %396 = vmatpush1.msra.mxu0 %v259
    %397 = vmatprep.subr.mxu0 0.0
    %398 = vmatpush1.msra.mxu0 %v260
    %399 = vmatprep.subr.mxu0 0.0
    %400 = vmatpush1.msra.mxu0 %v261
    %401 = vmatprep.subr.mxu0 0.0
    %402 = vmatpush1.msra.mxu0 %v262
    %403 = vmatprep.subr.mxu0 0.0
    %404 = vmatpush1.msra.mxu0 %v263
    %405 = vmatprep.subr.mxu0 0.0
    %406 = vmatpush1.msra.mxu0 %v264
    %407 = vmatprep.subr.mxu0 0.0
    %408 = vmatpush1.msra.mxu0 %v265
    %409 = vmatprep.subr.mxu0 0.0
    %410 = vmatpush1.msra.mxu0 %v266
    %411 = vmatprep.subr.mxu0 0.0
    %412 = vmatpush1.msra.mxu0 %v267
    %413 = vmatprep.subr.mxu0 0.0
    %414 = vmatpush1.msra.mxu0 %v268
    %415 = vmatprep.subr.mxu0 0.0
    %416 = vmatpush1.msra.mxu0 %v269
    %417 = vmatprep.subr.mxu0 0.0
    %418 = vmatpush1.msra.mxu0 %v270
    %419 = vmatprep.subr.mxu0 0.0
    %420 = vmatpush1.msra.mxu0 %v271
    %421 = vmatprep.subr.mxu0 0.0
    %422 = vmatpush1.msra.mxu0 %v272
    %423 = vmatprep.subr.mxu0 0.0
    %424 = vmatpush1.msra.mxu0 %v273
    %425 = vmatprep.mubr.f32.mxu0 %v214
    %426 = vmatmul.mubr.f32.gmra.mrb[0].mxu0 %v209
    %v427 = vpop.f32.mrb[0].mxu0
    %v428 = vadd.f32 %v359, %v427
    %v429 = vpop.f32.mrb[0].mxu0
    %430 = vdwg.mxu0
    %431 = vmatprep.subr.mxu0 0.0
    %432 = vmatpush1.msra.mxu0 %v274
    %433 = vmatprep.subr.mxu0 0.0
    %434 = vmatpush1.msra.mxu0 %v275
    %435 = vmatprep.subr.mxu0 0.0
    %436 = vmatpush1.msra.mxu0 %v276
    %437 = vmatprep.subr.mxu0 0.0
    %438 = vmatpush1.msra.mxu0 %v277
    %439 = vmatprep.subr.mxu0 0.0
    %440 = vmatpush1.msra.mxu0 %v278
    %441 = vmatprep.subr.mxu0 0.0
    %442 = vmatpush1.msra.mxu0 %v279
    %443 = vmatprep.subr.mxu0 0.0
    %444 = vmatpush1.msra.mxu0 %v280
    %445 = vmatprep.subr.mxu0 0.0
    %446 = vmatpush1.msra.mxu0 %v281
    %447 = vmatprep.subr.mxu0 0.0
    %448 = vmatpush1.msra.mxu0 %v282
    %449 = vmatprep.subr.mxu0 0.0
    %450 = vmatpush1.msra.mxu0 %v283
    %451 = vmatprep.subr.mxu0 0.0
    %452 = vmatpush1.msra.mxu0 %v284
    %453 = vmatprep.subr.mxu0 0.0
    %454 = vmatpush1.msra.mxu0 %v285
    %455 = vmatprep.subr.mxu0 0.0
    %456 = vmatpush1.msra.mxu0 %v286
    %457 = vmatprep.subr.mxu0 0.0
    %458 = vmatpush1.msra.mxu0 %v287
    %459 = vmatprep.subr.mxu0 0.0
    %460 = vmatpush1.msra.mxu0 %v288
    %461 = vmatprep.subr.mxu0 0.0
    %462 = vmatpush1.msra.mxu0 %v289
    %463 = vmatprep.subr.mxu0 0.0
    %464 = vmatpush1.msra.mxu0 %v290
    %465 = vmatprep.subr.mxu0 0.0
    %466 = vmatpush1.msra.mxu0 %v291
    %467 = vmatprep.subr.mxu0 0.0
    %468 = vmatpush1.msra.mxu0 %v292
    %469 = vmatprep.subr.mxu0 0.0
    %470 = vmatpush1.msra.mxu0 %v293
    %471 = vmatprep.subr.mxu0 0.0
    %472 = vmatpush1.msra.mxu0 %v294
    %473 = vmatprep.subr.mxu0 0.0
    %474 = vmatpush1.msra.mxu0 %v295
    %475 = vmatprep.subr.mxu0 0.0
    %476 = vmatpush1.msra.mxu0 %v296
    %477 = vmatprep.subr.mxu0 0.0
    %478 = vmatpush1.msra.mxu0 %v297
    %479 = vmatprep.subr.mxu0 0.0
    %480 = vmatpush1.msra.mxu0 %v298
    %481 = vmatprep.subr.mxu0 0.0
    %482 = vmatpush1.msra.mxu0 %v299
    %483 = vmatprep.subr.mxu0 0.0
    %484 = vmatpush1.msra.mxu0 %v300
    %485 = vmatprep.subr.mxu0 0.0
    %486 = vmatpush1.msra.mxu0 %v301
    %487 = vmatprep.subr.mxu0 0.0
    %488 = vmatpush1.msra.mxu0 %v302
    %489 = vmatprep.subr.mxu0 0.0
    %490 = vmatpush1.msra.mxu0 %v303
    %491 = vmatprep.subr.mxu0 0.0
    %492 = vmatpush1.msra.mxu0 %v304
    %493 = vmatprep.subr.mxu0 0.0
    %494 = vmatpush1.msra.mxu0 %v305
    %495 = vmatprep.mubr.f32.mxu0 %v224
    %496 = vmatmul.mubr.f32.gmra.mrb[0].mxu0 %v219
    %v497 = vpop.f32.mrb[0].mxu0
    %v498 = vadd.f32 %v428, %v497
    %v499 = vpop.f32.mrb[0].mxu0
    %500 = vdwg.mxu0
    %501 = vmatprep.subr.mxu0 0.0
    %502 = vmatpush1.msra.mxu0 %v306
    %503 = vmatprep.subr.mxu0 0.0
    %504 = vmatpush1.msra.mxu0 %v307
    %505 = vmatprep.subr.mxu0 0.0
    %506 = vmatpush1.msra.mxu0 %v308
    %507 = vmatprep.subr.mxu0 0.0
    %508 = vmatpush1.msra.mxu0 %v309
    %509 = vmatprep.subr.mxu0 0.0
    %510 = vmatpush1.msra.mxu0 %v310
    %511 = vmatprep.subr.mxu0 0.0
    %512 = vmatpush1.msra.mxu0 %v311
    %513 = vmatprep.subr.mxu0 0.0
    %514 = vmatpush1.msra.mxu0 %v312
    %515 = vmatprep.subr.mxu0 0.0
    %516 = vmatpush1.msra.mxu0 %v313
    %517 = vmatprep.subr.mxu0 0.0
    %518 = vmatpush1.msra.mxu0 %v314
    %519 = vmatprep.subr.mxu0 0.0
    %520 = vmatpush1.msra.mxu0 %v315
    %521 = vmatprep.subr.mxu0 0.0
    %522 = vmatpush1.msra.mxu0 %v316
    %523 = vmatprep.subr.mxu0 0.0
    %524 = vmatpush1.msra.mxu0 %v317
    %525 = vmatprep.subr.mxu0 0.0
    %526 = vmatpush1.msra.mxu0 %v318
    %527 = vmatprep.subr.mxu0 0.0
    %528 = vmatpush1.msra.mxu0 %v319
    %529 = vmatprep.subr.mxu0 0.0
    %530 = vmatpush1.msra.mxu0 %v320
    %531 = vmatprep.subr.mxu0 0.0
    %532 = vmatpush1.msra.mxu0 %v321
    %533 = vmatprep.subr.mxu0 0.0
    %534 = vmatpush1.msra.mxu0 %v322
    %535 = vmatprep.subr.mxu0 0.0
    %536 = vmatpush1.msra.mxu0 %v323
    %537 = vmatprep.subr.mxu0 0.0
    %538 = vmatpush1.msra.mxu0 %v324
    %539 = vmatprep.subr.mxu0 0.0
    %540 = vmatpush1.msra.mxu0 %v325
    %541 = vmatprep.subr.mxu0 0.0
    %542 = vmatpush1.msra.mxu0 %v326
    %543 = vmatprep.subr.mxu0 0.0
    %544 = vmatpush1.msra.mxu0 %v327
    %545 = vmatprep.subr.mxu0 0.0
    %546 = vmatpush1.msra.mxu0 %v328
    %547 = vmatprep.subr.mxu0 0.0
    %548 = vmatpush1.msra.mxu0 %v329
    %549 = vmatprep.subr.mxu0 0.0
    %550 = vmatpush1.msra.mxu0 %v330
    %551 = vmatprep.subr.mxu0 0.0
    %552 = vmatpush1.msra.mxu0 %v331
    %553 = vmatprep.subr.mxu0 0.0
    %554 = vmatpush1.msra.mxu0 %v332
    %555 = vmatprep.subr.mxu0 0.0
    %556 = vmatpush1.msra.mxu0 %v333
    %557 = vmatprep.subr.mxu0 0.0
    %558 = vmatpush1.msra.mxu0 %v334
    %559 = vmatprep.subr.mxu0 0.0
    %560 = vmatpush1.msra.mxu0 %v335
    %561 = vmatprep.subr.mxu0 0.0
    %562 = vmatpush1.msra.mxu0 %v336
    %563 = vmatprep.subr.mxu0 0.0
    %564 = vmatpush1.msra.mxu0 %v337
    %565 = vmatprep.mubr.f32.mxu0 %v234
    %566 = vmatmul.mubr.f32.gmra.mrb[0].mxu0 %v229
    %v567 = vpop.f32.mrb[0].mxu0
    %v568 = vadd.f32 %v498, %v567
    %v569 = vpop.f32.mrb[0].mxu0
    %570 = vdwg.mxu0
    %571 = vmatprep.subr.mxu0 0.0
    %572 = vmatpush1.msra.mxu0 %v338
    %573 = vmatprep.subr.mxu0 0.0
    %574 = vmatpush1.msra.mxu0 %v339
    %575 = vmatprep.subr.mxu0 0.0
    %576 = vmatpush1.msra.mxu0 %v340
    %577 = vmatprep.subr.mxu0 0.0
    %578 = vmatpush1.msra.mxu0 %v341
    %579 = vmatprep.subr.mxu0 0.0
    %580 = vmatpush1.msra.mxu0 %v342
    %581 = vmatprep.subr.mxu0 0.0
    %582 = vmatpush1.msra.mxu0 %v343
    %583 = vmatprep.subr.mxu0 0.0
    %584 = vmatpush1.msra.mxu0 %v344
    %585 = vmatprep.subr.mxu0 0.0
    %586 = vmatpush1.msra.mxu0 %v345
    %587 = vmatprep.subr.mxu0 0.0
    %588 = vmatpush1.msra.mxu0 %v346
    %589 = vmatprep.subr.mxu0 0.0
    %590 = vmatpush1.msra.mxu0 %v347
    %591 = vmatprep.subr.mxu0 0.0
    %592 = vmatpush1.msra.mxu0 %v348
    %593 = vmatprep.subr.mxu0 0.0
    %594 = vmatpush1.msra.mxu0 %v349
    %595 = vmatprep.subr.mxu0 0.0
    %596 = vmatpush1.msra.mxu0 %v350
    %597 = vmatprep.subr.mxu0 0.0
    %598 = vmatpush1.msra.mxu0 %v351
    %599 = vmatprep.subr.mxu0 0.0
    %600 = vmatpush1.msra.mxu0 %v352
    %601 = vmatprep.subr.mxu0 0.0
    %602 = vmatpush1.msra.mxu0 %v353
    %603 = vmatprep.subr.mxu0 0.0
    %604 = vmatpush1.msra.mxu0 0.0
    %605 = vmatprep.subr.mxu0 0.0
    %606 = vmatpush1.msra.mxu0 0.0
    %607 = vmatprep.subr.mxu0 0.0
    %608 = vmatpush1.msra.mxu0 0.0
    %609 = vmatprep.subr.mxu0 0.0
    %610 = vmatpush1.msra.mxu0 0.0
    %611 = vmatprep.subr.mxu0 0.0
    %612 = vmatpush1.msra.mxu0 0.0
    %613 = vmatprep.subr.mxu0 0.0
    %614 = vmatpush1.msra.mxu0 0.0
    %615 = vmatprep.subr.mxu0 0.0
    %616 = vmatpush1.msra.mxu0 0.0
    %617 = vmatprep.subr.mxu0 0.0
    %618 = vmatpush1.msra.mxu0 0.0
    %619 = vmatprep.subr.mxu0 0.0
    %620 = vmatpush1.msra.mxu0 0.0
    %621 = vmatprep.subr.mxu0 0.0
    %622 = vmatpush1.msra.mxu0 0.0
    %623 = vmatprep.subr.mxu0 0.0
    %624 = vmatpush1.msra.mxu0 0.0
    %625 = vmatprep.subr.mxu0 0.0
    %626 = vmatpush1.msra.mxu0 0.0
    %627 = vmatprep.subr.mxu0 0.0
    %628 = vmatpush1.msra.mxu0 0.0
    %629 = vmatprep.subr.mxu0 0.0
    %630 = vmatpush1.msra.mxu0 0.0
    %631 = vmatprep.subr.mxu0 0.0
    %632 = vmatpush1.msra.mxu0 0.0
    %633 = vmatprep.subr.mxu0 0.0
    %634 = vmatpush1.msra.mxu0 0.0
    %635 = vmatprep.mubr.f32.mxu0 0.0
    %636 = vmatmul.mubr.f32.gmra.mrb[0].mxu0 %v241
    %v637 = vpop.f32.mrb[0].mxu0
    %v638 = vadd.f32 %v568, %v637
    %v639 = vpop.f32.mrb[0].mxu0
    %640 = vdwg.mxu0
    %vm641 = vcmp.ge.f32.partialorder %v638, -3.0
    %vm642 = vcmp.lt.f32.partialorder %v638, -2.3333333
    %vm643 = vmand %vm641, %vm642
    %v644 = vsel %vm643, 1, 0
    %v645 = vcvt.s32.f32 %v644
    %vm646 = vcmp.ge.f32.partialorder %v638, -2.3333333
    %vm647 = vcmp.lt.f32.partialorder %v638, -1.6666666
    %vm648 = vmand %vm646, %vm647
    %v649 = vsel %vm648, 1, 0
    %v650 = vcvt.s32.f32 %v649
    %vm651 = vcmp.ge.f32.partialorder %v638, -1.6666666
    %vm652 = vcmp.lt.f32.partialorder %v638, -1.0
    %vm653 = vmand %vm651, %vm652
    %v654 = vsel %vm653, 1, 0
    %v655 = vcvt.s32.f32 %v654
    %vm656 = vcmp.ge.f32.partialorder %v638, -1.0
    %vm657 = vcmp.lt.f32.partialorder %v638, -0.33333334
    %vm658 = vmand %vm656, %vm657
    %v659 = vsel %vm658, 1, 0
    %v660 = vcvt.s32.f32 %v659
    %vm661 = vcmp.ge.f32.partialorder %v638, -0.33333334
    %vm662 = vcmp.lt.f32.partialorder %v638, 0.33333334
    %vm663 = vmand %vm661, %vm662
    %v664 = vsel %vm663, 1, 0
    %v665 = vcvt.s32.f32 %v664
    %vm666 = vcmp.ge.f32.partialorder %v638, 0.33333334
    %vm667 = vcmp.lt.f32.partialorder %v638, 1.0
    %vm668 = vmand %vm666, %vm667
    %v669 = vsel %vm668, 1, 0
    %v670 = vcvt.s32.f32 %v669
    %vm671 = vcmp.ge.f32.partialorder %v638, 1.0
    %vm672 = vcmp.lt.f32.partialorder %v638, 1.6666666
    %vm673 = vmand %vm671, %vm672
    %v674 = vsel %vm673, 1, 0
    %v675 = vcvt.s32.f32 %v674
    %vm676 = vcmp.ge.f32.partialorder %v638, 1.6666666
    %vm677 = vcmp.lt.f32.partialorder %v638, 2.3333333
    %vm678 = vmand %vm676, %vm677
    %v679 = vsel %vm678, 1, 0
    %v680 = vcvt.s32.f32 %v679
    %vm681 = vcmp.ge.f32.partialorder %v638, 2.3333333
    %vm682 = vcmp.lt.f32.partialorder %v638, 3.0
    %vm683 = vmand %vm681, %vm682
    %v684 = vsel %vm683, 1, 0
    %v685 = vcvt.s32.f32 %v684
    %v686 = vsub.f32 %v638, -3.0
    %v687 = vmul.f32 %v686, 1.5
    %v688 = vmul.f32 %v687, %v645
    %v689 = vsub.f32 -1.6666666, %v638
    %v690 = vmul.f32 %v689, 1.5
    %v691 = vmul.f32 %v690, %v650
    %v692 = vadd.f32 %v688, %v691
    %v693 = vsub.f32 %v638, -2.3333333
    %v694 = vmul.f32 %v693, 1.5
    %v695 = vmul.f32 %v694, %v650
    %v696 = vsub.f32 -1.0, %v638
    %v697 = vmul.f32 %v696, 1.5
    %v698 = vmul.f32 %v697, %v655
    %v699 = vadd.f32 %v695, %v698
    %v700 = vsub.f32 %v638, -1.6666666
    %v701 = vmul.f32 %v700, 1.5
    %v702 = vmul.f32 %v701, %v655
    %v703 = vsub.f32 -0.33333334, %v638
    %v704 = vmul.f32 %v703, 1.5
    %v705 = vmul.f32 %v704, %v660
    %v706 = vadd.f32 %v702, %v705
    %v707 = vsub.f32 %v638, -1.0
    %v708 = vmul.f32 %v707, 1.5
    %v709 = vmul.f32 %v708, %v660
    %v710 = vsub.f32 0.33333334, %v638
    %v711 = vmul.f32 %v710, 1.5
    %v712 = vmul.f32 %v711, %v665
    %v713 = vadd.f32 %v709, %v712
    %v714 = vsub.f32 %v638, -0.33333334
    %v715 = vmul.f32 %v714, 1.5
    %v716 = vmul.f32 %v715, %v665
    %v717 = vsub.f32 1.0, %v638
    %v718 = vmul.f32 %v717, 1.5
    %v719 = vmul.f32 %v718, %v670
    %v720 = vadd.f32 %v716, %v719
    %v721 = vsub.f32 %v638, 0.33333334
    %v722 = vmul.f32 %v721, 1.5
    %v723 = vmul.f32 %v722, %v670
    %v724 = vsub.f32 1.6666666, %v638
    %v725 = vmul.f32 %v724, 1.5
    %v726 = vmul.f32 %v725, %v675
    %v727 = vadd.f32 %v723, %v726
    %v728 = vsub.f32 %v638, 1.0
    %v729 = vmul.f32 %v728, 1.5
    %v730 = vmul.f32 %v729, %v675
    %v731 = vsub.f32 2.3333333, %v638
    %v732 = vmul.f32 %v731, 1.5
    %v733 = vmul.f32 %v732, %v680
    %v734 = vadd.f32 %v730, %v733
    %v735 = vsub.f32 %v638, 1.6666666
    %v736 = vmul.f32 %v735, 1.5
    %v737 = vmul.f32 %v736, %v680
    %v738 = vsub.f32 3.0, %v638
    %v739 = vmul.f32 %v738, 1.5
    %v740 = vmul.f32 %v739, %v685
    %v741 = vadd.f32 %v737, %v740
    %v742 = vmul.f32 %v686, 0.75
    %v743 = vmul.f32 %v742, %v692
    %v744 = vmul.f32 %v696, 0.75
    %v745 = vmul.f32 %v744, %v699
    %v746 = vadd.f32 %v743, %v745
    %v747 = vmul.f32 %v693, 0.75
    %v748 = vmul.f32 %v747, %v699
    %v749 = vmul.f32 %v703, 0.75
    %v750 = vmul.f32 %v749, %v706
    %v751 = vadd.f32 %v748, %v750
    %v752 = vmul.f32 %v700, 0.75
    %v753 = vmul.f32 %v752, %v706
    %v754 = vmul.f32 %v710, 0.75
    %v755 = vmul.f32 %v754, %v713
    %v756 = vadd.f32 %v753, %v755
    %v757 = vmul.f32 %v707, 0.75
    %v758 = vmul.f32 %v757, %v713
    %v759 = vmul.f32 %v717, 0.75
    %v760 = vmul.f32 %v759, %v720
    %v761 = vadd.f32 %v758, %v760
    %v762 = vmul.f32 %v714, 0.75
    %v763 = vmul.f32 %v762, %v720
    %v764 = vmul.f32 %v724, 0.75
    %v765 = vmul.f32 %v764, %v727
    %v766 = vadd.f32 %v763, %v765
    %v767 = vmul.f32 %v721, 0.75
    %v768 = vmul.f32 %v767, %v727
    %v769 = vmul.f32 %v731, 0.75
    %v770 = vmul.f32 %v769, %v734
    %v771 = vadd.f32 %v768, %v770
    %v772 = vmul.f32 %v728, 0.75
    %v773 = vmul.f32 %v772, %v734
    %v774 = vmul.f32 %v738, 0.75
    %v775 = vmul.f32 %v774, %v741
    %v776 = vadd.f32 %v773, %v775
    %v777 = vmul.f32 %v686, 0.5
    %v778 = vmul.f32 %v777, %v746
    %v779 = vmul.f32 %v703, 0.5
    %v780 = vmul.f32 %v779, %v751
    %v781 = vadd.f32 %v778, %v780
    %v782 = vmul.f32 %v693, 0.5
    %v783 = vmul.f32 %v782, %v751
    %v784 = vmul.f32 %v710, 0.5
    %v785 = vmul.f32 %v784, %v756
    %v786 = vadd.f32 %v783, %v785
    %v787 = vmul.f32 %v700, 0.5
    %v788 = vmul.f32 %v787, %v756
    %v789 = vmul.f32 %v717, 0.5
    %v790 = vmul.f32 %v789, %v761
    %v791 = vadd.f32 %v788, %v790
    %v792 = vmul.f32 %v707, 0.5
    %v793 = vmul.f32 %v792, %v761
    %v794 = vmul.f32 %v724, 0.5
    %v795 = vmul.f32 %v794, %v766
    %v796 = vadd.f32 %v793, %v795
    %v797 = vmul.f32 %v714, 0.5
    %v798 = vmul.f32 %v797, %v766
    %v799 = vmul.f32 %v731, 0.5
    %v800 = vmul.f32 %v799, %v771
    %v801 = vadd.f32 %v798, %v800
    %v802 = vmul.f32 %v721, 0.5
    %v803 = vmul.f32 %v802, %v771
    %v804 = vmul.f32 %v738, 0.5
    %v805 = vmul.f32 %v804, %v776
    %v806 = vadd.f32 %v803, %v805
    %v807 = vxor.u32 %v638, 2147483648
    %v808 = vmul.f32 %v807, 1.442695
    %v809 = vpow.pop %v808
    %v810 = vadd.f32 %v809, 1.0
    %v811 = vrcp.pop %v810
    %v812 = vmul.f32 1.0, %v811
    %v813 = vmul.f32 %v638, %v812
    %v814 = vld [vmem:[#allocation5] sm:$0xff]
    %v815 = vld [vmem:[#allocation5 + $0x8] sm:$0xff]
    %v816 = vld [vmem:[#allocation5 + $0x10] sm:$0xff]
    %v817 = vld [vmem:[#allocation5 + $0x18] sm:$0xff]
    %v818 = vld [vmem:[#allocation5 + $0x20] sm:$0xff]
    %v819 = vld [vmem:[#allocation5 + $0x28] sm:$0xff]
    %v820 = vld [vmem:[#allocation5 + $0x30] sm:$0xff]
    %v821 = vld [vmem:[#allocation5 + $0x38] sm:$0xff]
    %v822 = vld [vmem:[#allocation5 + $0x40] sm:$0xff]
    %v823 = vld [vmem:[#allocation5 + $0x48] sm:$0xff]
    %v824 = vld [vmem:[#allocation5 + $0x50] sm:$0xff]
    %v825 = vld [vmem:[#allocation5 + $0x58] sm:$0xff]
    %v826 = vld [vmem:[#allocation5 + $0x60] sm:$0xff]
    %v827 = vld [vmem:[#allocation5 + $0x68] sm:$0xff]
    %v828 = vld [vmem:[#allocation5 + $0x70] sm:$0xff]
    %v829 = vld [vmem:[#allocation5 + $0x78] sm:$0xff]
    %v830 = vld [vmem:[#allocation5 + $0x80] sm:$0xff]
    %v831 = vld [vmem:[#allocation5 + $0x88] sm:$0xff]
    %v832 = vld [vmem:[#allocation5 + $0x90] sm:$0xff]
    %v833 = vld [vmem:[#allocation5 + $0x98] sm:$0xff]
    %v834 = vld [vmem:[#allocation5 + $0xa0] sm:$0xff]
    %v835 = vld [vmem:[#allocation5 + $0xa8] sm:$0xff]
    %v836 = vld [vmem:[#allocation5 + $0xb0] sm:$0xff]
    %v837 = vld [vmem:[#allocation5 + $0xb8] sm:$0xff]
    %v838 = vld [vmem:[#allocation5 + $0xc0] sm:$0xff]
    %v839 = vld [vmem:[#allocation5 + $0xc8] sm:$0xff]
    %v840 = vld [vmem:[#allocation5 + $0xd0] sm:$0xff]
    %v841 = vld [vmem:[#allocation5 + $0xd8] sm:$0xff]
    %v842 = vld [vmem:[#allocation5 + $0xe0] sm:$0xff]
    %v843 = vld [vmem:[#allocation5 + $0xe8] sm:$0xff]
    %v844 = vld [vmem:[#allocation5 + $0xf0] sm:$0xff]
    %v845 = vld [vmem:[#allocation5 + $0xf8] sm:$0xff]
    %v846 = vld [vmem:[#allocation5 + $0x100] sm:$0xff]
    %v847 = vld [vmem:[#allocation5 + $0x108] sm:$0xff]
    %v848 = vld [vmem:[#allocation5 + $0x110] sm:$0xff]
    %v849 = vld [vmem:[#allocation5 + $0x118] sm:$0xff]
    %v850 = vld [vmem:[#allocation5 + $0x120] sm:$0xff]
    %v851 = vld [vmem:[#allocation5 + $0x128] sm:$0xff]
    %v852 = vld [vmem:[#allocation5 + $0x130] sm:$0xff]
    %v853 = vld [vmem:[#allocation5 + $0x138] sm:$0xff]
    %v854 = vld [vmem:[#allocation5 + $0x140] sm:$0xff]
    %v855 = vld [vmem:[#allocation5 + $0x148] sm:$0xff]
    %v856 = vld [vmem:[#allocation5 + $0x150] sm:$0xff]
    %v857 = vld [vmem:[#allocation5 + $0x158] sm:$0xff]
    %v858 = vld [vmem:[#allocation5 + $0x160] sm:$0xff]
    %v859 = vld [vmem:[#allocation5 + $0x168] sm:$0xff]
    %v860 = vld [vmem:[#allocation5 + $0x170] sm:$0xff]
    %v861 = vld [vmem:[#allocation5 + $0x178] sm:$0xff]
    %v862 = vld [vmem:[#allocation5 + $0x180] sm:$0xff]
    %v863 = vld [vmem:[#allocation5 + $0x188] sm:$0xff]
    %v864 = vld [vmem:[#allocation5 + $0x190] sm:$0xff]
    %v865 = vld [vmem:[#allocation5 + $0x198] sm:$0xff]
    %v866 = vld [vmem:[#allocation5 + $0x1a0] sm:$0xff]
    %v867 = vld [vmem:[#allocation5 + $0x1a8] sm:$0xff]
    %v868 = vld [vmem:[#allocation5 + $0x1b0] sm:$0xff]
    %v869 = vld [vmem:[#allocation5 + $0x1b8] sm:$0xff]
    %v870 = vld [vmem:[#allocation5 + $0x1c0] sm:$0xff]
    %v871 = vld [vmem:[#allocation5 + $0x1c8] sm:$0xff]
    %v872 = vld [vmem:[#allocation5 + $0x1d0] sm:$0xff]
    %v873 = vld [vmem:[#allocation5 + $0x1d8] sm:$0xff]
    %v874 = vld [vmem:[#allocation5 + $0x1e0] sm:$0xff]
    %v875 = vld [vmem:[#allocation5 + $0x1e8] sm:$0xff]
    %v876 = vld [vmem:[#allocation5 + $0x1f0] sm:$0xff]
    %v877 = vld [vmem:[#allocation5 + $0x1f8] sm:$0xff]
    %v878 = vld [vmem:[#allocation5 + $0x200] sm:$0xff]
    %v879 = vld [vmem:[#allocation5 + $0x208] sm:$0xff]
    %v880 = vld [vmem:[#allocation5 + $0x210] sm:$0xff]
    %v881 = vld [vmem:[#allocation5 + $0x218] sm:$0xff]
    %v882 = vld [vmem:[#allocation5 + $0x220] sm:$0xff]
    %v883 = vld [vmem:[#allocation5 + $0x228] sm:$0xff]
    %v884 = vld [vmem:[#allocation5 + $0x230] sm:$0xff]
    %v885 = vld [vmem:[#allocation5 + $0x238] sm:$0xff]
    %v886 = vld [vmem:[#allocation5 + $0x240] sm:$0xff]
    %v887 = vld [vmem:[#allocation5 + $0x248] sm:$0xff]
    %v888 = vld [vmem:[#allocation5 + $0x250] sm:$0xff]
    %v889 = vld [vmem:[#allocation5 + $0x258] sm:$0xff]
    %v890 = vld [vmem:[#allocation5 + $0x260] sm:$0xff]
    %v891 = vld [vmem:[#allocation5 + $0x268] sm:$0xff]
    %v892 = vld [vmem:[#allocation5 + $0x270] sm:$0xff]
    %v893 = vld [vmem:[#allocation5 + $0x278] sm:$0xff]
    %v894 = vld [vmem:[#allocation5 + $0x280] sm:$0xff]
    %v895 = vld [vmem:[#allocation5 + $0x288] sm:$0xff]
    %v896 = vld [vmem:[#allocation5 + $0x290] sm:$0xff]
    %v897 = vld [vmem:[#allocation5 + $0x298] sm:$0xff]
    %v898 = vld [vmem:[#allocation5 + $0x2a0] sm:$0xff]
    %v899 = vld [vmem:[#allocation5 + $0x2a8] sm:$0xff]
    %v900 = vld [vmem:[#allocation5 + $0x2b0] sm:$0xff]
    %v901 = vld [vmem:[#allocation5 + $0x2b8] sm:$0xff]
    %v902 = vld [vmem:[#allocation5 + $0x2c0] sm:$0xff]
    %v903 = vld [vmem:[#allocation5 + $0x2c8] sm:$0xff]
    %v904 = vld [vmem:[#allocation5 + $0x2d0] sm:$0xff]
    %v905 = vld [vmem:[#allocation5 + $0x2d8] sm:$0xff]
    %v906 = vld [vmem:[#allocation5 + $0x2e0] sm:$0xff]
    %v907 = vld [vmem:[#allocation5 + $0x2e8] sm:$0xff]
    %v908 = vld [vmem:[#allocation5 + $0x2f0] sm:$0xff]
    %v909 = vld [vmem:[#allocation5 + $0x2f8] sm:$0xff]
    %v910 = vld [vmem:[#allocation5 + $0x300] sm:$0xff]
    %v911 = vld [vmem:[#allocation5 + $0x308] sm:$0xff]
    %v912 = vld [vmem:[#allocation5 + $0x310] sm:$0xff]
    %v913 = vld [vmem:[#allocation5 + $0x318] sm:$0xff]
    %v914 = vld [vmem:[#allocation5 + $0x320] sm:$0xff]
    %v915 = vld [vmem:[#allocation5 + $0x328] sm:$0xff]
    %v916 = vld [vmem:[#allocation5 + $0x330] sm:$0xff]
    %v917 = vld [vmem:[#allocation5 + $0x338] sm:$0xff]
    %v918 = vld [vmem:[#allocation5 + $0x340] sm:$0xff]
    %v919 = vld [vmem:[#allocation5 + $0x348] sm:$0xff]
    %v920 = vld [vmem:[#allocation5 + $0x350] sm:$0xff]
    %v921 = vld [vmem:[#allocation5 + $0x358] sm:$0xff]
    %v922 = vld [vmem:[#allocation5 + $0x360] sm:$0xff]
    %v923 = vld [vmem:[#allocation5 + $0x368] sm:$0xff]
    %v924 = vld [vmem:[#allocation5 + $0x370] sm:$0xff]
    %v925 = vld [vmem:[#allocation5 + $0x378] sm:$0xff]
    %v926 = vld [vmem:[%s4] sm:$0x1]
    %v928 = vlaneseq
    %v929 = vshrl.u32 %v928, 7
    %v930 = vsub.s32 0, %v929
    %v931 = vrot.slane %v926, %v930
    %933 = vmatprep.subr.mxu0 0.0
    %934 = vmatpush1.msra.mxu0 %v814
    %935 = vmatprep.subr.mxu0 0.0
    %936 = vmatpush1.msra.mxu0 %v815
    %937 = vmatprep.subr.mxu0 0.0
    %938 = vmatpush1.msra.mxu0 %v816
    %939 = vmatprep.subr.mxu0 0.0
    %940 = vmatpush1.msra.mxu0 %v817
    %941 = vmatprep.subr.mxu0 0.0
    %942 = vmatpush1.msra.mxu0 %v818
    %943 = vmatprep.subr.mxu0 0.0
    %944 = vmatpush1.msra.mxu0 %v819
    %945 = vmatprep.subr.mxu0 0.0
    %946 = vmatpush1.msra.mxu0 %v820
    %947 = vmatprep.subr.mxu0 0.0
    %948 = vmatpush1.msra.mxu0 %v821
    %949 = vmatprep.subr.mxu0 0.0
    %950 = vmatpush1.msra.mxu0 %v822
    %951 = vmatprep.subr.mxu0 0.0
    %952 = vmatpush1.msra.mxu0 %v823
    %953 = vmatprep.subr.mxu0 0.0
    %954 = vmatpush1.msra.mxu0 %v824
    %955 = vmatprep.subr.mxu0 0.0
    %956 = vmatpush1.msra.mxu0 %v825
    %957 = vmatprep.subr.mxu0 0.0
    %958 = vmatpush1.msra.mxu0 %v826
    %959 = vmatprep.subr.mxu0 0.0
    %960 = vmatpush1.msra.mxu0 %v827
    %961 = vmatprep.subr.mxu0 0.0
    %962 = vmatpush1.msra.mxu0 %v828
    %963 = vmatprep.subr.mxu0 0.0
    %964 = vmatpush1.msra.mxu0 %v829
    %965 = vmatprep.subr.mxu0 0.0
    %966 = vmatpush1.msra.mxu0 %v830
    %967 = vmatprep.subr.mxu0 0.0
    %968 = vmatpush1.msra.mxu0 %v831
    %969 = vmatprep.subr.mxu0 0.0
    %970 = vmatpush1.msra.mxu0 %v832
    %971 = vmatprep.subr.mxu0 0.0
    %972 = vmatpush1.msra.mxu0 %v833
    %973 = vmatprep.subr.mxu0 0.0
    %974 = vmatpush1.msra.mxu0 %v834
    %975 = vmatprep.subr.mxu0 0.0
    %976 = vmatpush1.msra.mxu0 %v835
    %977 = vmatprep.subr.mxu0 0.0
    %978 = vmatpush1.msra.mxu0 %v836
    %979 = vmatprep.subr.mxu0 0.0
    %980 = vmatpush1.msra.mxu0 %v837
    %981 = vmatprep.subr.mxu0 0.0
    %982 = vmatpush1.msra.mxu0 %v838
    %983 = vmatprep.subr.mxu0 0.0
    %984 = vmatpush1.msra.mxu0 %v839
    %985 = vmatprep.subr.mxu0 0.0
    %986 = vmatpush1.msra.mxu0 %v840
    %987 = vmatprep.subr.mxu0 0.0
    %988 = vmatpush1.msra.mxu0 %v841
    %989 = vmatprep.subr.mxu0 0.0
    %990 = vmatpush1.msra.mxu0 %v842
    %991 = vmatprep.subr.mxu0 0.0
    %992 = vmatpush1.msra.mxu0 %v843
    %993 = vmatprep.subr.mxu0 0.0
    %994 = vmatpush1.msra.mxu0 %v844
    %995 = vmatprep.subr.mxu0 0.0
    %996 = vmatpush1.msra.mxu0 %v845
    %997 = vmatprep.mubr.f32.mxu0 %v786
    %998 = vmatmul.mubr.f32.gmra.mrb[0].mxu0 %v781
    %v999 = vpop.f32.mrb[0].mxu0
    %v1000 = vadd.f32 %v931, %v999
    %v1001 = vpop.f32.mrb[0].mxu0
    %1002 = vdwg.mxu0
    %1003 = vmatprep.subr.mxu0 0.0
    %1004 = vmatpush1.msra.mxu0 %v846
    %1005 = vmatprep.subr.mxu0 0.0
    %1006 = vmatpush1.msra.mxu0 %v847
    %1007 = vmatprep.subr.mxu0 0.0
    %1008 = vmatpush1.msra.mxu0 %v848
    %1009 = vmatprep.subr.mxu0 0.0
    %1010 = vmatpush1.msra.mxu0 %v849
    %1011 = vmatprep.subr.mxu0 0.0
    %1012 = vmatpush1.msra.mxu0 %v850
    %1013 = vmatprep.subr.mxu0 0.0
    %1014 = vmatpush1.msra.mxu0 %v851
    %1015 = vmatprep.subr.mxu0 0.0
    %1016 = vmatpush1.msra.mxu0 %v852
    %1017 = vmatprep.subr.mxu0 0.0
    %1018 = vmatpush1.msra.mxu0 %v853
    %1019 = vmatprep.subr.mxu0 0.0
    %1020 = vmatpush1.msra.mxu0 %v854
    %1021 = vmatprep.subr.mxu0 0.0
    %1022 = vmatpush1.msra.mxu0 %v855
    %1023 = vmatprep.subr.mxu0 0.0
    %1024 = vmatpush1.msra.mxu0 %v856
    %1025 = vmatprep.subr.mxu0 0.0
    %1026 = vmatpush1.msra.mxu0 %v857
    %1027 = vmatprep.subr.mxu0 0.0
    %1028 = vmatpush1.msra.mxu0 %v858
    %1029 = vmatprep.subr.mxu0 0.0
    %1030 = vmatpush1.msra.mxu0 %v859
    %1031 = vmatprep.subr.mxu0 0.0
    %1032 = vmatpush1.msra.mxu0 %v860
    %1033 = vmatprep.subr.mxu0 0.0
    %1034 = vmatpush1.msra.mxu0 %v861
    %1035 = vmatprep.subr.mxu0 0.0
    %1036 = vmatpush1.msra.mxu0 %v862
    %1037 = vmatprep.subr.mxu0 0.0
    %1038 = vmatpush1.msra.mxu0 %v863
    %1039 = vmatprep.subr.mxu0 0.0
    %1040 = vmatpush1.msra.mxu0 %v864
    %1041 = vmatprep.subr.mxu0 0.0
    %1042 = vmatpush1.msra.mxu0 %v865
    %1043 = vmatprep.subr.mxu0 0.0
    %1044 = vmatpush1.msra.mxu0 %v866
    %1045 = vmatprep.subr.mxu0 0.0
    %1046 = vmatpush1.msra.mxu0 %v867
    %1047 = vmatprep.subr.mxu0 0.0
    %1048 = vmatpush1.msra.mxu0 %v868
    %1049 = vmatprep.subr.mxu0 0.0
    %1050 = vmatpush1.msra.mxu0 %v869
    %1051 = vmatprep.subr.mxu0 0.0
    %1052 = vmatpush1.msra.mxu0 %v870
    %1053 = vmatprep.subr.mxu0 0.0
    %1054 = vmatpush1.msra.mxu0 %v871
    %1055 = vmatprep.subr.mxu0 0.0
    %1056 = vmatpush1.msra.mxu0 %v872
    %1057 = vmatprep.subr.mxu0 0.0
    %1058 = vmatpush1.msra.mxu0 %v873
    %1059 = vmatprep.subr.mxu0 0.0
    %1060 = vmatpush1.msra.mxu0 %v874
    %1061 = vmatprep.subr.mxu0 0.0
    %1062 = vmatpush1.msra.mxu0 %v875
    %1063 = vmatprep.subr.mxu0 0.0
    %1064 = vmatpush1.msra.mxu0 %v876
    %1065 = vmatprep.subr.mxu0 0.0
    %1066 = vmatpush1.msra.mxu0 %v877
    %1067 = vmatprep.mubr.f32.mxu0 %v796
    %1068 = vmatmul.mubr.f32.gmra.mrb[0].mxu0 %v791
    %v1069 = vpop.f32.mrb[0].mxu0
    %v1070 = vadd.f32 %v1000, %v1069
    %v1071 = vpop.f32.mrb[0].mxu0
    %1072 = vdwg.mxu0
    %1073 = vmatprep.subr.mxu0 0.0
    %1074 = vmatpush1.msra.mxu0 %v878
    %1075 = vmatprep.subr.mxu0 0.0
    %1076 = vmatpush1.msra.mxu0 %v879
    %1077 = vmatprep.subr.mxu0 0.0
    %1078 = vmatpush1.msra.mxu0 %v880
    %1079 = vmatprep.subr.mxu0 0.0
    %1080 = vmatpush1.msra.mxu0 %v881
    %1081 = vmatprep.subr.mxu0 0.0
    %1082 = vmatpush1.msra.mxu0 %v882
    %1083 = vmatprep.subr.mxu0 0.0
    %1084 = vmatpush1.msra.mxu0 %v883
    %1085 = vmatprep.subr.mxu0 0.0
    %1086 = vmatpush1.msra.mxu0 %v884
    %1087 = vmatprep.subr.mxu0 0.0
    %1088 = vmatpush1.msra.mxu0 %v885
    %1089 = vmatprep.subr.mxu0 0.0
    %1090 = vmatpush1.msra.mxu0 %v886
    %1091 = vmatprep.subr.mxu0 0.0
    %1092 = vmatpush1.msra.mxu0 %v887
    %1093 = vmatprep.subr.mxu0 0.0
    %1094 = vmatpush1.msra.mxu0 %v888
    %1095 = vmatprep.subr.mxu0 0.0
    %1096 = vmatpush1.msra.mxu0 %v889
    %1097 = vmatprep.subr.mxu0 0.0
    %1098 = vmatpush1.msra.mxu0 %v890
    %1099 = vmatprep.subr.mxu0 0.0
    %1100 = vmatpush1.msra.mxu0 %v891
    %1101 = vmatprep.subr.mxu0 0.0
    %1102 = vmatpush1.msra.mxu0 %v892
    %1103 = vmatprep.subr.mxu0 0.0
    %1104 = vmatpush1.msra.mxu0 %v893
    %1105 = vmatprep.subr.mxu0 0.0
    %1106 = vmatpush1.msra.mxu0 %v894
    %1107 = vmatprep.subr.mxu0 0.0
    %1108 = vmatpush1.msra.mxu0 %v895
    %1109 = vmatprep.subr.mxu0 0.0
    %1110 = vmatpush1.msra.mxu0 %v896
    %1111 = vmatprep.subr.mxu0 0.0
    %1112 = vmatpush1.msra.mxu0 %v897
    %1113 = vmatprep.subr.mxu0 0.0
    %1114 = vmatpush1.msra.mxu0 %v898
    %1115 = vmatprep.subr.mxu0 0.0
    %1116 = vmatpush1.msra.mxu0 %v899
    %1117 = vmatprep.subr.mxu0 0.0
    %1118 = vmatpush1.msra.mxu0 %v900
    %1119 = vmatprep.subr.mxu0 0.0
    %1120 = vmatpush1.msra.mxu0 %v901
    %1121 = vmatprep.subr.mxu0 0.0
    %1122 = vmatpush1.msra.mxu0 %v902
    %1123 = vmatprep.subr.mxu0 0.0
    %1124 = vmatpush1.msra.mxu0 %v903
    %1125 = vmatprep.subr.mxu0 0.0
    %1126 = vmatpush1.msra.mxu0 %v904
    %1127 = vmatprep.subr.mxu0 0.0
    %1128 = vmatpush1.msra.mxu0 %v905
    %1129 = vmatprep.subr.mxu0 0.0
    %1130 = vmatpush1.msra.mxu0 %v906
    %1131 = vmatprep.subr.mxu0 0.0
    %1132 = vmatpush1.msra.mxu0 %v907
    %1133 = vmatprep.subr.mxu0 0.0
    %1134 = vmatpush1.msra.mxu0 %v908
    %1135 = vmatprep.subr.mxu0 0.0
    %1136 = vmatpush1.msra.mxu0 %v909
    %1137 = vmatprep.mubr.f32.mxu0 %v806
    %1138 = vmatmul.mubr.f32.gmra.mrb[0].mxu0 %v801
    %v1139 = vpop.f32.mrb[0].mxu0
    %v1140 = vadd.f32 %v1070, %v1139
    %v1141 = vpop.f32.mrb[0].mxu0
    %1142 = vdwg.mxu0
    %1143 = vmatprep.subr.mxu0 0.0
    %1144 = vmatpush1.msra.mxu0 %v910
    %1145 = vmatprep.subr.mxu0 0.0
    %1146 = vmatpush1.msra.mxu0 %v911
    %1147 = vmatprep.subr.mxu0 0.0
    %1148 = vmatpush1.msra.mxu0 %v912
    %1149 = vmatprep.subr.mxu0 0.0
    %1150 = vmatpush1.msra.mxu0 %v913
    %1151 = vmatprep.subr.mxu0 0.0
    %1152 = vmatpush1.msra.mxu0 %v914
    %1153 = vmatprep.subr.mxu0 0.0
    %1154 = vmatpush1.msra.mxu0 %v915
    %1155 = vmatprep.subr.mxu0 0.0
    %1156 = vmatpush1.msra.mxu0 %v916
    %1157 = vmatprep.subr.mxu0 0.0
    %1158 = vmatpush1.msra.mxu0 %v917
    %1159 = vmatprep.subr.mxu0 0.0
    %1160 = vmatpush1.msra.mxu0 %v918
    %1161 = vmatprep.subr.mxu0 0.0
    %1162 = vmatpush1.msra.mxu0 %v919
    %1163 = vmatprep.subr.mxu0 0.0
    %1164 = vmatpush1.msra.mxu0 %v920
    %1165 = vmatprep.subr.mxu0 0.0
    %1166 = vmatpush1.msra.mxu0 %v921
    %1167 = vmatprep.subr.mxu0 0.0
    %1168 = vmatpush1.msra.mxu0 %v922
    %1169 = vmatprep.subr.mxu0 0.0
    %1170 = vmatpush1.msra.mxu0 %v923
    %1171 = vmatprep.subr.mxu0 0.0
    %1172 = vmatpush1.msra.mxu0 %v924
    %1173 = vmatprep.subr.mxu0 0.0
    %1174 = vmatpush1.msra.mxu0 %v925
    %1175 = vmatprep.subr.mxu0 0.0
    %1176 = vmatpush1.msra.mxu0 0.0
    %1177 = vmatprep.subr.mxu0 0.0
    %1178 = vmatpush1.msra.mxu0 0.0
    %1179 = vmatprep.subr.mxu0 0.0
    %1180 = vmatpush1.msra.mxu0 0.0
    %1181 = vmatprep.subr.mxu0 0.0
    %1182 = vmatpush1.msra.mxu0 0.0
    %1183 = vmatprep.subr.mxu0 0.0
    %1184 = vmatpush1.msra.mxu0 0.0
    %1185 = vmatprep.subr.mxu0 0.0
    %1186 = vmatpush1.msra.mxu0 0.0
    %1187 = vmatprep.subr.mxu0 0.0
    %1188 = vmatpush1.msra.mxu0 0.0
    %1189 = vmatprep.subr.mxu0 0.0
    %1190 = vmatpush1.msra.mxu0 0.0
    %1191 = vmatprep.subr.mxu0 0.0
    %1192 = vmatpush1.msra.mxu0 0.0
    %1193 = vmatprep.subr.mxu0 0.0
    %1194 = vmatpush1.msra.mxu0 0.0
    %1195 = vmatprep.subr.mxu0 0.0
    %1196 = vmatpush1.msra.mxu0 0.0
    %1197 = vmatprep.subr.mxu0 0.0
    %1198 = vmatpush1.msra.mxu0 0.0
    %1199 = vmatprep.subr.mxu0 0.0
    %1200 = vmatpush1.msra.mxu0 0.0
    %1201 = vmatprep.subr.mxu0 0.0
    %1202 = vmatpush1.msra.mxu0 0.0
    %1203 = vmatprep.subr.mxu0 0.0
    %1204 = vmatpush1.msra.mxu0 0.0
    %1205 = vmatprep.subr.mxu0 0.0
    %1206 = vmatpush1.msra.mxu0 0.0
    %1207 = vmatprep.mubr.f32.mxu0 0.0
    %1208 = vmatmul.mubr.f32.gmra.mrb[0].mxu0 %v813
    %v1209 = vpop.f32.mrb[0].mxu0
    %v1210 = vadd.f32 %v1140, %v1209
    %v1211 = vpop.f32.mrb[0].mxu0
    %1212 = vdwg.mxu0
    %vm1213 = vcmp.ge.f32.partialorder %v1210, -3.0
    %vm1214 = vcmp.lt.f32.partialorder %v1210, -2.3333333
    %vm1215 = vmand %vm1213, %vm1214
    %v1216 = vsel %vm1215, 1, 0
    %v1217 = vcvt.s32.f32 %v1216
    %vm1218 = vcmp.ge.f32.partialorder %v1210, -2.3333333
    %vm1219 = vcmp.lt.f32.partialorder %v1210, -1.6666666
    %vm1220 = vmand %vm1218, %vm1219
    %v1221 = vsel %vm1220, 1, 0
    %v1222 = vcvt.s32.f32 %v1221
    %vm1223 = vcmp.ge.f32.partialorder %v1210, -1.6666666
    %vm1224 = vcmp.lt.f32.partialorder %v1210, -1.0
    %vm1225 = vmand %vm1223, %vm1224
    %v1226 = vsel %vm1225, 1, 0
    %v1227 = vcvt.s32.f32 %v1226
    %vm1228 = vcmp.ge.f32.partialorder %v1210, -1.0
    %vm1229 = vcmp.lt.f32.partialorder %v1210, -0.33333334
    %vm1230 = vmand %vm1228, %vm1229
    %v1231 = vsel %vm1230, 1, 0
    %v1232 = vcvt.s32.f32 %v1231
    %vm1233 = vcmp.ge.f32.partialorder %v1210, -0.33333334
    %vm1234 = vcmp.lt.f32.partialorder %v1210, 0.33333334
    %vm1235 = vmand %vm1233, %vm1234
    %v1236 = vsel %vm1235, 1, 0
    %v1237 = vcvt.s32.f32 %v1236
    %vm1238 = vcmp.ge.f32.partialorder %v1210, 0.33333334
    %vm1239 = vcmp.lt.f32.partialorder %v1210, 1.0
    %vm1240 = vmand %vm1238, %vm1239
    %v1241 = vsel %vm1240, 1, 0
    %v1242 = vcvt.s32.f32 %v1241
    %vm1243 = vcmp.ge.f32.partialorder %v1210, 1.0
    %vm1244 = vcmp.lt.f32.partialorder %v1210, 1.6666666
    %vm1245 = vmand %vm1243, %vm1244
    %v1246 = vsel %vm1245, 1, 0
    %v1247 = vcvt.s32.f32 %v1246
    %vm1248 = vcmp.ge.f32.partialorder %v1210, 1.6666666
    %vm1249 = vcmp.lt.f32.partialorder %v1210, 2.3333333
    %vm1250 = vmand %vm1248, %vm1249
    %v1251 = vsel %vm1250, 1, 0
    %v1252 = vcvt.s32.f32 %v1251
    %vm1253 = vcmp.ge.f32.partialorder %v1210, 2.3333333
    %vm1254 = vcmp.lt.f32.partialorder %v1210, 3.0
    %vm1255 = vmand %vm1253, %vm1254
    %v1256 = vsel %vm1255, 1, 0
    %v1257 = vcvt.s32.f32 %v1256
    %v1258 = vsub.f32 %v1210, -3.0
    %v1259 = vmul.f32 %v1258, 1.5
    %v1260 = vmul.f32 %v1259, %v1217
    %v1261 = vsub.f32 -1.6666666, %v1210
    %v1262 = vmul.f32 %v1261, 1.5
    %v1263 = vmul.f32 %v1262, %v1222
    %v1264 = vadd.f32 %v1260, %v1263
    %v1265 = vsub.f32 %v1210, -2.3333333
    %v1266 = vmul.f32 %v1265, 1.5
    %v1267 = vmul.f32 %v1266, %v1222
    %v1268 = vsub.f32 -1.0, %v1210
    %v1269 = vmul.f32 %v1268, 1.5
    %v1270 = vmul.f32 %v1269, %v1227
    %v1271 = vadd.f32 %v1267, %v1270
    %v1272 = vsub.f32 %v1210, -1.6666666
    %v1273 = vmul.f32 %v1272, 1.5
    %v1274 = vmul.f32 %v1273, %v1227
    %v1275 = vsub.f32 -0.33333334, %v1210
    %v1276 = vmul.f32 %v1275, 1.5
    %v1277 = vmul.f32 %v1276, %v1232
    %v1278 = vadd.f32 %v1274, %v1277
    %v1279 = vsub.f32 %v1210, -1.0
    %v1280 = vmul.f32 %v1279, 1.5
    %v1281 = vmul.f32 %v1280, %v1232
    %v1282 = vsub.f32 0.33333334, %v1210
    %v1283 = vmul.f32 %v1282, 1.5
    %v1284 = vmul.f32 %v1283, %v1237
    %v1285 = vadd.f32 %v1281, %v1284
    %v1286 = vsub.f32 %v1210, -0.33333334
    %v1287 = vmul.f32 %v1286, 1.5
    %v1288 = vmul.f32 %v1287, %v1237
    %v1289 = vsub.f32 1.0, %v1210
    %v1290 = vmul.f32 %v1289, 1.5
    %v1291 = vmul.f32 %v1290, %v1242
    %v1292 = vadd.f32 %v1288, %v1291
    %v1293 = vsub.f32 %v1210, 0.33333334
    %v1294 = vmul.f32 %v1293, 1.5
    %v1295 = vmul.f32 %v1294, %v1242
    %v1296 = vsub.f32 1.6666666, %v1210
    %v1297 = vmul.f32 %v1296, 1.5
    %v1298 = vmul.f32 %v1297, %v1247
    %v1299 = vadd.f32 %v1295, %v1298
    %v1300 = vsub.f32 %v1210, 1.0
    %v1301 = vmul.f32 %v1300, 1.5
    %v1302 = vmul.f32 %v1301, %v1247
    %v1303 = vsub.f32 2.3333333, %v1210
    %v1304 = vmul.f32 %v1303, 1.5
    %v1305 = vmul.f32 %v1304, %v1252
    %v1306 = vadd.f32 %v1302, %v1305
    %v1307 = vsub.f32 %v1210, 1.6666666
    %v1308 = vmul.f32 %v1307, 1.5
    %v1309 = vmul.f32 %v1308, %v1252
    %v1310 = vsub.f32 3.0, %v1210
    %v1311 = vmul.f32 %v1310, 1.5
    %v1312 = vmul.f32 %v1311, %v1257
    %v1313 = vadd.f32 %v1309, %v1312
    %v1314 = vmul.f32 %v1258, 0.75
    %v1315 = vmul.f32 %v1314, %v1264
    %v1316 = vmul.f32 %v1268, 0.75
    %v1317 = vmul.f32 %v1316, %v1271
    %v1318 = vadd.f32 %v1315, %v1317
    %v1319 = vmul.f32 %v1265, 0.75
    %v1320 = vmul.f32 %v1319, %v1271
    %v1321 = vmul.f32 %v1275, 0.75
    %v1322 = vmul.f32 %v1321, %v1278
    %v1323 = vadd.f32 %v1320, %v1322
    %v1324 = vmul.f32 %v1272, 0.75
    %v1325 = vmul.f32 %v1324, %v1278
    %v1326 = vmul.f32 %v1282, 0.75
    %v1327 = vmul.f32 %v1326, %v1285
    %v1328 = vadd.f32 %v1325, %v1327
    %v1329 = vmul.f32 %v1279, 0.75
    %v1330 = vmul.f32 %v1329, %v1285
    %v1331 = vmul.f32 %v1289, 0.75
    %v1332 = vmul.f32 %v1331, %v1292
    %v1333 = vadd.f32 %v1330, %v1332
    %v1334 = vmul.f32 %v1286, 0.75
    %v1335 = vmul.f32 %v1334, %v1292
    %v1336 = vmul.f32 %v1296, 0.75
    %v1337 = vmul.f32 %v1336, %v1299
    %v1338 = vadd.f32 %v1335, %v1337
    %v1339 = vmul.f32 %v1293, 0.75
    %v1340 = vmul.f32 %v1339, %v1299
    %v1341 = vmul.f32 %v1303, 0.75
    %v1342 = vmul.f32 %v1341, %v1306
    %v1343 = vadd.f32 %v1340, %v1342
    %v1344 = vmul.f32 %v1300, 0.75
    %v1345 = vmul.f32 %v1344, %v1306
    %v1346 = vmul.f32 %v1310, 0.75
    %v1347 = vmul.f32 %v1346, %v1313
    %v1348 = vadd.f32 %v1345, %v1347
    %v1349 = vmul.f32 %v1258, 0.5
    %v1350 = vmul.f32 %v1349, %v1318
    %v1351 = vmul.f32 %v1275, 0.5
    %v1352 = vmul.f32 %v1351, %v1323
    %v1353 = vadd.f32 %v1350, %v1352
    %v1354 = vmul.f32 %v1265, 0.5
    %v1355 = vmul.f32 %v1354, %v1323
    %v1356 = vmul.f32 %v1282, 0.5
    %v1357 = vmul.f32 %v1356, %v1328
    %v1358 = vadd.f32 %v1355, %v1357
    %v1359 = vmul.f32 %v1272, 0.5
    %v1360 = vmul.f32 %v1359, %v1328
    %v1361 = vmul.f32 %v1289, 0.5
    %v1362 = vmul.f32 %v1361, %v1333
    %v1363 = vadd.f32 %v1360, %v1362
    %v1364 = vmul.f32 %v1279, 0.5
    %v1365 = vmul.f32 %v1364, %v1333
    %v1366 = vmul.f32 %v1296, 0.5
    %v1367 = vmul.f32 %v1366, %v1338
    %v1368 = vadd.f32 %v1365, %v1367
    %v1369 = vmul.f32 %v1286, 0.5
    %v1370 = vmul.f32 %v1369, %v1338
    %v1371 = vmul.f32 %v1303, 0.5
    %v1372 = vmul.f32 %v1371, %v1343
    %v1373 = vadd.f32 %v1370, %v1372
    %v1374 = vmul.f32 %v1293, 0.5
    %v1375 = vmul.f32 %v1374, %v1343
    %v1376 = vmul.f32 %v1310, 0.5
    %v1377 = vmul.f32 %v1376, %v1348
    %v1378 = vadd.f32 %v1375, %v1377
    %v1379 = vxor.u32 %v1210, 2147483648
    %v1380 = vmul.f32 %v1379, 1.442695
    %v1381 = vpow.pop %v1380
    %v1382 = vadd.f32 %v1381, 1.0
    %v1383 = vrcp.pop %v1382
    %v1384 = vmul.f32 1.0, %v1383
    %v1385 = vmul.f32 %v1210, %v1384
    %v1386 = vld [vmem:[#allocation7] sm:$0xff]
    %v1387 = vld [vmem:[#allocation7 + $0x8] sm:$0xff]
    %v1388 = vld [vmem:[#allocation7 + $0x10] sm:$0xff]
    %v1389 = vld [vmem:[#allocation7 + $0x18] sm:$0xff]
    %v1390 = vld [vmem:[#allocation7 + $0x20] sm:$0xff]
    %v1391 = vld [vmem:[#allocation7 + $0x28] sm:$0xff]
    %v1392 = vld [vmem:[#allocation7 + $0x30] sm:$0xff]
    %v1393 = vld [vmem:[#allocation7 + $0x38] sm:$0xff]
    %v1394 = vld [vmem:[#allocation7 + $0x40] sm:$0xff]
    %v1395 = vld [vmem:[#allocation7 + $0x48] sm:$0xff]
    %v1396 = vld [vmem:[#allocation7 + $0x50] sm:$0xff]
    %v1397 = vld [vmem:[#allocation7 + $0x58] sm:$0xff]
    %v1398 = vld [vmem:[#allocation7 + $0x60] sm:$0xff]
    %v1399 = vld [vmem:[#allocation7 + $0x68] sm:$0xff]
    %v1400 = vld [vmem:[#allocation7 + $0x70] sm:$0xff]
    %v1401 = vld [vmem:[#allocation7 + $0x78] sm:$0xff]
    %v1402 = vld [vmem:[#allocation7 + $0x80] sm:$0xff]
    %v1403 = vld [vmem:[#allocation7 + $0x88] sm:$0xff]
    %v1404 = vld [vmem:[#allocation7 + $0x90] sm:$0xff]
    %v1405 = vld [vmem:[#allocation7 + $0x98] sm:$0xff]
    %v1406 = vld [vmem:[#allocation7 + $0xa0] sm:$0xff]
    %v1407 = vld [vmem:[#allocation7 + $0xa8] sm:$0xff]
    %v1408 = vld [vmem:[#allocation7 + $0xb0] sm:$0xff]
    %v1409 = vld [vmem:[#allocation7 + $0xb8] sm:$0xff]
    %v1410 = vld [vmem:[#allocation7 + $0xc0] sm:$0xff]
    %v1411 = vld [vmem:[#allocation7 + $0xc8] sm:$0xff]
    %v1412 = vld [vmem:[#allocation7 + $0xd0] sm:$0xff]
    %v1413 = vld [vmem:[#allocation7 + $0xd8] sm:$0xff]
    %v1414 = vld [vmem:[#allocation7 + $0xe0] sm:$0xff]
    %v1415 = vld [vmem:[#allocation7 + $0xe8] sm:$0xff]
    %v1416 = vld [vmem:[#allocation7 + $0xf0] sm:$0xff]
    %v1417 = vld [vmem:[#allocation7 + $0xf8] sm:$0xff]
    %v1418 = vld [vmem:[#allocation7 + $0x100] sm:$0xff]
    %v1419 = vld [vmem:[#allocation7 + $0x108] sm:$0xff]
    %v1420 = vld [vmem:[#allocation7 + $0x110] sm:$0xff]
    %v1421 = vld [vmem:[#allocation7 + $0x118] sm:$0xff]
    %v1422 = vld [vmem:[#allocation7 + $0x120] sm:$0xff]
    %v1423 = vld [vmem:[#allocation7 + $0x128] sm:$0xff]
    %v1424 = vld [vmem:[#allocation7 + $0x130] sm:$0xff]
    %v1425 = vld [vmem:[#allocation7 + $0x138] sm:$0xff]
    %v1426 = vld [vmem:[#allocation7 + $0x140] sm:$0xff]
    %v1427 = vld [vmem:[#allocation7 + $0x148] sm:$0xff]
    %v1428 = vld [vmem:[#allocation7 + $0x150] sm:$0xff]
    %v1429 = vld [vmem:[#allocation7 + $0x158] sm:$0xff]
    %v1430 = vld [vmem:[#allocation7 + $0x160] sm:$0xff]
    %v1431 = vld [vmem:[#allocation7 + $0x168] sm:$0xff]
    %v1432 = vld [vmem:[#allocation7 + $0x170] sm:$0xff]
    %v1433 = vld [vmem:[#allocation7 + $0x178] sm:$0xff]
    %v1434 = vld [vmem:[#allocation7 + $0x180] sm:$0xff]
    %v1435 = vld [vmem:[#allocation7 + $0x188] sm:$0xff]
    %v1436 = vld [vmem:[#allocation7 + $0x190] sm:$0xff]
    %v1437 = vld [vmem:[#allocation7 + $0x198] sm:$0xff]
    %v1438 = vld [vmem:[#allocation7 + $0x1a0] sm:$0xff]
    %v1439 = vld [vmem:[#allocation7 + $0x1a8] sm:$0xff]
    %v1440 = vld [vmem:[#allocation7 + $0x1b0] sm:$0xff]
    %v1441 = vld [vmem:[#allocation7 + $0x1b8] sm:$0xff]
    %v1442 = vld [vmem:[#allocation7 + $0x1c0] sm:$0xff]
    %v1443 = vld [vmem:[#allocation7 + $0x1c8] sm:$0xff]
    %v1444 = vld [vmem:[#allocation7 + $0x1d0] sm:$0xff]
    %v1445 = vld [vmem:[#allocation7 + $0x1d8] sm:$0xff]
    %v1446 = vld [vmem:[#allocation7 + $0x1e0] sm:$0xff]
    %v1447 = vld [vmem:[#allocation7 + $0x1e8] sm:$0xff]
    %v1448 = vld [vmem:[#allocation7 + $0x1f0] sm:$0xff]
    %v1449 = vld [vmem:[#allocation7 + $0x1f8] sm:$0xff]
    %v1450 = vld [vmem:[#allocation7 + $0x200] sm:$0xff]
    %v1451 = vld [vmem:[#allocation7 + $0x208] sm:$0xff]
    %v1452 = vld [vmem:[#allocation7 + $0x210] sm:$0xff]
    %v1453 = vld [vmem:[#allocation7 + $0x218] sm:$0xff]
    %v1454 = vld [vmem:[#allocation7 + $0x220] sm:$0xff]
    %v1455 = vld [vmem:[#allocation7 + $0x228] sm:$0xff]
    %v1456 = vld [vmem:[#allocation7 + $0x230] sm:$0xff]
    %v1457 = vld [vmem:[#allocation7 + $0x238] sm:$0xff]
    %v1458 = vld [vmem:[#allocation7 + $0x240] sm:$0xff]
    %v1459 = vld [vmem:[#allocation7 + $0x248] sm:$0xff]
    %v1460 = vld [vmem:[#allocation7 + $0x250] sm:$0xff]
    %v1461 = vld [vmem:[#allocation7 + $0x258] sm:$0xff]
    %v1462 = vld [vmem:[#allocation7 + $0x260] sm:$0xff]
    %v1463 = vld [vmem:[#allocation7 + $0x268] sm:$0xff]
    %v1464 = vld [vmem:[#allocation7 + $0x270] sm:$0xff]
    %v1465 = vld [vmem:[#allocation7 + $0x278] sm:$0xff]
    %v1466 = vld [vmem:[#allocation7 + $0x280] sm:$0xff]
    %v1467 = vld [vmem:[#allocation7 + $0x288] sm:$0xff]
    %v1468 = vld [vmem:[#allocation7 + $0x290] sm:$0xff]
    %v1469 = vld [vmem:[#allocation7 + $0x298] sm:$0xff]
    %v1470 = vld [vmem:[#allocation7 + $0x2a0] sm:$0xff]
    %v1471 = vld [vmem:[#allocation7 + $0x2a8] sm:$0xff]
    %v1472 = vld [vmem:[#allocation7 + $0x2b0] sm:$0xff]
    %v1473 = vld [vmem:[#allocation7 + $0x2b8] sm:$0xff]
    %v1474 = vld [vmem:[#allocation7 + $0x2c0] sm:$0xff]
    %v1475 = vld [vmem:[#allocation7 + $0x2c8] sm:$0xff]
    %v1476 = vld [vmem:[#allocation7 + $0x2d0] sm:$0xff]
    %v1477 = vld [vmem:[#allocation7 + $0x2d8] sm:$0xff]
    %v1478 = vld [vmem:[#allocation7 + $0x2e0] sm:$0xff]
    %v1479 = vld [vmem:[#allocation7 + $0x2e8] sm:$0xff]
    %v1480 = vld [vmem:[#allocation7 + $0x2f0] sm:$0xff]
    %v1481 = vld [vmem:[#allocation7 + $0x2f8] sm:$0xff]
    %v1482 = vld [vmem:[#allocation7 + $0x300] sm:$0xff]
    %v1483 = vld [vmem:[#allocation7 + $0x308] sm:$0xff]
    %v1484 = vld [vmem:[#allocation7 + $0x310] sm:$0xff]
    %v1485 = vld [vmem:[#allocation7 + $0x318] sm:$0xff]
    %v1486 = vld [vmem:[#allocation7 + $0x320] sm:$0xff]
    %v1487 = vld [vmem:[#allocation7 + $0x328] sm:$0xff]
    %v1488 = vld [vmem:[#allocation7 + $0x330] sm:$0xff]
    %v1489 = vld [vmem:[#allocation7 + $0x338] sm:$0xff]
    %v1490 = vld [vmem:[#allocation7 + $0x340] sm:$0xff]
    %v1491 = vld [vmem:[#allocation7 + $0x348] sm:$0xff]
    %v1492 = vld [vmem:[#allocation7 + $0x350] sm:$0xff]
    %v1493 = vld [vmem:[#allocation7 + $0x358] sm:$0xff]
    %v1494 = vld [vmem:[#allocation7 + $0x360] sm:$0xff]
    %v1495 = vld [vmem:[#allocation7 + $0x368] sm:$0xff]
    %v1496 = vld [vmem:[#allocation7 + $0x370] sm:$0xff]
    %v1497 = vld [vmem:[#allocation7 + $0x378] sm:$0xff]
    %v1498 = vld [vmem:[%s6] sm:$0x1]
    %v1500 = vlaneseq
    %v1501 = vshrl.u32 %v1500, 7
    %v1502 = vsub.s32 0, %v1501
    %v1503 = vrot.slane %v1498, %v1502
    %1505 = vmatprep.subr.mxu0 0.0
    %1506 = vmatpush1.msra.mxu0 %v1386
    %1507 = vmatprep.subr.mxu0 0.0
    %1508 = vmatpush1.msra.mxu0 %v1387
    %1509 = vmatprep.subr.mxu0 0.0
    %1510 = vmatpush1.msra.mxu0 %v1388
    %1511 = vmatprep.subr.mxu0 0.0
    %1512 = vmatpush1.msra.mxu0 %v1389
    %1513 = vmatprep.subr.mxu0 0.0
    %1514 = vmatpush1.msra.mxu0 %v1390
    %1515 = vmatprep.subr.mxu0 0.0
    %1516 = vmatpush1.msra.mxu0 %v1391
    %1517 = vmatprep.subr.mxu0 0.0
    %1518 = vmatpush1.msra.mxu0 %v1392
    %1519 = vmatprep.subr.mxu0 0.0
    %1520 = vmatpush1.msra.mxu0 %v1393
    %1521 = vmatprep.subr.mxu0 0.0
    %1522 = vmatpush1.msra.mxu0 %v1394
    %1523 = vmatprep.subr.mxu0 0.0
    %1524 = vmatpush1.msra.mxu0 %v1395
    %1525 = vmatprep.subr.mxu0 0.0
    %1526 = vmatpush1.msra.mxu0 %v1396
    %1527 = vmatprep.subr.mxu0 0.0
    %1528 = vmatpush1.msra.mxu0 %v1397
    %1529 = vmatprep.subr.mxu0 0.0
    %1530 = vmatpush1.msra.mxu0 %v1398
    %1531 = vmatprep.subr.mxu0 0.0
    %1532 = vmatpush1.msra.mxu0 %v1399
    %1533 = vmatprep.subr.mxu0 0.0
    %1534 = vmatpush1.msra.mxu0 %v1400
    %1535 = vmatprep.subr.mxu0 0.0
    %1536 = vmatpush1.msra.mxu0 %v1401
    %1537 = vmatprep.subr.mxu0 0.0
    %1538 = vmatpush1.msra.mxu0 %v1402
    %1539 = vmatprep.subr.mxu0 0.0
    %1540 = vmatpush1.msra.mxu0 %v1403
    %1541 = vmatprep.subr.mxu0 0.0
    %1542 = vmatpush1.msra.mxu0 %v1404
    %1543 = vmatprep.subr.mxu0 0.0
    %1544 = vmatpush1.msra.mxu0 %v1405
    %1545 = vmatprep.subr.mxu0 0.0
    %1546 = vmatpush1.msra.mxu0 %v1406
    %1547 = vmatprep.subr.mxu0 0.0
    %1548 = vmatpush1.msra.mxu0 %v1407
    %1549 = vmatprep.subr.mxu0 0.0
    %1550 = vmatpush1.msra.mxu0 %v1408
    %1551 = vmatprep.subr.mxu0 0.0
    %1552 = vmatpush1.msra.mxu0 %v1409
    %1553 = vmatprep.subr.mxu0 0.0
    %1554 = vmatpush1.msra.mxu0 %v1410
    %1555 = vmatprep.subr.mxu0 0.0
    %1556 = vmatpush1.msra.mxu0 %v1411
    %1557 = vmatprep.subr.mxu0 0.0
    %1558 = vmatpush1.msra.mxu0 %v1412
    %1559 = vmatprep.subr.mxu0 0.0
    %1560 = vmatpush1.msra.mxu0 %v1413
    %1561 = vmatprep.subr.mxu0 0.0
    %1562 = vmatpush1.msra.mxu0 %v1414
    %1563 = vmatprep.subr.mxu0 0.0
    %1564 = vmatpush1.msra.mxu0 %v1415
    %1565 = vmatprep.subr.mxu0 0.0
    %1566 = vmatpush1.msra.mxu0 %v1416
    %1567 = vmatprep.subr.mxu0 0.0
    %1568 = vmatpush1.msra.mxu0 %v1417
    %1569 = vmatprep.mubr.f32.mxu0 %v1358
    %1570 = vmatmul.mubr.f32.gmra.mrb[0].mxu0 %v1353
    %v1571 = vpop.f32.mrb[0].mxu0
    %v1572 = vadd.f32 %v1503, %v1571
    %v1573 = vpop.f32.mrb[0].mxu0
    %1574 = vdwg.mxu0
    %1575 = vmatprep.subr.mxu0 0.0
    %1576 = vmatpush1.msra.mxu0 %v1418
    %1577 = vmatprep.subr.mxu0 0.0
    %1578 = vmatpush1.msra.mxu0 %v1419
    %1579 = vmatprep.subr.mxu0 0.0
    %1580 = vmatpush1.msra.mxu0 %v1420
    %1581 = vmatprep.subr.mxu0 0.0
    %1582 = vmatpush1.msra.mxu0 %v1421
    %1583 = vmatprep.subr.mxu0 0.0
    %1584 = vmatpush1.msra.mxu0 %v1422
    %1585 = vmatprep.subr.mxu0 0.0
    %1586 = vmatpush1.msra.mxu0 %v1423
    %1587 = vmatprep.subr.mxu0 0.0
    %1588 = vmatpush1.msra.mxu0 %v1424
    %1589 = vmatprep.subr.mxu0 0.0
    %1590 = vmatpush1.msra.mxu0 %v1425
    %1591 = vmatprep.subr.mxu0 0.0
    %1592 = vmatpush1.msra.mxu0 %v1426
    %1593 = vmatprep.subr.mxu0 0.0
    %1594 = vmatpush1.msra.mxu0 %v1427
    %1595 = vmatprep.subr.mxu0 0.0
    %1596 = vmatpush1.msra.mxu0 %v1428
    %1597 = vmatprep.subr.mxu0 0.0
    %1598 = vmatpush1.msra.mxu0 %v1429
    %1599 = vmatprep.subr.mxu0 0.0
    %1600 = vmatpush1.msra.mxu0 %v1430
    %1601 = vmatprep.subr.mxu0 0.0
    %1602 = vmatpush1.msra.mxu0 %v1431
    %1603 = vmatprep.subr.mxu0 0.0
    %1604 = vmatpush1.msra.mxu0 %v1432
    %1605 = vmatprep.subr.mxu0 0.0
    %1606 = vmatpush1.msra.mxu0 %v1433
    %1607 = vmatprep.subr.mxu0 0.0
    %1608 = vmatpush1.msra.mxu0 %v1434
    %1609 = vmatprep.subr.mxu0 0.0
    %1610 = vmatpush1.msra.mxu0 %v1435
    %1611 = vmatprep.subr.mxu0 0.0
    %1612 = vmatpush1.msra.mxu0 %v1436
    %1613 = vmatprep.subr.mxu0 0.0
    %1614 = vmatpush1.msra.mxu0 %v1437
    %1615 = vmatprep.subr.mxu0 0.0
    %1616 = vmatpush1.msra.mxu0 %v1438
    %1617 = vmatprep.subr.mxu0 0.0
    %1618 = vmatpush1.msra.mxu0 %v1439
    %1619 = vmatprep.subr.mxu0 0.0
    %1620 = vmatpush1.msra.mxu0 %v1440
    %1621 = vmatprep.subr.mxu0 0.0
    %1622 = vmatpush1.msra.mxu0 %v1441
    %1623 = vmatprep.subr.mxu0 0.0
    %1624 = vmatpush1.msra.mxu0 %v1442
    %1625 = vmatprep.subr.mxu0 0.0
    %1626 = vmatpush1.msra.mxu0 %v1443
    %1627 = vmatprep.subr.mxu0 0.0
    %1628 = vmatpush1.msra.mxu0 %v1444
    %1629 = vmatprep.subr.mxu0 0.0
    %1630 = vmatpush1.msra.mxu0 %v1445
    %1631 = vmatprep.subr.mxu0 0.0
    %1632 = vmatpush1.msra.mxu0 %v1446
    %1633 = vmatprep.subr.mxu0 0.0
    %1634 = vmatpush1.msra.mxu0 %v1447
    %1635 = vmatprep.subr.mxu0 0.0
    %1636 = vmatpush1.msra.mxu0 %v1448
    %1637 = vmatprep.subr.mxu0 0.0
    %1638 = vmatpush1.msra.mxu0 %v1449
    %1639 = vmatprep.mubr.f32.mxu0 %v1368
    %1640 = vmatmul.mubr.f32.gmra.mrb[0].mxu0 %v1363
    %v1641 = vpop.f32.mrb[0].mxu0
    %v1642 = vadd.f32 %v1572, %v1641
    %v1643 = vpop.f32.mrb[0].mxu0
    %1644 = vdwg.mxu0
    %1645 = vmatprep.subr.mxu0 0.0
    %1646 = vmatpush1.msra.mxu0 %v1450
    %1647 = vmatprep.subr.mxu0 0.0
    %1648 = vmatpush1.msra.mxu0 %v1451
    %1649 = vmatprep.subr.mxu0 0.0
    %1650 = vmatpush1.msra.mxu0 %v1452
    %1651 = vmatprep.subr.mxu0 0.0
    %1652 = vmatpush1.msra.mxu0 %v1453
    %1653 = vmatprep.subr.mxu0 0.0
    %1654 = vmatpush1.msra.mxu0 %v1454
    %1655 = vmatprep.subr.mxu0 0.0
    %1656 = vmatpush1.msra.mxu0 %v1455
    %1657 = vmatprep.subr.mxu0 0.0
    %1658 = vmatpush1.msra.mxu0 %v1456
    %1659 = vmatprep.subr.mxu0 0.0
    %1660 = vmatpush1.msra.mxu0 %v1457
    %1661 = vmatprep.subr.mxu0 0.0
    %1662 = vmatpush1.msra.mxu0 %v1458
    %1663 = vmatprep.subr.mxu0 0.0
    %1664 = vmatpush1.msra.mxu0 %v1459
    %1665 = vmatprep.subr.mxu0 0.0
    %1666 = vmatpush1.msra.mxu0 %v1460
    %1667 = vmatprep.subr.mxu0 0.0
    %1668 = vmatpush1.msra.mxu0 %v1461
    %1669 = vmatprep.subr.mxu0 0.0
    %1670 = vmatpush1.msra.mxu0 %v1462
    %1671 = vmatprep.subr.mxu0 0.0
    %1672 = vmatpush1.msra.mxu0 %v1463
    %1673 = vmatprep.subr.mxu0 0.0
    %1674 = vmatpush1.msra.mxu0 %v1464
    %1675 = vmatprep.subr.mxu0 0.0
    %1676 = vmatpush1.msra.mxu0 %v1465
    %1677 = vmatprep.subr.mxu0 0.0
    %1678 = vmatpush1.msra.mxu0 %v1466
    %1679 = vmatprep.subr.mxu0 0.0
    %1680 = vmatpush1.msra.mxu0 %v1467
    %1681 = vmatprep.subr.mxu0 0.0
    %1682 = vmatpush1.msra.mxu0 %v1468
    %1683 = vmatprep.subr.mxu0 0.0
    %1684 = vmatpush1.msra.mxu0 %v1469
    %1685 = vmatprep.subr.mxu0 0.0
    %1686 = vmatpush1.msra.mxu0 %v1470
    %1687 = vmatprep.subr.mxu0 0.0
    %1688 = vmatpush1.msra.mxu0 %v1471
    %1689 = vmatprep.subr.mxu0 0.0
    %1690 = vmatpush1.msra.mxu0 %v1472
    %1691 = vmatprep.subr.mxu0 0.0
    %1692 = vmatpush1.msra.mxu0 %v1473
    %1693 = vmatprep.subr.mxu0 0.0
    %1694 = vmatpush1.msra.mxu0 %v1474
    %1695 = vmatprep.subr.mxu0 0.0
    %1696 = vmatpush1.msra.mxu0 %v1475
    %1697 = vmatprep.subr.mxu0 0.0
    %1698 = vmatpush1.msra.mxu0 %v1476
    %1699 = vmatprep.subr.mxu0 0.0
    %1700 = vmatpush1.msra.mxu0 %v1477
    %1701 = vmatprep.subr.mxu0 0.0
    %1702 = vmatpush1.msra.mxu0 %v1478
    %1703 = vmatprep.subr.mxu0 0.0
    %1704 = vmatpush1.msra.mxu0 %v1479
    %1705 = vmatprep.subr.mxu0 0.0
    %1706 = vmatpush1.msra.mxu0 %v1480
    %1707 = vmatprep.subr.mxu0 0.0
    %1708 = vmatpush1.msra.mxu0 %v1481
    %1709 = vmatprep.mubr.f32.mxu0 %v1378
    %1710 = vmatmul.mubr.f32.gmra.mrb[0].mxu0 %v1373
    %v1711 = vpop.f32.mrb[0].mxu0
    %v1712 = vadd.f32 %v1642, %v1711
    %v1713 = vpop.f32.mrb[0].mxu0
    %1714 = vdwg.mxu0
    %1715 = vmatprep.subr.mxu0 0.0
    %1716 = vmatpush1.msra.mxu0 %v1482
    %1717 = vmatprep.subr.mxu0 0.0
    %1718 = vmatpush1.msra.mxu0 %v1483
    %1719 = vmatprep.subr.mxu0 0.0
    %1720 = vmatpush1.msra.mxu0 %v1484
    %1721 = vmatprep.subr.mxu0 0.0
    %1722 = vmatpush1.msra.mxu0 %v1485
    %1723 = vmatprep.subr.mxu0 0.0
    %1724 = vmatpush1.msra.mxu0 %v1486
    %1725 = vmatprep.subr.mxu0 0.0
    %1726 = vmatpush1.msra.mxu0 %v1487
    %1727 = vmatprep.subr.mxu0 0.0
    %1728 = vmatpush1.msra.mxu0 %v1488
    %1729 = vmatprep.subr.mxu0 0.0
    %1730 = vmatpush1.msra.mxu0 %v1489
    %1731 = vmatprep.subr.mxu0 0.0
    %1732 = vmatpush1.msra.mxu0 %v1490
    %1733 = vmatprep.subr.mxu0 0.0
    %1734 = vmatpush1.msra.mxu0 %v1491
    %1735 = vmatprep.subr.mxu0 0.0
    %1736 = vmatpush1.msra.mxu0 %v1492
    %1737 = vmatprep.subr.mxu0 0.0
    %1738 = vmatpush1.msra.mxu0 %v1493
    %1739 = vmatprep.subr.mxu0 0.0
    %1740 = vmatpush1.msra.mxu0 %v1494
    %1741 = vmatprep.subr.mxu0 0.0
    %1742 = vmatpush1.msra.mxu0 %v1495
    %1743 = vmatprep.subr.mxu0 0.0
    %1744 = vmatpush1.msra.mxu0 %v1496
    %1745 = vmatprep.subr.mxu0 0.0
    %1746 = vmatpush1.msra.mxu0 %v1497
    %1747 = vmatprep.subr.mxu0 0.0
    %1748 = vmatpush1.msra.mxu0 0.0
    %1749 = vmatprep.subr.mxu0 0.0
    %1750 = vmatpush1.msra.mxu0 0.0
    %1751 = vmatprep.subr.mxu0 0.0
    %1752 = vmatpush1.msra.mxu0 0.0
    %1753 = vmatprep.subr.mxu0 0.0
    %1754 = vmatpush1.msra.mxu0 0.0
    %1755 = vmatprep.subr.mxu0 0.0
    %1756 = vmatpush1.msra.mxu0 0.0
    %1757 = vmatprep.subr.mxu0 0.0
    %1758 = vmatpush1.msra.mxu0 0.0
    %1759 = vmatprep.subr.mxu0 0.0
    %1760 = vmatpush1.msra.mxu0 0.0
    %1761 = vmatprep.subr.mxu0 0.0
    %1762 = vmatpush1.msra.mxu0 0.0
    %1763 = vmatprep.subr.mxu0 0.0
    %1764 = vmatpush1.msra.mxu0 0.0
    %1765 = vmatprep.subr.mxu0 0.0
    %1766 = vmatpush1.msra.mxu0 0.0
    %1767 = vmatprep.subr.mxu0 0.0
    %1768 = vmatpush1.msra.mxu0 0.0
    %1769 = vmatprep.subr.mxu0 0.0
    %1770 = vmatpush1.msra.mxu0 0.0
    %1771 = vmatprep.subr.mxu0 0.0
    %1772 = vmatpush1.msra.mxu0 0.0
    %1773 = vmatprep.subr.mxu0 0.0
    %1774 = vmatpush1.msra.mxu0 0.0
    %1775 = vmatprep.subr.mxu0 0.0
    %1776 = vmatpush1.msra.mxu0 0.0
    %1777 = vmatprep.subr.mxu0 0.0
    %1778 = vmatpush1.msra.mxu0 0.0
    %1779 = vmatprep.mubr.f32.mxu0 0.0
    %1780 = vmatmul.mubr.f32.gmra.mrb[0].mxu0 %v1385
    %v1781 = vpop.f32.mrb[0].mxu0
    %v1782 = vadd.f32 %v1712, %v1781
    %v1783 = vpop.f32.mrb[0].mxu0
    %1784 = vdwg.mxu0
    %1785 = vst [vmem:[#allocation8] sm:$0xff] %v1782
    // Predicated region
    $region42: #{decoder_forward.1} parent=1 // pred_check
      _
    $region43: #{decoder_forward.1} parent=1 // pred_check_branch
      %1787 = sbr.rel (0) target = $region45
    $region44: #{decoder_forward.1} parent=1 // pred_region
      %s1789 = ssub.s32 128, 128
      %1790 = vsyncadd [#allocation4], %s1789
      %s1792 = sshll.u32 [#allocation8], 4
      %s1793 = int_to_ptr.vmem [resolvable:$true] %s1792
      %1795 = dma.vmem_to_hbm [thread:$0]  %s1793, 128, %s7, [#allocation4]
    $region45: #{decoder_forward.1} parent=1 // pred_fallthru
      _
    // Predicated region
    $region46: #{decoder_forward.1} parent=1 // pred_check
      _
    $region47: #{decoder_forward.1} parent=1 // pred_check_branch
      %1797 = sbr.rel (0) target = $region49
    $region48: #{decoder_forward.1} parent=1 // pred_region
      %1798 = dma.done [#allocation4], 128
    $region49: #{decoder_forward.1} parent=1 // pred_fallthru
      _
    %1799 = vsyncpa [#allocation3], 1
    %1800 = vsyncpa [#allocation6], 1
    %1801 = vsyncpa [#allocation4], 1

</llo_original>
